<compile_context>
chip_gen: v7x
topology: tpu7x:2x2x1
jax: 0.10.0
libtpu: 0.0.40
codegen_flags: <defaults>
</compile_context>

<pallas_src>
import functools
import math

import jax
import jax.numpy as jnp
from jax.experimental import pallas as pl
from jax.experimental.pallas import tpu as pltpu


# ----------------------------------------------------------------------------
# Fused Pallas kernel
#   o = relu( im2col(x) @ (bn_scale*W1) + bn_shift ) @ Wproj (+ bproj)
# ----------------------------------------------------------------------------

def _cbac_kernel(xa_ref, xb_ref, w1_ref, sh_ref, wp_ref, *rest,
                 th, wo, dilation, has_bias):
    """One (batch, output-row-tile) step.

    xa_ref : (TH, Wp, Cin)        body rows of the padded NHWC image   (bf16)
    xb_ref : (2*d, Wp, Cin)       halo rows below the body             (bf16)
    w1_ref : (9*Cin, Cmid)        BN-scale-folded, tap-flattened 3x3 w (bf16)
    sh_ref : (1, Cmid)            folded BN shift                      (f32)
    wp_ref : (Cmid, Cout)         1x1 projection weight                (bf16)
    bp_ref : (1, Cout)            optional projection bias             (f32)
    o_ref  : (TH, Wo, Cout)       output tile                          (bf16)
    slab   : (TH+2*d, Wp, Cin)    VMEM scratch for the halo'd row slab (bf16)
    """
    if has_bias:
        bp_ref, o_ref, slab_ref = rest
    else:
        o_ref, slab_ref = rest
        bp_ref = None

    d = dilation
    halo = 2 * d
    cin = xa_ref.shape[-1]

    # Assemble the halo'd slab (TH + 2*d padded rows); leading-dim copies only.
    slab_ref[0:th, :, :] = xa_ref[...]
    slab_ref[th:th + halo, :, :] = xb_ref[...]

    # In-VMEM im2col: 3 column-window loads (one per kw); the kh taps are
    # cheap leading-dim slices of those.  K ordering (kh, kw, cin) matches the
    # host-side reshape of the (3, 3, Cin, Cmid) weight to (9*Cin, Cmid).
    cols = [slab_ref[:, kw * d:kw * d + wo, :] for kw in range(3)]
    taps = [cols[kw][kh * d:kh * d + th] for kh in range(3) for kw in range(3)]
    patch = jnp.concatenate(taps, axis=-1).reshape(th * wo, 9 * cin)

    # Single fat-K MXU matmul (BN scale already folded into w1), f32 accum.
    acc = jnp.dot(patch, w1_ref[...], preferred_element_type=jnp.float32)

    # Folded-BN shift + ReLU epilogue in f32.
    y = jnp.maximum(acc + sh_ref[...], 0.0)

    # Fused 1x1 projection (bf16 MXU inputs, f32 accumulation) + bias.
    out = jnp.dot(y.astype(wp_ref.dtype), wp_ref[...],
                  preferred_element_type=jnp.float32)
    if has_bias:
        out = out + bp_ref[...]
    o_ref[...] = out.reshape(th, wo, -1).astype(o_ref.dtype)


# ----------------------------------------------------------------------------
# Host-side wrapper
# ----------------------------------------------------------------------------

def _dense_grouped_weight(w, groups):
    """(3,3,Cin//g,Cout) grouped HWIO weight -> dense block-diagonal (3,3,Cin,Cout)."""
    _, _, cin_g, cout = w.shape
    if groups == 1:
        return w
    cin = cin_g * groups
    cout_g = cout // groups
    ci = jnp.arange(cin)
    co = jnp.arange(cout)
    mask = ((ci[:, None] // cin_g) == (co[None, :] // cout_g)).astype(w.dtype)
    return w[:, :, ci % cin_g, :] * mask[None, None]


def _pick_row_tile(ho, wo, halo):
    """Output-row tile height: multiple of `halo` (=2*dilation), M=th*wo ~ 512,
    and at least two row tiles per image when the image allows it."""
    th = max(halo, (max(1, 512 // max(wo, 1)) // halo) * halo)
    if th >= ho:
        if ho >= 2 * halo:
            th = (ho // (2 * halo)) * halo
        else:
            th = ((ho + halo - 1) // halo) * halo
    return th


@functools.partial(jax.jit, static_argnames=("stride", "dilation", "groups"))
def conv_bn_act_conv(x, w1, bn_scale, bn_shift, wproj, bproj,
                     *, stride, dilation, groups):
    """Fused ConvBnActConv forward.  x: NHWC f32 -> NHWC bf16."""
    if stride != 1:
        # TODO(synk): stride > 1 not supported in the fused kernel.
        raise NotImplementedError("conv_bn_act_conv Pallas kernel supports stride == 1 only")

    n, h, w_sp, cin = x.shape
    cmid = w1.shape[-1]
    cout = wproj.shape[-1]
    d = dilation
    pad = d                                  # PyTorch: padding = dilation, k = 3
    halo = 2 * d
    ho, wo = h, w_sp                         # stride == 1

    th = _pick_row_tile(ho, wo, halo)
    n_rows = -(-ho // th)
    ho_pad = n_rows * th                     # extra bottom rows (if any) are zero-pad
    wp_sp = wo + 2 * pad

    # Fused pad + bf16 cast of the input (single HBM materialization).
    xq = jnp.pad(x.astype(jnp.bfloat16),
                 ((0, 0), (pad, pad + (ho_pad - ho)), (pad, pad), (0, 0)))

    # Fold BN scale into the conv weight in f32, densify groups, flatten taps
    # into the contraction dim (K = 9*Cin, ordering (kh, kw, cin)).
    scale = bn_scale.astype(jnp.float32)
    w1d = _dense_grouped_weight(w1.astype(jnp.float32), groups)
    w1d = (w1d * scale[None, None, None, :]).astype(jnp.bfloat16)
    w1d = w1d.reshape(9 * cin, cmid)
    sh = bn_shift.reshape(1, cmid).astype(jnp.float32)
    wpq = wproj.astype(jnp.bfloat16)
    has_bias = bproj is not None

    thb = th // halo                          # body-tile height in halo-block units

    in_specs = [
        # body rows [r*TH, r*TH+TH) of the padded image
        pl.BlockSpec((None, th, wp_sp, cin), lambda b, r: (b, r, 0, 0)),
        # halo rows [r*TH+TH, r*TH+TH+2*d) of the SAME padded image
        pl.BlockSpec((None, halo, wp_sp, cin),
                     lambda b, r: (b, (r + 1) * thb, 0, 0)),
        pl.BlockSpec((9 * cin, cmid), lambda b, r: (0, 0)),
        pl.BlockSpec((1, cmid), lambda b, r: (0, 0)),
        pl.BlockSpec((cmid, cout), lambda b, r: (0, 0)),
    ]
    args = [xq, xq, w1d, sh, wpq]
    if has_bias:
        in_specs.append(pl.BlockSpec((1, cout), lambda b, r: (0, 0)))
        args.append(bproj.reshape(1, cout).astype(jnp.float32))

    kernel = functools.partial(_cbac_kernel, th=th, wo=wo, dilation=d,
                               has_bias=has_bias)
    out = pl.pallas_call(
        kernel,
        out_shape=jax.ShapeDtypeStruct((n, ho_pad, wo, cout), jnp.bfloat16),
        grid=(n, n_rows),
        in_specs=in_specs,
        out_specs=pl.BlockSpec((None, th, wo, cout), lambda b, r: (b, r, 0, 0)),
        scratch_shapes=[pltpu.VMEM((th + halo, wp_sp, cin), jnp.bfloat16)],
        compiler_params=pltpu.CompilerParams(
            dimension_semantics=("parallel", "parallel"),
            vmem_limit_bytes=32 * 1024 * 1024),
    )(*args)

    if ho_pad != ho:
        out = out[:, :ho]
    return out


def _fold_bn(params, eps=1e-5):
    scale = params["gamma"] / jnp.sqrt(params["var"] + eps)
    shift = params["beta"] - params["mean"] * scale
    return scale, shift


def forward_nhwc(x, params, *, stride, dilation, groups):
    """ConvBnActConv.forward, NHWC in / NHWC (bf16) out — preferred entry point."""
    scale, shift = _fold_bn(params)
    return conv_bn_act_conv(x, params["w1"], scale, shift,
                            params["wp"], params["bp"],
                            stride=stride, dilation=dilation, groups=groups)


def forward_nchw(x_nchw, params, *, stride, dilation, groups):
    """PyTorch-layout convenience wrapper (adds two transposes; prefer NHWC)."""
    y = forward_nhwc(jnp.transpose(x_nchw, (0, 2, 3, 1)), params,
                     stride=stride, dilation=dilation, groups=groups)
    return jnp.transpose(y, (0, 3, 1, 2))


# ----------------------------------------------------------------------------
# Pure-JAX reference (same bf16 roundings as the kernel)
# ----------------------------------------------------------------------------

def reference_nhwc(x, params, *, stride, dilation, groups):
    scale, shift = _fold_bn(params)
    d = dilation
    xb = x.astype(jnp.bfloat16).astype(jnp.float32)
    w1f = (params["w1"].astype(jnp.float32) * scale[None, None, None, :]
           ).astype(jnp.bfloat16).astype(jnp.float32)
    y = jax.lax.conv_general_dilated(
        xb, w1f,
        window_strides=(stride, stride),
        padding=((d, d), (d, d)),
        rhs_dilation=(d, d),
        dimension_numbers=("NHWC", "HWIO", "NHWC"),
        feature_group_count=groups,
        precision=jax.lax.Precision.HIGHEST)
    y = jnp.maximum(y + shift, 0.0)
    y = y.astype(jnp.bfloat16).astype(jnp.float32)
    wpf = params["wp"].astype(jnp.bfloat16).astype(jnp.float32)
    out = jnp.einsum("nhwc,cd->nhwd", y, wpf,
                     precision=jax.lax.Precision.HIGHEST)
    if params["bp"] is not None:
        out = out + params["bp"]
    return out.astype(jnp.bfloat16).astype(jnp.float32)


# ----------------------------------------------------------------------------
# Deterministic parameter construction (mirrors ConvBnActConv.__init__ shapes)
# ----------------------------------------------------------------------------

def init_params(key, w, groups, bias):
    assert w % groups == 0
    ks = jax.random.split(key, 7)
    cin_g = w // groups
    return {
        "w1": jax.random.normal(ks[0], (3, 3, cin_g, w), jnp.float32)
              / math.sqrt(9 * cin_g),                    # conv3x3, bias=False
        "gamma": 1.0 + 0.1 * jax.random.normal(ks[1], (w,), jnp.float32),
        "beta": 0.1 * jax.random.normal(ks[2], (w,), jnp.float32),
        "mean": 0.1 * jax.random.normal(ks[3], (w,), jnp.float32),
        "var": 1.0 + jnp.abs(0.1 * jax.random.normal(ks[4], (w,), jnp.float32)),
        "wp": jax.random.normal(ks[5], (w, w), jnp.float32) / math.sqrt(w),
        "bp": (0.1 * jax.random.normal(ks[6], (w,), jnp.float32)
               if bias else None),
    }


# ----------------------------------------------------------------------------

if __name__ == "__main__":
    key = jax.random.PRNGKey(0)

    configs = [
        # (batch, width w, spatial, stride, dilation, groups, bias)
        dict(n=2, w=64,  s=32, stride=1, dilation=2, groups=4, bias=True),
        dict(n=2, w=128, s=16, stride=1, dilation=1, groups=1, bias=False),
    ]

    for idx, cfg in enumerate(configs):
        kp, kx = jax.random.split(jax.random.fold_in(key, idx))
        params = init_params(kp, cfg["w"], cfg["groups"], cfg["bias"])
        x = jax.random.normal(kx, (cfg["n"], cfg["s"], cfg["s"], cfg["w"]),
                              jnp.float32)                      # NHWC

        out = forward_nhwc(x, params, stride=cfg["stride"],
                           dilation=cfg["dilation"], groups=cfg["groups"])
        out = jax.block_until_ready(out)

        assert out.shape == (cfg["n"], cfg["s"], cfg["s"], cfg["w"]), out.shape
        out32 = out.astype(jnp.float32)
        assert bool(jnp.all(jnp.isfinite(out32)))

        ref = reference_nhwc(x, params, stride=cfg["stride"],
                             dilation=cfg["dilation"], groups=cfg["groups"])
        err = float(jnp.max(jnp.abs(out32 - ref)))
        # bf16 activation/output rounding bounds the agreement to ~1 bf16 ulp
        # of the largest outputs (|out| ~ 6 -> ulp ~ 0.05).
        assert err < 1e-1, f"config {idx}: max abs err {err}"

    print("KERNEL_OK")
</pallas_src>

<mosaic_0001>
module attributes {stable_mosaic.version = 11 : i64} {
  func.func @_cbac_kernel(%arg0: i32, %arg1: i32, %arg2: memref<1x16x36x64xbf16, #tpu.memory_space<vmem>>, %arg3: memref<1x4x36x64xbf16, #tpu.memory_space<vmem>>, %arg4: memref<576x64xbf16, #tpu.memory_space<vmem>>, %arg5: memref<1x64xf32, #tpu.memory_space<vmem>>, %arg6: memref<64x64xbf16, #tpu.memory_space<vmem>>, %arg7: memref<1x64xf32, #tpu.memory_space<vmem>>, %arg8: memref<1x16x32x64xbf16, #tpu.memory_space<vmem>>, %arg9: memref<20x36x64xbf16, #tpu.memory_space<vmem>>) attributes {dimension_semantics = [#tpu.dimension_semantics<parallel>, #tpu.dimension_semantics<parallel>], iteration_bounds = array<i64: 2, 2>, scalar_prefetch = 0 : i64, scratch_operands = 1 : i64, tpu.core_type = #tpu.core_type<tc>, window_params = [{transform_indices = @transform_0, window_bounds = array<i64: 1, 16, 36, 64>}, {transform_indices = @transform_1, window_bounds = array<i64: 1, 4, 36, 64>}, {pipeline_mode = #tpu.pipeline_mode<synchronous>, transform_indices = @transform_2, window_bounds = array<i64: 576, 64>}, {pipeline_mode = #tpu.pipeline_mode<synchronous>, transform_indices = @transform_3, window_bounds = array<i64: 1, 64>}, {pipeline_mode = #tpu.pipeline_mode<synchronous>, transform_indices = @transform_4, window_bounds = array<i64: 64, 64>}, {pipeline_mode = #tpu.pipeline_mode<synchronous>, transform_indices = @transform_5, window_bounds = array<i64: 1, 64>}, {transform_indices = @transform_6, window_bounds = array<i64: 1, 16, 32, 64>}]} {
    %c0 = arith.constant 0 : index
    %c0_0 = arith.constant 0 : index
    %c0_1 = arith.constant 0 : index
    %c0_2 = arith.constant 0 : index
    %0 = vector.load %arg2[%c0, %c0_0, %c0_1, %c0_2] : memref<1x16x36x64xbf16, #tpu.memory_space<vmem>>, vector<1x16x36x64xbf16>
    %1 = vector.shape_cast %0 : vector<1x16x36x64xbf16> to vector<16x36x64xbf16>
    %c0_3 = arith.constant 0 : index
    %c0_4 = arith.constant 0 : index
    %c0_5 = arith.constant 0 : index
    %2 = vector.load %arg9[%c0_3, %c0_4, %c0_5] : memref<20x36x64xbf16, #tpu.memory_space<vmem>>, vector<16x36x64xbf16>
    tpu.vector_store %arg9[%c0_3, %c0_4, %c0_5], %1 {strides = array<i32>} : memref<20x36x64xbf16, #tpu.memory_space<vmem>>, vector<16x36x64xbf16>,
    %c0_6 = arith.constant 0 : index
    %c0_7 = arith.constant 0 : index
    %c0_8 = arith.constant 0 : index
    %c0_9 = arith.constant 0 : index
    %3 = vector.load %arg3[%c0_6, %c0_7, %c0_8, %c0_9] : memref<1x4x36x64xbf16, #tpu.memory_space<vmem>>, vector<1x4x36x64xbf16>
    %4 = vector.shape_cast %3 : vector<1x4x36x64xbf16> to vector<4x36x64xbf16>
    %c16 = arith.constant 16 : index
    %c0_10 = arith.constant 0 : index
    %c0_11 = arith.constant 0 : index
    %5 = vector.load %arg9[%c16, %c0_10, %c0_11] : memref<20x36x64xbf16, #tpu.memory_space<vmem>>, vector<4x36x64xbf16>
    tpu.vector_store %arg9[%c16, %c0_10, %c0_11], %4 {strides = array<i32>} : memref<20x36x64xbf16, #tpu.memory_space<vmem>>, vector<4x36x64xbf16>,
    %c0_12 = arith.constant 0 : index
    %c0_13 = arith.constant 0 : index
    %c0_14 = arith.constant 0 : index
    %6 = vector.load %arg9[%c0_12, %c0_13, %c0_14] : memref<20x36x64xbf16, #tpu.memory_space<vmem>>, vector<20x32x64xbf16>
    %c0_15 = arith.constant 0 : index
    %c2 = arith.constant 2 : index
    %c0_16 = arith.constant 0 : index
    %7 = vector.load %arg9[%c0_15, %c2, %c0_16] : memref<20x36x64xbf16, #tpu.memory_space<vmem>>, vector<20x32x64xbf16>
    %c0_17 = arith.constant 0 : index
    %c4 = arith.constant 4 : index
    %c0_18 = arith.constant 0 : index
    %8 = vector.load %arg9[%c0_17, %c4, %c0_18] : memref<20x36x64xbf16, #tpu.memory_space<vmem>>, vector<20x32x64xbf16>
    %9 = vector.extract_strided_slice %6 {offsets = [0, 0, 0], sizes = [16, 32, 64], strides = [1, 1, 1]} : vector<20x32x64xbf16> to vector<16x32x64xbf16>
    %10 = vector.extract_strided_slice %7 {offsets = [0, 0, 0], sizes = [16, 32, 64], strides = [1, 1, 1]} : vector<20x32x64xbf16> to vector<16x32x64xbf16>
    %11 = vector.extract_strided_slice %8 {offsets = [0, 0, 0], sizes = [16, 32, 64], strides = [1, 1, 1]} : vector<20x32x64xbf16> to vector<16x32x64xbf16>
    %12 = vector.extract_strided_slice %6 {offsets = [2, 0, 0], sizes = [16, 32, 64], strides = [1, 1, 1]} : vector<20x32x64xbf16> to vector<16x32x64xbf16>
    %13 = vector.extract_strided_slice %7 {offsets = [2, 0, 0], sizes = [16, 32, 64], strides = [1, 1, 1]} : vector<20x32x64xbf16> to vector<16x32x64xbf16>
    %14 = vector.extract_strided_slice %8 {offsets = [2, 0, 0], sizes = [16, 32, 64], strides = [1, 1, 1]} : vector<20x32x64xbf16> to vector<16x32x64xbf16>
    %15 = vector.extract_strided_slice %6 {offsets = [4, 0, 0], sizes = [16, 32, 64], strides = [1, 1, 1]} : vector<20x32x64xbf16> to vector<16x32x64xbf16>
    %16 = vector.extract_strided_slice %7 {offsets = [4, 0, 0], sizes = [16, 32, 64], strides = [1, 1, 1]} : vector<20x32x64xbf16> to vector<16x32x64xbf16>
    %17 = vector.extract_strided_slice %8 {offsets = [4, 0, 0], sizes = [16, 32, 64], strides = [1, 1, 1]} : vector<20x32x64xbf16> to vector<16x32x64xbf16>
    %18 = tpu.concatenate %9, %10, %11, %12, %13, %14, %15, %16, %17 in 2 : vector<16x32x64xbf16>, vector<16x32x64xbf16>, vector<16x32x64xbf16>, vector<16x32x64xbf16>, vector<16x32x64xbf16>, vector<16x32x64xbf16>, vector<16x32x64xbf16>, vector<16x32x64xbf16>, vector<16x32x64xbf16> -> vector<16x32x576xbf16>
    %19 = vector.shape_cast %18 : vector<16x32x576xbf16> to vector<512x576xbf16>
    %c0_19 = arith.constant 0 : index
    %c0_20 = arith.constant 0 : index
    %20 = vector.load %arg4[%c0_19, %c0_20] : memref<576x64xbf16, #tpu.memory_space<vmem>>, vector<576x64xbf16>
    %cst = arith.constant dense<0.000000e+00> : vector<512x64xf32>
    %21 = tpu.matmul %19, %20, %cst {dimension_numbers = #tpu.dot_dimension_numbers<[1], [0], [0], [1], [0, 0, 1, 1], [], []>} : vector<512x576xbf16>, vector<576x64xbf16>, vector<512x64xf32> -> vector<512x64xf32>
    %c0_21 = arith.constant 0 : index
    %c0_22 = arith.constant 0 : index
    %22 = vector.load %arg5[%c0_21, %c0_22] : memref<1x64xf32, #tpu.memory_space<vmem>>, vector<1x64xf32>
    %23 = vector.broadcast %22 : vector<1x64xf32> to vector<512x64xf32>
    %24 = arith.addf %21, %23 : vector<512x64xf32>
    %cst_23 = arith.constant 0.000000e+00 : f32
    %25 = vector.broadcast %cst_23 : f32 to vector<512x64xf32>
    %26 = arith.maximumf %24, %25 : vector<512x64xf32>
    %27 = arith.truncf %26 : vector<512x64xf32> to vector<512x64xbf16>
    %c0_24 = arith.constant 0 : index
    %c0_25 = arith.constant 0 : index
    %28 = vector.load %arg6[%c0_24, %c0_25] : memref<64x64xbf16, #tpu.memory_space<vmem>>, vector<64x64xbf16>
    %cst_26 = arith.constant dense<0.000000e+00> : vector<512x64xf32>
    %29 = tpu.matmul %27, %28, %cst_26 {dimension_numbers = #tpu.dot_dimension_numbers<[1], [0], [0], [1], [0, 0, 1, 1], [], []>} : vector<512x64xbf16>, vector<64x64xbf16>, vector<512x64xf32> -> vector<512x64xf32>
    %c0_27 = arith.constant 0 : index
    %c0_28 = arith.constant 0 : index
    %30 = vector.load %arg7[%c0_27, %c0_28] : memref<1x64xf32, #tpu.memory_space<vmem>>, vector<1x64xf32>
    %31 = vector.broadcast %30 : vector<1x64xf32> to vector<512x64xf32>
    %32 = arith.addf %29, %31 : vector<512x64xf32>
    %33 = vector.shape_cast %32 : vector<512x64xf32> to vector<16x32x64xf32>
    %34 = arith.truncf %33 : vector<16x32x64xf32> to vector<16x32x64xbf16>
    %c0_29 = arith.constant 0 : index
    %c0_30 = arith.constant 0 : index
    %c0_31 = arith.constant 0 : index
    %c0_32 = arith.constant 0 : index
    %35 = vector.load %arg8[%c0_29, %c0_30, %c0_31, %c0_32] : memref<1x16x32x64xbf16, #tpu.memory_space<vmem>>, vector<1x16x32x64xbf16>
    %36 = vector.shape_cast %35 : vector<1x16x32x64xbf16> to vector<16x32x64xbf16>
    %37 = vector.shape_cast %34 : vector<16x32x64xbf16> to vector<1x16x32x64xbf16>
    tpu.vector_store %arg8[%c0_29, %c0_30, %c0_31, %c0_32], %37 {strides = array<i32>} : memref<1x16x32x64xbf16, #tpu.memory_space<vmem>>, vector<1x16x32x64xbf16>,
    return
  }
  func.func @transform_0(%arg0: i32, %arg1: i32) -> (i32, i32, i32, i32) {
    %c0_i32 = arith.constant 0 : i32
    %c0_i32_0 = arith.constant 0 : i32
    %c0_i32_1 = arith.constant 0 : i32
    return %arg0, %arg1, %c0_i32, %c0_i32_0 : i32, i32, i32, i32
  }
  func.func @transform_1(%arg0: i32, %arg1: i32) -> (i32, i32, i32, i32) {
    %c1_i32 = arith.constant 1 : i32
    %0 = arith.addi %arg1, %c1_i32 : i32
    %c4_i32 = arith.constant 4 : i32
    %1 = arith.muli %0, %c4_i32 : i32
    %c0_i32 = arith.constant 0 : i32
    %c0_i32_0 = arith.constant 0 : i32
    %c0_i32_1 = arith.constant 0 : i32
    return %arg0, %1, %c0_i32, %c0_i32_0 : i32, i32, i32, i32
  }
  func.func @transform_2(%arg0: i32, %arg1: i32) -> (i32, i32) {
    %c0_i32 = arith.constant 0 : i32
    %c0_i32_0 = arith.constant 0 : i32
    %c0_i32_1 = arith.constant 0 : i32
    return %c0_i32, %c0_i32_0 : i32, i32
  }
  func.func @transform_3(%arg0: i32, %arg1: i32) -> (i32, i32) {
    %c0_i32 = arith.constant 0 : i32
    %c0_i32_0 = arith.constant 0 : i32
    %c0_i32_1 = arith.constant 0 : i32
    return %c0_i32, %c0_i32_0 : i32, i32
  }
  func.func @transform_4(%arg0: i32, %arg1: i32) -> (i32, i32) {
    %c0_i32 = arith.constant 0 : i32
    %c0_i32_0 = arith.constant 0 : i32
    %c0_i32_1 = arith.constant 0 : i32
    return %c0_i32, %c0_i32_0 : i32, i32
  }
  func.func @transform_5(%arg0: i32, %arg1: i32) -> (i32, i32) {
    %c0_i32 = arith.constant 0 : i32
    %c0_i32_0 = arith.constant 0 : i32
    %c0_i32_1 = arith.constant 0 : i32
    return %c0_i32, %c0_i32_0 : i32, i32
  }
  func.func @transform_6(%arg0: i32, %arg1: i32) -> (i32, i32, i32, i32) {
    %c0_i32 = arith.constant 0 : i32
    %c0_i32_0 = arith.constant 0 : i32
    %c0_i32_1 = arith.constant 0 : i32
    return %arg0, %arg1, %c0_i32, %c0_i32_0 : i32, i32, i32, i32
  }
}

</mosaic_0001>

<llo_original>
// kernel: conv_bn_act_conv.1
$region0: #{conv_bn_act_conv.1}
  #allocation0 [shape = 'u32[]', space=smem, size = 0x4, offset = 0x4, fixed_abs, tag = 'smem constant byte address 0x4 - core index']
  #allocation1 [shape = 'u32[144,128]{1,0:T(1,128)}', space=vmem, size = 0x12000, scoped, tag = 'internal scratch']
  #allocation2 [shape = 'bf16[20,36,64]{2,1,0:T(8,128)(2,1)}', space=vmem, size = 0x32000, scoped, tag = 'scratch operand']
  %s0 = inlined_call_operand.vmem [shape: bf16[2,36,36,64], index: 0, kind: input, shape index: {}, may-alias: {0,1}]
  %s1 = inlined_call_operand.vmem [shape: bf16[2,36,36,64], index: 1, kind: input, shape index: {}, may-alias: {0,1}]
  %s2 = inlined_call_operand.vmem [shape: bf16[576,64], index: 2, kind: input, shape index: {}]
  %s3 = inlined_call_operand.vmem [shape: f32[1,64], index: 3, kind: input, shape index: {}]
  %s4 = inlined_call_operand.vmem [shape: bf16[64,64], index: 4, kind: input, shape index: {}]
  %s5 = inlined_call_operand.vmem [shape: f32[1,64], index: 5, kind: input, shape index: {}]
  %s6 = inlined_call_operand.hbm [shape: bf16[2,32,32,64], index: 6, kind: output, shape index: {}]
  %s7 = sld [smem:[#allocation0]]
  $region57: #{conv_bn_act_conv.1} parent=0
    _
  %s9 = ssub.s32 1, %s7
  %s10 = scalar_select 0, %s9, %s7
  $region1: #{conv_bn_act_conv.1} parent=0
    #allocation3 [shape = 'u8[262144]{0}', space=vmem, size = 0x40000, scoped, tag = 'output window, operand 0']
    #allocation4 [shape = 's32[2]{0}', space=sflag, size = 0x8, scoped, tag = 'scoped memory for conv_bn_act_conv.1']
    %11 = vsyncpa [#allocation4], 0
    %s12 = scalar_lea.sflag [#allocation4], 1
    %13 = vsyncpa %s12, 0
    loop: start=0, step=1, limit=6
    $region2: #{conv_bn_act_conv.1} parent=1 // loop_pre_header
      _
    $region3: #{conv_bn_act_conv.1} parent=1 // loop_header
      %s15 = sphi 0, %s19
      %p16 = scmp.ge.s32.totalorder %s15, 6
      %s22 = sphi 0, %s34
      %s23 = sphi 0, %s30
      %s24 = sphi 0, %s22
      %s25 = sphi 0, %s23
      %s26 = sphi 0, %s24
      %s27 = sphi 0, %s25
      %s39 = sphi 0, %s41
      %s42 = sphi 0, %s39
      %s43 = sphi 0, %s42
      %s59 = sphi 0, %s43
      %s71 = sphi 0, %s73
      %s74 = sphi 0, %s71
      %s75 = sphi 0, %s74
      %s91 = sphi 0, %s75
      %s95 = sphi 0, %s95
      %s97 = sphi 0, %s95
      %s98 = sphi 0, %s97
      %s112 = sphi 0, %s98
      %s116 = sphi 0, %s116
      %s118 = sphi 0, %s116
      %s119 = sphi 0, %s118
      %s133 = sphi 0, %s119
      %s137 = sphi 0, %s137
      %s139 = sphi 0, %s137
      %s140 = sphi 0, %s139
      %s154 = sphi 0, %s140
      %s158 = sphi 0, %s158
      %s160 = sphi 0, %s158
      %s161 = sphi 0, %s160
      %s175 = sphi 0, %s161
      %s183 = sphi 0, %s185
      %s186 = sphi 0, %s183
      %s187 = sphi 0, %s186
      %s203 = sphi 0, %s187
    $region4: #{conv_bn_act_conv.1} parent=1 // loop_header_branch
      %18 = sbr.rel (%p16) target = $region8
    $region5: #{conv_bn_act_conv.1} parent=1 // loop_body
      %s20 = ssub.s32 %s15, 1
      %s21 = ssub.s32 %s15, 2
      %s28 = sadd.s32 1, %s23
      %p29 = scmp.ge.s32.totalorder %s28, 2
      %s30 = scalar_select %p29, 0, %s28
      %s31 = sadd.s32 1, %s22
      %s32 = scalar_select %p29, %s31, %s22
      %p33 = scmp.ge.s32.totalorder %s32, 2
      %s34 = scalar_select %p33, 0, %s32
      %s35 = ssub.s32 %s22, %s34
      %s36 = ssub.s32 %s23, %s30
      %s37 = sor.u32 %s35, %s36
      %p38 = scmp.eq.s32.totalorder %s37, 0
      %s40 = sadd.s32 %s39, 1
      %s41 = scalar_select %p38, %s39, %s40
      %p44 = pneg %p38
      %p45 = scmp.eq.s32.totalorder %s15, 3
      %p46 = por %p44, %p45
      %p47 = scmp.ne.s32.totalorder %s39, %s42
      %p48 = scmp.eq.s32.totalorder %s15, 0
      %p49 = por %p47, %p48
      %p50 = scmp.ne.s32.totalorder %s39, %s42
      %p51 = scmp.eq.s32.totalorder %s20, 3
      %p52 = por %p50, %p51
      %p53 = scmp.ne.s32.totalorder %s42, %s43
      %p54 = scmp.eq.s32.totalorder %s20, 0
      %p55 = por %p53, %p54
      %p56 = scmp.ne.s32.totalorder %s42, %s43
      %p57 = scmp.eq.s32.totalorder %s21, 3
      %p58 = por %p56, %p57
      %p60 = scmp.ne.s32.totalorder %s43, %s59
      %p61 = scmp.eq.s32.totalorder %s21, 0
      %p62 = por %p60, %p61
      %s63 = sadd.s32 %s23, 1
      %s64 = smul.u32 %s63, 4
      %s65 = sadd.s32 %s30, 1
      %s66 = smul.u32 %s65, 4
      %s67 = ssub.s32 %s22, %s34
      %s68 = ssub.s32 %s64, %s66
      %s69 = sor.u32 %s67, %s68
      %p70 = scmp.eq.s32.totalorder %s69, 0
      %s72 = sadd.s32 %s71, 1
      %s73 = scalar_select %p70, %s71, %s72
      %p76 = pneg %p70
      %p77 = scmp.eq.s32.totalorder %s15, 3
      %p78 = por %p76, %p77
      %p79 = scmp.ne.s32.totalorder %s71, %s74
      %p80 = scmp.eq.s32.totalorder %s15, 0
      %p81 = por %p79, %p80
      %p82 = scmp.ne.s32.totalorder %s71, %s74
      %p83 = scmp.eq.s32.totalorder %s20, 3
      %p84 = por %p82, %p83
      %p85 = scmp.ne.s32.totalorder %s74, %s75
      %p86 = scmp.eq.s32.totalorder %s20, 0
      %p87 = por %p85, %p86
      %p88 = scmp.ne.s32.totalorder %s74, %s75
      %p89 = scmp.eq.s32.totalorder %s21, 3
      %p90 = por %p88, %p89
      %p92 = scmp.ne.s32.totalorder %s75, %s91
      %p93 = scmp.eq.s32.totalorder %s21, 0
      %p94 = por %p92, %p93
      %s96 = sadd.s32 %s95, 1
      %p99 = scmp.eq.s32.totalorder %s15, 3
      %p100 = scmp.ne.s32.totalorder %s95, %s97
      %p101 = scmp.eq.s32.totalorder %s15, 0
      %p102 = por %p100, %p101
      %p103 = scmp.ne.s32.totalorder %s95, %s97
      %p104 = scmp.eq.s32.totalorder %s20, 3
      %p105 = por %p103, %p104
      %p106 = scmp.ne.s32.totalorder %s97, %s98
      %p107 = scmp.eq.s32.totalorder %s20, 0
      %p108 = por %p106, %p107
      %p109 = scmp.ne.s32.totalorder %s97, %s98
      %p110 = scmp.eq.s32.totalorder %s21, 3
      %p111 = por %p109, %p110
      %p113 = scmp.ne.s32.totalorder %s98, %s112
      %p114 = scmp.eq.s32.totalorder %s21, 0
      %p115 = por %p113, %p114
      %s117 = sadd.s32 %s116, 1
      %p120 = scmp.eq.s32.totalorder %s15, 3
      %p121 = scmp.ne.s32.totalorder %s116, %s118
      %p122 = scmp.eq.s32.totalorder %s15, 0
      %p123 = por %p121, %p122
      %p124 = scmp.ne.s32.totalorder %s116, %s118
      %p125 = scmp.eq.s32.totalorder %s20, 3
      %p126 = por %p124, %p125
      %p127 = scmp.ne.s32.totalorder %s118, %s119
      %p128 = scmp.eq.s32.totalorder %s20, 0
      %p129 = por %p127, %p128
      %p130 = scmp.ne.s32.totalorder %s118, %s119
      %p131 = scmp.eq.s32.totalorder %s21, 3
      %p132 = por %p130, %p131
      %p134 = scmp.ne.s32.totalorder %s119, %s133
      %p135 = scmp.eq.s32.totalorder %s21, 0
      %p136 = por %p134, %p135
      %s138 = sadd.s32 %s137, 1
      %p141 = scmp.eq.s32.totalorder %s15, 3
      %p142 = scmp.ne.s32.totalorder %s137, %s139
      %p143 = scmp.eq.s32.totalorder %s15, 0
      %p144 = por %p142, %p143
      %p145 = scmp.ne.s32.totalorder %s137, %s139
      %p146 = scmp.eq.s32.totalorder %s20, 3
      %p147 = por %p145, %p146
      %p148 = scmp.ne.s32.totalorder %s139, %s140
      %p149 = scmp.eq.s32.totalorder %s20, 0
      %p150 = por %p148, %p149
      %p151 = scmp.ne.s32.totalorder %s139, %s140
      %p152 = scmp.eq.s32.totalorder %s21, 3
      %p153 = por %p151, %p152
      %p155 = scmp.ne.s32.totalorder %s140, %s154
      %p156 = scmp.eq.s32.totalorder %s21, 0
      %p157 = por %p155, %p156
      %s159 = sadd.s32 %s158, 1
      %p162 = scmp.eq.s32.totalorder %s15, 3
      %p163 = scmp.ne.s32.totalorder %s158, %s160
      %p164 = scmp.eq.s32.totalorder %s15, 0
      %p165 = por %p163, %p164
      %p166 = scmp.ne.s32.totalorder %s158, %s160
      %p167 = scmp.eq.s32.totalorder %s20, 3
      %p168 = por %p166, %p167
      %p169 = scmp.ne.s32.totalorder %s160, %s161
      %p170 = scmp.eq.s32.totalorder %s20, 0
      %p171 = por %p169, %p170
      %p172 = scmp.ne.s32.totalorder %s160, %s161
      %p173 = scmp.eq.s32.totalorder %s21, 3
      %p174 = por %p172, %p173
      %p176 = scmp.ne.s32.totalorder %s161, %s175
      %p177 = scmp.eq.s32.totalorder %s21, 0
      %p178 = por %p176, %p177
      %s179 = ssub.s32 %s22, %s34
      %s180 = ssub.s32 %s23, %s30
      %s181 = sor.u32 %s179, %s180
      %p182 = scmp.eq.s32.totalorder %s181, 0
      %s184 = sadd.s32 %s183, 1
      %s185 = scalar_select %p182, %s183, %s184
      %p188 = pneg %p182
      %p189 = scmp.eq.s32.totalorder %s15, 3
      %p190 = por %p188, %p189
      %p191 = scmp.ne.s32.totalorder %s183, %s186
      %p192 = scmp.eq.s32.totalorder %s15, 0
      %p193 = por %p191, %p192
      %p194 = scmp.ne.s32.totalorder %s183, %s186
      %p195 = scmp.eq.s32.totalorder %s20, 3
      %p196 = por %p194, %p195
      %p197 = scmp.ne.s32.totalorder %s186, %s187
      %p198 = scmp.eq.s32.totalorder %s20, 0
      %p199 = por %p197, %p198
      %p200 = scmp.ne.s32.totalorder %s186, %s187
      %p201 = scmp.eq.s32.totalorder %s21, 3
      %p202 = por %p200, %p201
      %p204 = scmp.ne.s32.totalorder %s187, %s203
      %p205 = scmp.eq.s32.totalorder %s21, 0
      %p206 = por %p204, %p205
      %p207 = scmp.le.s32.totalorder 1, %s15
      %p208 = scmp.lt.s32.totalorder %s15, 5
      %p209 = pnand %p207, %p208
      %p210 = pneg %p209
      // Predicated region
      $region9: #{conv_bn_act_conv.1} parent=5 // pred_check
        _
      $region10: #{conv_bn_act_conv.1} parent=5 // pred_check_branch
        %212 = sbr.rel (%p209) target = $region12
      $region11: #{conv_bn_act_conv.1} parent=5 // pred_region
        %s213 = ssub.s32 %s15, 1
        // Predicated region
        $region13: #{conv_bn_act_conv.1} parent=11 // pred_check
          %p214 = pneg %p108
        $region14: #{conv_bn_act_conv.1} parent=11 // pred_check_branch
          %216 = sbr.rel (%p214) target = $region16
        $region15: #{conv_bn_act_conv.1} parent=11 // pred_region
          _
        $region16: #{conv_bn_act_conv.1} parent=11 // pred_fallthru
          _
        // Predicated region
        $region17: #{conv_bn_act_conv.1} parent=11 // pred_check
          %p217 = pneg %p129
        $region18: #{conv_bn_act_conv.1} parent=11 // pred_check_branch
          %219 = sbr.rel (%p217) target = $region20
        $region19: #{conv_bn_act_conv.1} parent=11 // pred_region
          _
        $region20: #{conv_bn_act_conv.1} parent=11 // pred_fallthru
          _
        // Predicated region
        $region21: #{conv_bn_act_conv.1} parent=11 // pred_check
          %p220 = pneg %p150
        $region22: #{conv_bn_act_conv.1} parent=11 // pred_check_branch
          %222 = sbr.rel (%p220) target = $region24
        $region23: #{conv_bn_act_conv.1} parent=11 // pred_region
          _
        $region24: #{conv_bn_act_conv.1} parent=11 // pred_fallthru
          _
        // Predicated region
        $region25: #{conv_bn_act_conv.1} parent=11 // pred_check
          %p223 = pneg %p171
        $region26: #{conv_bn_act_conv.1} parent=11 // pred_check_branch
          %225 = sbr.rel (%p223) target = $region28
        $region27: #{conv_bn_act_conv.1} parent=11 // pred_region
          _
        $region28: #{conv_bn_act_conv.1} parent=11 // pred_fallthru
          _
      $region12: #{conv_bn_act_conv.1} parent=5 // pred_fallthru
        _
      %p226 = scmp.lt.s32.totalorder %s15, 4
      // Predicated region
      $region29: #{conv_bn_act_conv.1} parent=5 // pred_check
        %p227 = pneg %p226
      $region30: #{conv_bn_act_conv.1} parent=5 // pred_check_branch
        %229 = sbr.rel (%p227) target = $region32
      $region31: #{conv_bn_act_conv.1} parent=5 // pred_region
        // Predicated region
        $region33: #{conv_bn_act_conv.1} parent=31 // pred_check
          %p230 = pneg %p49
        $region34: #{conv_bn_act_conv.1} parent=31 // pred_check_branch
          %232 = sbr.rel (%p230) target = $region36
        $region35: #{conv_bn_act_conv.1} parent=31 // pred_region
          %s233 = smul.u32 16, %s23
          %s234 = ssub.s32 36, %s233
          %p235 = scmp.lt.s32.totalorder %s234, 16
          %s236 = scalar_select %p235, %s234, 16
          %s237 = smul.u32 64, %s236
          %s238 = smul.u32 %s237, 5
          %p239 = scmp.lt.s32.totalorder %s22, 1
          %s240 = scalar_select %p239, %s22, 1
          %p241 = scmp.lt.s32.totalorder %s233, 35
          %s242 = scalar_select %p241, %s233, 35
          %s243 = smul.addr %s242, 5
          %s244 = smul.addr %s240, 180
          %s245 = sadd.s32 %s243, %s244
          %s246 = smul.addr %s245, 4
          %s247 = scalar_lea.vmem %s0, %s246
          %s248 = smul.u32 16, %s23
          %s249 = ssub.s32 36, %s248
          %p250 = scmp.lt.s32.totalorder %s249, 16
          %s251 = scalar_select %p250, %s249, 16
          %s252 = smul.u32 64, %s251
          %s253 = smul.u32 %s252, 5
        $region36: #{conv_bn_act_conv.1} parent=31 // pred_fallthru
          _
        // Predicated region
        $region37: #{conv_bn_act_conv.1} parent=31 // pred_check
          %p254 = pneg %p81
        $region38: #{conv_bn_act_conv.1} parent=31 // pred_check_branch
          %256 = sbr.rel (%p254) target = $region40
        $region39: #{conv_bn_act_conv.1} parent=31 // pred_region
          %s257 = sadd.s32 %s23, 1
          %s258 = smul.u32 %s257, 4
          %s259 = smul.u32 4, %s258
          %p260 = scmp.lt.s32.totalorder %s22, 1
          %s261 = scalar_select %p260, %s22, 1
          %p262 = scmp.lt.s32.totalorder %s259, 35
          %s263 = scalar_select %p262, %s259, 35
          %s264 = smul.addr %s263, 5
          %s265 = smul.addr %s261, 180
          %s266 = sadd.s32 %s264, %s265
          %s267 = smul.addr %s266, 4
          %s268 = scalar_lea.vmem %s1, %s267
          %s269 = sadd.s32 %s23, 1
          %s270 = smul.u32 %s269, 4
          %s271 = smul.u32 4, %s270
        $region40: #{conv_bn_act_conv.1} parent=31 // pred_fallthru
          _
      $region32: #{conv_bn_act_conv.1} parent=5 // pred_fallthru
        _
      %p272 = scmp.le.s32.totalorder 1, %s15
      %p273 = scmp.lt.s32.totalorder %s15, 5
      %p274 = pnand %p272, %p273
      %p275 = pneg %p274
      // Predicated region
      $region41: #{conv_bn_act_conv.1} parent=5 // pred_check
        _
      $region42: #{conv_bn_act_conv.1} parent=5 // pred_check_branch
        %277 = sbr.rel (%p274) target = $region44
      $region43: #{conv_bn_act_conv.1} parent=5 // pred_region
        %s278 = ssub.s32 %s15, 1
        %s279 = smul.u32 16, %s25
        %s280 = ssub.s32 36, %s279
        %p281 = scmp.lt.s32.totalorder %s280, 16
        %s282 = scalar_select %p281, %s280, 16
        %s283 = smul.u32 64, %s282
        %s284 = smul.u32 %s283, 5
        %p285 = scmp.lt.s32.totalorder %s24, 1
        %s286 = scalar_select %p285, %s24, 1
        %p287 = scmp.lt.s32.totalorder %s279, 35
        %s288 = scalar_select %p287, %s279, 35
        %s289 = smul.addr %s288, 5
        %s290 = smul.addr %s286, 180
        %s291 = sadd.s32 %s289, %s290
        %s292 = smul.addr %s291, 4
        %s293 = scalar_lea.vmem %s0, %s292
        %p294 = pneg %p55
        %p295 = pneg %p52
        %s296 = sadd.s32 %s25, 1
        %s297 = smul.u32 %s296, 4
        %s298 = smul.u32 4, %s297
        %p299 = scmp.lt.s32.totalorder %s24, 1
        %s300 = scalar_select %p299, %s24, 1
        %p301 = scmp.lt.s32.totalorder %s298, 35
        %s302 = scalar_select %p301, %s298, 35
        %s303 = smul.addr %s302, 5
        %s304 = smul.addr %s300, 180
        %s305 = sadd.s32 %s303, %s304
        %s306 = smul.addr %s305, 4
        %s307 = scalar_lea.vmem %s1, %s306
        %p308 = pneg %p87
        %p309 = pneg %p84
        %p310 = pneg %p108
        %p311 = pneg %p105
        %p312 = pneg %p129
        %p313 = pneg %p126
        %p314 = pneg %p150
        %p315 = pneg %p147
        %p316 = pneg %p171
        %p317 = pneg %p168
        %p318 = pneg %p199
        %p319 = pneg %p196
        %s320 = sand.u32 %s186, 1
        %s321 = scalar_lea.sflag [#allocation4], %s320
        %s322 = sand.u32 %s186, 1
        %s323 = smul.addr %s322, 256
        %s324 = scalar_lea.vmem [#allocation3], %s323
        %s325 = smul.u32 16, %s25
        %s326 = ssub.s32 36, %s325
        %p327 = scmp.lt.s32.totalorder %s326, 16
        %s328 = scalar_select %p327, %s326, 16
        %s329 = smul.u32 64, %s328
        %s330 = smul.u32 %s329, 5
        %p331 = scmp.lt.s32.totalorder %s24, 1
        %s332 = scalar_select %p331, %s24, 1
        %p333 = scmp.lt.s32.totalorder %s325, 35
        %s334 = scalar_select %p333, %s325, 35
        %s335 = smul.addr %s334, 5
        %s336 = smul.addr %s332, 180
        %s337 = sadd.s32 %s335, %s336
        %s338 = smul.addr %s337, 4
        %s339 = scalar_lea.vmem %s0, %s338
        %s340 = smul.u32 16, %s25
        %s341 = ssub.s32 36, %s340
        %p342 = scmp.lt.s32.totalorder %s341, 16
        %s343 = scalar_select %p342, %s341, 16
        %s344 = smul.u32 64, %s343
        %s345 = smul.u32 %s344, 5
        %s346 = sadd.s32 %s25, 1
        %s347 = smul.u32 %s346, 4
        %s348 = smul.u32 4, %s347
        %p349 = scmp.lt.s32.totalorder %s24, 1
        %s350 = scalar_select %p349, %s24, 1
        %p351 = scmp.lt.s32.totalorder %s348, 35
        %s352 = scalar_select %p351, %s348, 35
        %s353 = smul.addr %s352, 5
        %s354 = smul.addr %s350, 180
        %s355 = sadd.s32 %s353, %s354
        %s356 = smul.addr %s355, 4
        %s357 = scalar_lea.vmem %s1, %s356
        %s358 = sadd.s32 %s25, 1
        %s359 = smul.u32 %s358, 4
        %s360 = smul.u32 4, %s359
        %s361 = smul.u32 16, %s25
        %v363 = vld [vmem:[%s339] sm:$0xf]
        %v364 = vld [vmem:[%s339 + $0x4] sm:$0xf]
        %v365 = vld [vmem:[%s339 + $0x8] sm:$0xf]
        %v366 = vld [vmem:[%s339 + $0xc] sm:$0xf]
        %v367 = vld [vmem:[%s339 + $0x10] sm:$0x3]
        %v368 = vld [vmem:[%s339 + $0x14] sm:$0xf]
        %v369 = vld [vmem:[%s339 + $0x18] sm:$0xf]
        %v370 = vld [vmem:[%s339 + $0x1c] sm:$0xf]
        %v371 = vld [vmem:[%s339 + $0x20] sm:$0xf]
        %v372 = vld [vmem:[%s339 + $0x24] sm:$0x3]
        %v373 = vld [vmem:[%s339 + $0x28] sm:$0xf]
        %v374 = vld [vmem:[%s339 + $0x2c] sm:$0xf]
        %v375 = vld [vmem:[%s339 + $0x30] sm:$0xf]
        %v376 = vld [vmem:[%s339 + $0x34] sm:$0xf]
        %v377 = vld [vmem:[%s339 + $0x38] sm:$0x3]
        %v378 = vld [vmem:[%s339 + $0x3c] sm:$0xf]
        %v379 = vld [vmem:[%s339 + $0x40] sm:$0xf]
        %v380 = vld [vmem:[%s339 + $0x44] sm:$0xf]
        %v381 = vld [vmem:[%s339 + $0x48] sm:$0xf]
        %v382 = vld [vmem:[%s339 + $0x4c] sm:$0x3]
        %v383 = vld [vmem:[%s339 + $0x50] sm:$0xf]
        %v384 = vld [vmem:[%s339 + $0x54] sm:$0xf]
        %v385 = vld [vmem:[%s339 + $0x58] sm:$0xf]
        %v386 = vld [vmem:[%s339 + $0x5c] sm:$0xf]
        %v387 = vld [vmem:[%s339 + $0x60] sm:$0x3]
        %v388 = vld [vmem:[%s339 + $0x64] sm:$0xf]
        %v389 = vld [vmem:[%s339 + $0x68] sm:$0xf]
        %v390 = vld [vmem:[%s339 + $0x6c] sm:$0xf]
        %v391 = vld [vmem:[%s339 + $0x70] sm:$0xf]
        %v392 = vld [vmem:[%s339 + $0x74] sm:$0x3]
        %v393 = vld [vmem:[%s339 + $0x78] sm:$0xf]
        %v394 = vld [vmem:[%s339 + $0x7c] sm:$0xf]
        %v395 = vld [vmem:[%s339 + $0x80] sm:$0xf]
        %v396 = vld [vmem:[%s339 + $0x84] sm:$0xf]
        %v397 = vld [vmem:[%s339 + $0x88] sm:$0x3]
        %v398 = vld [vmem:[%s339 + $0x8c] sm:$0xf]
        %v399 = vld [vmem:[%s339 + $0x90] sm:$0xf]
        %v400 = vld [vmem:[%s339 + $0x94] sm:$0xf]
        %v401 = vld [vmem:[%s339 + $0x98] sm:$0xf]
        %v402 = vld [vmem:[%s339 + $0x9c] sm:$0x3]
        %v403 = vld [vmem:[%s339 + $0xa0] sm:$0xf]
        %v404 = vld [vmem:[%s339 + $0xa4] sm:$0xf]
        %v405 = vld [vmem:[%s339 + $0xa8] sm:$0xf]
        %v406 = vld [vmem:[%s339 + $0xac] sm:$0xf]
        %v407 = vld [vmem:[%s339 + $0xb0] sm:$0x3]
        %v408 = vld [vmem:[%s339 + $0xb4] sm:$0xf]
        %v409 = vld [vmem:[%s339 + $0xb8] sm:$0xf]
        %v410 = vld [vmem:[%s339 + $0xbc] sm:$0xf]
        %v411 = vld [vmem:[%s339 + $0xc0] sm:$0xf]
        %v412 = vld [vmem:[%s339 + $0xc4] sm:$0x3]
        %v413 = vld [vmem:[%s339 + $0xc8] sm:$0xf]
        %v414 = vld [vmem:[%s339 + $0xcc] sm:$0xf]
        %v415 = vld [vmem:[%s339 + $0xd0] sm:$0xf]
        %v416 = vld [vmem:[%s339 + $0xd4] sm:$0xf]
        %v417 = vld [vmem:[%s339 + $0xd8] sm:$0x3]
        %v418 = vld [vmem:[%s339 + $0xdc] sm:$0xf]
        %v419 = vld [vmem:[%s339 + $0xe0] sm:$0xf]
        %v420 = vld [vmem:[%s339 + $0xe4] sm:$0xf]
        %v421 = vld [vmem:[%s339 + $0xe8] sm:$0xf]
        %v422 = vld [vmem:[%s339 + $0xec] sm:$0x3]
        %v423 = vld [vmem:[%s339 + $0xf0] sm:$0xf]
        %v424 = vld [vmem:[%s339 + $0xf4] sm:$0xf]
        %v425 = vld [vmem:[%s339 + $0xf8] sm:$0xf]
        %v426 = vld [vmem:[%s339 + $0xfc] sm:$0xf]
        %v427 = vld [vmem:[%s339 + $0x100] sm:$0x3]
        %v428 = vld [vmem:[%s339 + $0x104] sm:$0xf]
        %v429 = vld [vmem:[%s339 + $0x108] sm:$0xf]
        %v430 = vld [vmem:[%s339 + $0x10c] sm:$0xf]
        %v431 = vld [vmem:[%s339 + $0x110] sm:$0xf]
        %v432 = vld [vmem:[%s339 + $0x114] sm:$0x3]
        %v433 = vld [vmem:[%s339 + $0x118] sm:$0xf]
        %v434 = vld [vmem:[%s339 + $0x11c] sm:$0xf]
        %v435 = vld [vmem:[%s339 + $0x120] sm:$0xf]
        %v436 = vld [vmem:[%s339 + $0x124] sm:$0xf]
        %v437 = vld [vmem:[%s339 + $0x128] sm:$0x3]
        %v438 = vld [vmem:[%s339 + $0x12c] sm:$0xf]
        %v439 = vld [vmem:[%s339 + $0x130] sm:$0xf]
        %v440 = vld [vmem:[%s339 + $0x134] sm:$0xf]
        %v441 = vld [vmem:[%s339 + $0x138] sm:$0xf]
        %v442 = vld [vmem:[%s339 + $0x13c] sm:$0x3]
        %vm443 = vcmask 519168
        %444 = vst.msk [vmem:[#allocation2] sm:$0xf] %vm443, %v363
        %445 = vst.msk [vmem:[#allocation2 + $0x4] sm:$0xf] %vm443, %v364
        %446 = vst.msk [vmem:[#allocation2 + $0x8] sm:$0xf] %vm443, %v365
        %447 = vst.msk [vmem:[#allocation2 + $0xc] sm:$0xf] %vm443, %v366
        %vm448 = vcmask 517120
        %449 = vst.msk [vmem:[#allocation2 + $0x10] sm:$0x3] %vm448, %v367
        %450 = vst.msk [vmem:[#allocation2 + $0x14] sm:$0xf] %vm443, %v368
        %451 = vst.msk [vmem:[#allocation2 + $0x18] sm:$0xf] %vm443, %v369
        %452 = vst.msk [vmem:[#allocation2 + $0x1c] sm:$0xf] %vm443, %v370
        %453 = vst.msk [vmem:[#allocation2 + $0x20] sm:$0xf] %vm443, %v371
        %454 = vst.msk [vmem:[#allocation2 + $0x24] sm:$0x3] %vm448, %v372
        %455 = vst.msk [vmem:[#allocation2 + $0x28] sm:$0xf] %vm443, %v373
        %456 = vst.msk [vmem:[#allocation2 + $0x2c] sm:$0xf] %vm443, %v374
        %457 = vst.msk [vmem:[#allocation2 + $0x30] sm:$0xf] %vm443, %v375
        %458 = vst.msk [vmem:[#allocation2 + $0x34] sm:$0xf] %vm443, %v376
        %459 = vst.msk [vmem:[#allocation2 + $0x38] sm:$0x3] %vm448, %v377
        %460 = vst.msk [vmem:[#allocation2 + $0x3c] sm:$0xf] %vm443, %v378
        %461 = vst.msk [vmem:[#allocation2 + $0x40] sm:$0xf] %vm443, %v379
        %462 = vst.msk [vmem:[#allocation2 + $0x44] sm:$0xf] %vm443, %v380
        %463 = vst.msk [vmem:[#allocation2 + $0x48] sm:$0xf] %vm443, %v381
        %464 = vst.msk [vmem:[#allocation2 + $0x4c] sm:$0x3] %vm448, %v382
        %465 = vst.msk [vmem:[#allocation2 + $0x50] sm:$0xf] %vm443, %v383
        %466 = vst.msk [vmem:[#allocation2 + $0x54] sm:$0xf] %vm443, %v384
        %467 = vst.msk [vmem:[#allocation2 + $0x58] sm:$0xf] %vm443, %v385
        %468 = vst.msk [vmem:[#allocation2 + $0x5c] sm:$0xf] %vm443, %v386
        %469 = vst.msk [vmem:[#allocation2 + $0x60] sm:$0x3] %vm448, %v387
        %470 = vst.msk [vmem:[#allocation2 + $0x64] sm:$0xf] %vm443, %v388
        %471 = vst.msk [vmem:[#allocation2 + $0x68] sm:$0xf] %vm443, %v389
        %472 = vst.msk [vmem:[#allocation2 + $0x6c] sm:$0xf] %vm443, %v390
        %473 = vst.msk [vmem:[#allocation2 + $0x70] sm:$0xf] %vm443, %v391
        %474 = vst.msk [vmem:[#allocation2 + $0x74] sm:$0x3] %vm448, %v392
        %475 = vst.msk [vmem:[#allocation2 + $0x78] sm:$0xf] %vm443, %v393
        %476 = vst.msk [vmem:[#allocation2 + $0x7c] sm:$0xf] %vm443, %v394
        %477 = vst.msk [vmem:[#allocation2 + $0x80] sm:$0xf] %vm443, %v395
        %478 = vst.msk [vmem:[#allocation2 + $0x84] sm:$0xf] %vm443, %v396
        %479 = vst.msk [vmem:[#allocation2 + $0x88] sm:$0x3] %vm448, %v397
        %480 = vst.msk [vmem:[#allocation2 + $0x8c] sm:$0xf] %vm443, %v398
        %481 = vst.msk [vmem:[#allocation2 + $0x90] sm:$0xf] %vm443, %v399
        %482 = vst.msk [vmem:[#allocation2 + $0x94] sm:$0xf] %vm443, %v400
        %483 = vst.msk [vmem:[#allocation2 + $0x98] sm:$0xf] %vm443, %v401
        %484 = vst.msk [vmem:[#allocation2 + $0x9c] sm:$0x3] %vm448, %v402
        %485 = vst.msk [vmem:[#allocation2 + $0xa0] sm:$0xf] %vm443, %v403
        %486 = vst.msk [vmem:[#allocation2 + $0xa4] sm:$0xf] %vm443, %v404
        %487 = vst.msk [vmem:[#allocation2 + $0xa8] sm:$0xf] %vm443, %v405
        %488 = vst.msk [vmem:[#allocation2 + $0xac] sm:$0xf] %vm443, %v406
        %489 = vst.msk [vmem:[#allocation2 + $0xb0] sm:$0x3] %vm448, %v407
        %490 = vst.msk [vmem:[#allocation2 + $0xb4] sm:$0xf] %vm443, %v408
        %491 = vst.msk [vmem:[#allocation2 + $0xb8] sm:$0xf] %vm443, %v409
        %492 = vst.msk [vmem:[#allocation2 + $0xbc] sm:$0xf] %vm443, %v410
        %493 = vst.msk [vmem:[#allocation2 + $0xc0] sm:$0xf] %vm443, %v411
        %494 = vst.msk [vmem:[#allocation2 + $0xc4] sm:$0x3] %vm448, %v412
        %495 = vst.msk [vmem:[#allocation2 + $0xc8] sm:$0xf] %vm443, %v413
        %496 = vst.msk [vmem:[#allocation2 + $0xcc] sm:$0xf] %vm443, %v414
        %497 = vst.msk [vmem:[#allocation2 + $0xd0] sm:$0xf] %vm443, %v415
        %498 = vst.msk [vmem:[#allocation2 + $0xd4] sm:$0xf] %vm443, %v416
        %499 = vst.msk [vmem:[#allocation2 + $0xd8] sm:$0x3] %vm448, %v417
        %500 = vst.msk [vmem:[#allocation2 + $0xdc] sm:$0xf] %vm443, %v418
        %501 = vst.msk [vmem:[#allocation2 + $0xe0] sm:$0xf] %vm443, %v419
        %502 = vst.msk [vmem:[#allocation2 + $0xe4] sm:$0xf] %vm443, %v420
        %503 = vst.msk [vmem:[#allocation2 + $0xe8] sm:$0xf] %vm443, %v421
        %504 = vst.msk [vmem:[#allocation2 + $0xec] sm:$0x3] %vm448, %v422
        %505 = vst.msk [vmem:[#allocation2 + $0xf0] sm:$0xf] %vm443, %v423
        %506 = vst.msk [vmem:[#allocation2 + $0xf4] sm:$0xf] %vm443, %v424
        %507 = vst.msk [vmem:[#allocation2 + $0xf8] sm:$0xf] %vm443, %v425
        %508 = vst.msk [vmem:[#allocation2 + $0xfc] sm:$0xf] %vm443, %v426
        %509 = vst.msk [vmem:[#allocation2 + $0x100] sm:$0x3] %vm448, %v427
        %510 = vst.msk [vmem:[#allocation2 + $0x104] sm:$0xf] %vm443, %v428
        %511 = vst.msk [vmem:[#allocation2 + $0x108] sm:$0xf] %vm443, %v429
        %512 = vst.msk [vmem:[#allocation2 + $0x10c] sm:$0xf] %vm443, %v430
        %513 = vst.msk [vmem:[#allocation2 + $0x110] sm:$0xf] %vm443, %v431
        %514 = vst.msk [vmem:[#allocation2 + $0x114] sm:$0x3] %vm448, %v432
        %515 = vst.msk [vmem:[#allocation2 + $0x118] sm:$0xf] %vm443, %v433
        %516 = vst.msk [vmem:[#allocation2 + $0x11c] sm:$0xf] %vm443, %v434
        %517 = vst.msk [vmem:[#allocation2 + $0x120] sm:$0xf] %vm443, %v435
        %518 = vst.msk [vmem:[#allocation2 + $0x124] sm:$0xf] %vm443, %v436
        %519 = vst.msk [vmem:[#allocation2 + $0x128] sm:$0x3] %vm448, %v437
        %520 = vst.msk [vmem:[#allocation2 + $0x12c] sm:$0xf] %vm443, %v438
        %521 = vst.msk [vmem:[#allocation2 + $0x130] sm:$0xf] %vm443, %v439
        %522 = vst.msk [vmem:[#allocation2 + $0x134] sm:$0xf] %vm443, %v440
        %523 = vst.msk [vmem:[#allocation2 + $0x138] sm:$0xf] %vm443, %v441
        %524 = vst.msk [vmem:[#allocation2 + $0x13c] sm:$0x3] %vm448, %v442
        %v525 = vld [vmem:[%s357] sm:$0xf]
        %v526 = vld [vmem:[%s357 + $0x4] sm:$0xf]
        %v527 = vld [vmem:[%s357 + $0x8] sm:$0xf]
        %v528 = vld [vmem:[%s357 + $0xc] sm:$0xf]
        %v529 = vld [vmem:[%s357 + $0x10] sm:$0x3]
        %v530 = vld [vmem:[%s357 + $0x14] sm:$0xf]
        %v531 = vld [vmem:[%s357 + $0x18] sm:$0xf]
        %v532 = vld [vmem:[%s357 + $0x1c] sm:$0xf]
        %v533 = vld [vmem:[%s357 + $0x20] sm:$0xf]
        %v534 = vld [vmem:[%s357 + $0x24] sm:$0x3]
        %v535 = vld [vmem:[%s357 + $0x28] sm:$0xf]
        %v536 = vld [vmem:[%s357 + $0x2c] sm:$0xf]
        %v537 = vld [vmem:[%s357 + $0x30] sm:$0xf]
        %v538 = vld [vmem:[%s357 + $0x34] sm:$0xf]
        %v539 = vld [vmem:[%s357 + $0x38] sm:$0x3]
        %v540 = vld [vmem:[%s357 + $0x3c] sm:$0xf]
        %v541 = vld [vmem:[%s357 + $0x40] sm:$0xf]
        %v542 = vld [vmem:[%s357 + $0x44] sm:$0xf]
        %v543 = vld [vmem:[%s357 + $0x48] sm:$0xf]
        %v544 = vld [vmem:[%s357 + $0x4c] sm:$0x3]
        %s545 = scalar_lea.vmem [#allocation2], 320
        %546 = vst.msk [vmem:[%s545] sm:$0xf] %vm443, %v525
        %547 = vst.msk [vmem:[%s545 + $0x4] sm:$0xf] %vm443, %v526
        %548 = vst.msk [vmem:[%s545 + $0x8] sm:$0xf] %vm443, %v527
        %549 = vst.msk [vmem:[%s545 + $0xc] sm:$0xf] %vm443, %v528
        %550 = vst.msk [vmem:[%s545 + $0x10] sm:$0x3] %vm448, %v529
        %551 = vst.msk [vmem:[%s545 + $0x14] sm:$0xf] %vm443, %v530
        %552 = vst.msk [vmem:[%s545 + $0x18] sm:$0xf] %vm443, %v531
        %553 = vst.msk [vmem:[%s545 + $0x1c] sm:$0xf] %vm443, %v532
        %554 = vst.msk [vmem:[%s545 + $0x20] sm:$0xf] %vm443, %v533
        %555 = vst.msk [vmem:[%s545 + $0x24] sm:$0x3] %vm448, %v534
        %556 = vst.msk [vmem:[%s545 + $0x28] sm:$0xf] %vm443, %v535
        %557 = vst.msk [vmem:[%s545 + $0x2c] sm:$0xf] %vm443, %v536
        %558 = vst.msk [vmem:[%s545 + $0x30] sm:$0xf] %vm443, %v537
        %559 = vst.msk [vmem:[%s545 + $0x34] sm:$0xf] %vm443, %v538
        %560 = vst.msk [vmem:[%s545 + $0x38] sm:$0x3] %vm448, %v539
        %561 = vst.msk [vmem:[%s545 + $0x3c] sm:$0xf] %vm443, %v540
        %562 = vst.msk [vmem:[%s545 + $0x40] sm:$0xf] %vm443, %v541
        %563 = vst.msk [vmem:[%s545 + $0x44] sm:$0xf] %vm443, %v542
        %564 = vst.msk [vmem:[%s545 + $0x48] sm:$0xf] %vm443, %v543
        %565 = vst.msk [vmem:[%s545 + $0x4c] sm:$0x3] %vm448, %v544
        %v566 = vld [vmem:[#allocation2] sm:$0xf]
        %v567 = vld [vmem:[#allocation2 + $0x4] sm:$0xf]
        %v568 = vld [vmem:[#allocation2 + $0x8] sm:$0xf]
        %v569 = vld [vmem:[#allocation2 + $0xc] sm:$0xf]
        %v570 = vld [vmem:[#allocation2 + $0x14] sm:$0xf]
        %v571 = vld [vmem:[#allocation2 + $0x18] sm:$0xf]
        %v572 = vld [vmem:[#allocation2 + $0x1c] sm:$0xf]
        %v573 = vld [vmem:[#allocation2 + $0x20] sm:$0xf]
        %v574 = vld [vmem:[#allocation2 + $0x28] sm:$0xf]
        %v575 = vld [vmem:[#allocation2 + $0x2c] sm:$0xf]
        %v576 = vld [vmem:[#allocation2 + $0x30] sm:$0xf]
        %v577 = vld [vmem:[#allocation2 + $0x34] sm:$0xf]
        %v578 = vld [vmem:[#allocation2 + $0x3c] sm:$0xf]
        %v579 = vld [vmem:[#allocation2 + $0x40] sm:$0xf]
        %v580 = vld [vmem:[#allocation2 + $0x44] sm:$0xf]
        %v581 = vld [vmem:[#allocation2 + $0x48] sm:$0xf]
        %v582 = vld [vmem:[#allocation2 + $0x50] sm:$0xf]
        %v583 = vld [vmem:[#allocation2 + $0x54] sm:$0xf]
        %v584 = vld [vmem:[#allocation2 + $0x58] sm:$0xf]
        %v585 = vld [vmem:[#allocation2 + $0x5c] sm:$0xf]
        %v586 = vld [vmem:[#allocation2 + $0x64] sm:$0xf]
        %v587 = vld [vmem:[#allocation2 + $0x68] sm:$0xf]
        %v588 = vld [vmem:[#allocation2 + $0x6c] sm:$0xf]
        %v589 = vld [vmem:[#allocation2 + $0x70] sm:$0xf]
        %v590 = vld [vmem:[#allocation2 + $0x78] sm:$0xf]
        %v591 = vld [vmem:[#allocation2 + $0x7c] sm:$0xf]
        %v592 = vld [vmem:[#allocation2 + $0x80] sm:$0xf]
        %v593 = vld [vmem:[#allocation2 + $0x84] sm:$0xf]
        %v594 = vld [vmem:[#allocation2 + $0x8c] sm:$0xf]
        %v595 = vld [vmem:[#allocation2 + $0x90] sm:$0xf]
        %v596 = vld [vmem:[#allocation2 + $0x94] sm:$0xf]
        %v597 = vld [vmem:[#allocation2 + $0x98] sm:$0xf]
        %v598 = vld [vmem:[#allocation2 + $0xa0] sm:$0xf]
        %v599 = vld [vmem:[#allocation2 + $0xa4] sm:$0xf]
        %v600 = vld [vmem:[#allocation2 + $0xa8] sm:$0xf]
        %v601 = vld [vmem:[#allocation2 + $0xac] sm:$0xf]
        %v602 = vld [vmem:[#allocation2 + $0xb4] sm:$0xf]
        %v603 = vld [vmem:[#allocation2 + $0xb8] sm:$0xf]
        %v604 = vld [vmem:[#allocation2 + $0xbc] sm:$0xf]
        %v605 = vld [vmem:[#allocation2 + $0xc0] sm:$0xf]
        %v606 = vld [vmem:[#allocation2 + $0xc8] sm:$0xf]
        %v607 = vld [vmem:[#allocation2 + $0xcc] sm:$0xf]
        %v608 = vld [vmem:[#allocation2 + $0xd0] sm:$0xf]
        %v609 = vld [vmem:[#allocation2 + $0xd4] sm:$0xf]
        %v610 = vld [vmem:[#allocation2 + $0xdc] sm:$0xf]
        %v611 = vld [vmem:[#allocation2 + $0xe0] sm:$0xf]
        %v612 = vld [vmem:[#allocation2 + $0xe4] sm:$0xf]
        %v613 = vld [vmem:[#allocation2 + $0xe8] sm:$0xf]
        %v614 = vld [vmem:[#allocation2 + $0xf0] sm:$0xf]
        %v615 = vld [vmem:[#allocation2 + $0xf4] sm:$0xf]
        %v616 = vld [vmem:[#allocation2 + $0xf8] sm:$0xf]
        %v617 = vld [vmem:[#allocation2 + $0xfc] sm:$0xf]
        %v618 = vld [vmem:[#allocation2 + $0x104] sm:$0xf]
        %v619 = vld [vmem:[#allocation2 + $0x108] sm:$0xf]
        %v620 = vld [vmem:[#allocation2 + $0x10c] sm:$0xf]
        %v621 = vld [vmem:[#allocation2 + $0x110] sm:$0xf]
        %v622 = vld [vmem:[#allocation2 + $0x118] sm:$0xf]
        %v623 = vld [vmem:[#allocation2 + $0x11c] sm:$0xf]
        %v624 = vld [vmem:[#allocation2 + $0x120] sm:$0xf]
        %v625 = vld [vmem:[#allocation2 + $0x124] sm:$0xf]
        %v626 = vld [vmem:[#allocation2 + $0x12c] sm:$0xf]
        %v627 = vld [vmem:[#allocation2 + $0x130] sm:$0xf]
        %v628 = vld [vmem:[#allocation2 + $0x134] sm:$0xf]
        %v629 = vld [vmem:[#allocation2 + $0x138] sm:$0xf]
        %v630 = vld [vmem:[#allocation2 + $0x140] sm:$0xf]
        %v631 = vld [vmem:[#allocation2 + $0x144] sm:$0xf]
        %v632 = vld [vmem:[#allocation2 + $0x148] sm:$0xf]
        %v633 = vld [vmem:[#allocation2 + $0x14c] sm:$0xf]
        %v634 = vld [vmem:[#allocation2 + $0x154] sm:$0xf]
        %v635 = vld [vmem:[#allocation2 + $0x158] sm:$0xf]
        %v636 = vld [vmem:[#allocation2 + $0x15c] sm:$0xf]
        %v637 = vld [vmem:[#allocation2 + $0x160] sm:$0xf]
        %v638 = vld [vmem:[#allocation2 + $0x168] sm:$0xf]
        %v639 = vld [vmem:[#allocation2 + $0x16c] sm:$0xf]
        %v640 = vld [vmem:[#allocation2 + $0x170] sm:$0xf]
        %v641 = vld [vmem:[#allocation2 + $0x174] sm:$0xf]
        %v642 = vld [vmem:[#allocation2 + $0x17c] sm:$0xf]
        %v643 = vld [vmem:[#allocation2 + $0x180] sm:$0xf]
        %v644 = vld [vmem:[#allocation2 + $0x184] sm:$0xf]
        %v645 = vld [vmem:[#allocation2 + $0x188] sm:$0xf]
        %v646 = vld [vmem:[#allocation2] sm:$0xe]
        %v647 = vld [vmem:[#allocation2 + $0x10] sm:$0x1]
        %v648 = vld [vmem:[#allocation2 + $0x14] sm:$0xe]
        %v649 = vld [vmem:[#allocation2 + $0x24] sm:$0x1]
        %v650 = vld [vmem:[#allocation2 + $0x28] sm:$0xe]
        %v651 = vld [vmem:[#allocation2 + $0x38] sm:$0x1]
        %v652 = vld [vmem:[#allocation2 + $0x3c] sm:$0xe]
        %v653 = vld [vmem:[#allocation2 + $0x4c] sm:$0x1]
        %v654 = vld [vmem:[#allocation2 + $0x50] sm:$0xe]
        %v655 = vld [vmem:[#allocation2 + $0x60] sm:$0x1]
        %v656 = vld [vmem:[#allocation2 + $0x64] sm:$0xe]
        %v657 = vld [vmem:[#allocation2 + $0x74] sm:$0x1]
        %v658 = vld [vmem:[#allocation2 + $0x78] sm:$0xe]
        %v659 = vld [vmem:[#allocation2 + $0x88] sm:$0x1]
        %v660 = vld [vmem:[#allocation2 + $0x8c] sm:$0xe]
        %v661 = vld [vmem:[#allocation2 + $0x9c] sm:$0x1]
        %v662 = vld [vmem:[#allocation2 + $0xa0] sm:$0xe]
        %v663 = vld [vmem:[#allocation2 + $0xb0] sm:$0x1]
        %v664 = vld [vmem:[#allocation2 + $0xb4] sm:$0xe]
        %v665 = vld [vmem:[#allocation2 + $0xc4] sm:$0x1]
        %v666 = vld [vmem:[#allocation2 + $0xc8] sm:$0xe]
        %v667 = vld [vmem:[#allocation2 + $0xd8] sm:$0x1]
        %v668 = vld [vmem:[#allocation2 + $0xdc] sm:$0xe]
        %v669 = vld [vmem:[#allocation2 + $0xec] sm:$0x1]
        %v670 = vld [vmem:[#allocation2 + $0xf0] sm:$0xe]
        %v671 = vld [vmem:[#allocation2 + $0x100] sm:$0x1]
        %v672 = vld [vmem:[#allocation2 + $0x104] sm:$0xe]
        %v673 = vld [vmem:[#allocation2 + $0x114] sm:$0x1]
        %v674 = vld [vmem:[#allocation2 + $0x118] sm:$0xe]
        %v675 = vld [vmem:[#allocation2 + $0x128] sm:$0x1]
        %v676 = vld [vmem:[#allocation2 + $0x12c] sm:$0xe]
        %v677 = vld [vmem:[#allocation2 + $0x13c] sm:$0x1]
        %v678 = vld [vmem:[#allocation2 + $0x140] sm:$0xe]
        %v679 = vld [vmem:[#allocation2 + $0x150] sm:$0x1]
        %v680 = vld [vmem:[#allocation2 + $0x154] sm:$0xe]
        %v681 = vld [vmem:[#allocation2 + $0x164] sm:$0x1]
        %v682 = vld [vmem:[#allocation2 + $0x168] sm:$0xe]
        %v683 = vld [vmem:[#allocation2 + $0x178] sm:$0x1]
        %v684 = vld [vmem:[#allocation2 + $0x17c] sm:$0xe]
        %v685 = vld [vmem:[#allocation2 + $0x18c] sm:$0x1]
        %v686 = vld [vmem:[#allocation2] sm:$0xc]
        %v687 = vld [vmem:[#allocation2 + $0x10] sm:$0x3]
        %v688 = vld [vmem:[#allocation2 + $0x14] sm:$0xc]
        %v689 = vld [vmem:[#allocation2 + $0x24] sm:$0x3]
        %v690 = vld [vmem:[#allocation2 + $0x28] sm:$0xc]
        %v691 = vld [vmem:[#allocation2 + $0x38] sm:$0x3]
        %v692 = vld [vmem:[#allocation2 + $0x3c] sm:$0xc]
        %v693 = vld [vmem:[#allocation2 + $0x4c] sm:$0x3]
        %v694 = vld [vmem:[#allocation2 + $0x50] sm:$0xc]
        %v695 = vld [vmem:[#allocation2 + $0x60] sm:$0x3]
        %v696 = vld [vmem:[#allocation2 + $0x64] sm:$0xc]
        %v697 = vld [vmem:[#allocation2 + $0x74] sm:$0x3]
        %v698 = vld [vmem:[#allocation2 + $0x78] sm:$0xc]
        %v699 = vld [vmem:[#allocation2 + $0x88] sm:$0x3]
        %v700 = vld [vmem:[#allocation2 + $0x8c] sm:$0xc]
        %v701 = vld [vmem:[#allocation2 + $0x9c] sm:$0x3]
        %v702 = vld [vmem:[#allocation2 + $0xa0] sm:$0xc]
        %v703 = vld [vmem:[#allocation2 + $0xb0] sm:$0x3]
        %v704 = vld [vmem:[#allocation2 + $0xb4] sm:$0xc]
        %v705 = vld [vmem:[#allocation2 + $0xc4] sm:$0x3]
        %v706 = vld [vmem:[#allocation2 + $0xc8] sm:$0xc]
        %v707 = vld [vmem:[#allocation2 + $0xd8] sm:$0x3]
        %v708 = vld [vmem:[#allocation2 + $0xdc] sm:$0xc]
        %v709 = vld [vmem:[#allocation2 + $0xec] sm:$0x3]
        %v710 = vld [vmem:[#allocation2 + $0xf0] sm:$0xc]
        %v711 = vld [vmem:[#allocation2 + $0x100] sm:$0x3]
        %v712 = vld [vmem:[#allocation2 + $0x104] sm:$0xc]
        %v713 = vld [vmem:[#allocation2 + $0x114] sm:$0x3]
        %v714 = vld [vmem:[#allocation2 + $0x118] sm:$0xc]
        %v715 = vld [vmem:[#allocation2 + $0x128] sm:$0x3]
        %v716 = vld [vmem:[#allocation2 + $0x12c] sm:$0xc]
        %v717 = vld [vmem:[#allocation2 + $0x13c] sm:$0x3]
        %v718 = vld [vmem:[#allocation2 + $0x140] sm:$0xc]
        %v719 = vld [vmem:[#allocation2 + $0x150] sm:$0x3]
        %v720 = vld [vmem:[#allocation2 + $0x154] sm:$0xc]
        %v721 = vld [vmem:[#allocation2 + $0x164] sm:$0x3]
        %v722 = vld [vmem:[#allocation2 + $0x168] sm:$0xc]
        %v723 = vld [vmem:[#allocation2 + $0x178] sm:$0x3]
        %v724 = vld [vmem:[#allocation2 + $0x17c] sm:$0xc]
        %v725 = vld [vmem:[#allocation2 + $0x18c] sm:$0x3]
        %v790 = vunpack.c.l.b16 %v566
        %v791 = vunpack.c.l.b16 %v567
        %v792 = vunpack.c.l.b16 %v568
        %v793 = vunpack.c.l.b16 %v569
        %v794 = vunpack.c.l.b16 %v570
        %v795 = vunpack.c.l.b16 %v571
        %v796 = vunpack.c.l.b16 %v572
        %v797 = vunpack.c.l.b16 %v573
        %v798 = vunpack.c.l.b16 %v574
        %v799 = vunpack.c.l.b16 %v575
        %v800 = vunpack.c.l.b16 %v576
        %v801 = vunpack.c.l.b16 %v577
        %v802 = vunpack.c.l.b16 %v578
        %v803 = vunpack.c.l.b16 %v579
        %v804 = vunpack.c.l.b16 %v580
        %v805 = vunpack.c.l.b16 %v581
        %v806 = vunpack.c.l.b16 %v582
        %v807 = vunpack.c.l.b16 %v583
        %v808 = vunpack.c.l.b16 %v584
        %v809 = vunpack.c.l.b16 %v585
        %v810 = vunpack.c.l.b16 %v586
        %v811 = vunpack.c.l.b16 %v587
        %v812 = vunpack.c.l.b16 %v588
        %v813 = vunpack.c.l.b16 %v589
        %v814 = vunpack.c.l.b16 %v590
        %v815 = vunpack.c.l.b16 %v591
        %v816 = vunpack.c.l.b16 %v592
        %v817 = vunpack.c.l.b16 %v593
        %v818 = vunpack.c.l.b16 %v594
        %v819 = vunpack.c.l.b16 %v595
        %v820 = vunpack.c.l.b16 %v596
        %v821 = vunpack.c.l.b16 %v597
        %v822 = vunpack.c.l.b16 %v598
        %v823 = vunpack.c.l.b16 %v599
        %v824 = vunpack.c.l.b16 %v600
        %v825 = vunpack.c.l.b16 %v601
        %v826 = vunpack.c.l.b16 %v602
        %v827 = vunpack.c.l.b16 %v603
        %v828 = vunpack.c.l.b16 %v604
        %v829 = vunpack.c.l.b16 %v605
        %v830 = vunpack.c.l.b16 %v606
        %v831 = vunpack.c.l.b16 %v607
        %v832 = vunpack.c.l.b16 %v608
        %v833 = vunpack.c.l.b16 %v609
        %v834 = vunpack.c.l.b16 %v610
        %v835 = vunpack.c.l.b16 %v611
        %v836 = vunpack.c.l.b16 %v612
        %v837 = vunpack.c.l.b16 %v613
        %v838 = vunpack.c.l.b16 %v614
        %v839 = vunpack.c.l.b16 %v615
        %v840 = vunpack.c.l.b16 %v616
        %v841 = vunpack.c.l.b16 %v617
        %v842 = vunpack.c.l.b16 %v618
        %v843 = vunpack.c.l.b16 %v619
        %v844 = vunpack.c.l.b16 %v620
        %v845 = vunpack.c.l.b16 %v621
        %v846 = vunpack.c.l.b16 %v622
        %v847 = vunpack.c.l.b16 %v623
        %v848 = vunpack.c.l.b16 %v624
        %v849 = vunpack.c.l.b16 %v625
        %v850 = vunpack.c.l.b16 %v626
        %v851 = vunpack.c.l.b16 %v627
        %v852 = vunpack.c.l.b16 %v628
        %v853 = vunpack.c.l.b16 %v629
        %v854 = vpack.c.b16 %v791, %v790
        %v855 = vpack.c.b16 %v793, %v792
        %v856 = vpack.c.b16 %v795, %v794
        %v857 = vpack.c.b16 %v797, %v796
        %v858 = vpack.c.b16 %v799, %v798
        %v859 = vpack.c.b16 %v801, %v800
        %v860 = vpack.c.b16 %v803, %v802
        %v861 = vpack.c.b16 %v805, %v804
        %v862 = vpack.c.b16 %v807, %v806
        %v863 = vpack.c.b16 %v809, %v808
        %v864 = vpack.c.b16 %v811, %v810
        %v865 = vpack.c.b16 %v813, %v812
        %v866 = vpack.c.b16 %v815, %v814
        %v867 = vpack.c.b16 %v817, %v816
        %v868 = vpack.c.b16 %v819, %v818
        %v869 = vpack.c.b16 %v821, %v820
        %v870 = vpack.c.b16 %v823, %v822
        %v871 = vpack.c.b16 %v825, %v824
        %v872 = vpack.c.b16 %v827, %v826
        %v873 = vpack.c.b16 %v829, %v828
        %v874 = vpack.c.b16 %v831, %v830
        %v875 = vpack.c.b16 %v833, %v832
        %v876 = vpack.c.b16 %v835, %v834
        %v877 = vpack.c.b16 %v837, %v836
        %v878 = vpack.c.b16 %v839, %v838
        %v879 = vpack.c.b16 %v841, %v840
        %v880 = vpack.c.b16 %v843, %v842
        %v881 = vpack.c.b16 %v845, %v844
        %v882 = vpack.c.b16 %v847, %v846
        %v883 = vpack.c.b16 %v849, %v848
        %v884 = vpack.c.b16 %v851, %v850
        %v885 = vpack.c.b16 %v853, %v852
        %v918 = vunpack.c.l.b16 %v646
        %v919 = vunpack.c.l.b16 %v647
        %v920 = vunpack.c.l.b16 %v648
        %v921 = vunpack.c.l.b16 %v649
        %v922 = vunpack.c.l.b16 %v650
        %v923 = vunpack.c.l.b16 %v651
        %v924 = vunpack.c.l.b16 %v652
        %v925 = vunpack.c.l.b16 %v653
        %v926 = vunpack.c.l.b16 %v654
        %v927 = vunpack.c.l.b16 %v655
        %v928 = vunpack.c.l.b16 %v656
        %v929 = vunpack.c.l.b16 %v657
        %v930 = vunpack.c.l.b16 %v658
        %v931 = vunpack.c.l.b16 %v659
        %v932 = vunpack.c.l.b16 %v660
        %v933 = vunpack.c.l.b16 %v661
        %v934 = vunpack.c.l.b16 %v662
        %v935 = vunpack.c.l.b16 %v663
        %v936 = vunpack.c.l.b16 %v664
        %v937 = vunpack.c.l.b16 %v665
        %v938 = vunpack.c.l.b16 %v666
        %v939 = vunpack.c.l.b16 %v667
        %v940 = vunpack.c.l.b16 %v668
        %v941 = vunpack.c.l.b16 %v669
        %v942 = vunpack.c.l.b16 %v670
        %v943 = vunpack.c.l.b16 %v671
        %v944 = vunpack.c.l.b16 %v672
        %v945 = vunpack.c.l.b16 %v673
        %v946 = vunpack.c.l.b16 %v674
        %v947 = vunpack.c.l.b16 %v675
        %v948 = vunpack.c.l.b16 %v676
        %v949 = vunpack.c.l.b16 %v677
        %v950 = vpack.c.b16 %v791, %v918
        %v951 = vpack.c.b16 %v919, %v919
        %v952 = vpack.c.b16 %v795, %v920
        %v953 = vpack.c.b16 %v921, %v921
        %v954 = vpack.c.b16 %v799, %v922
        %v955 = vpack.c.b16 %v923, %v923
        %v956 = vpack.c.b16 %v803, %v924
        %v957 = vpack.c.b16 %v925, %v925
        %v958 = vpack.c.b16 %v807, %v926
        %v959 = vpack.c.b16 %v927, %v927
        %v960 = vpack.c.b16 %v811, %v928
        %v961 = vpack.c.b16 %v929, %v929
        %v962 = vpack.c.b16 %v815, %v930
        %v963 = vpack.c.b16 %v931, %v931
        %v964 = vpack.c.b16 %v819, %v932
        %v965 = vpack.c.b16 %v933, %v933
        %v966 = vpack.c.b16 %v823, %v934
        %v967 = vpack.c.b16 %v935, %v935
        %v968 = vpack.c.b16 %v827, %v936
        %v969 = vpack.c.b16 %v937, %v937
        %v970 = vpack.c.b16 %v831, %v938
        %v971 = vpack.c.b16 %v939, %v939
        %v972 = vpack.c.b16 %v835, %v940
        %v973 = vpack.c.b16 %v941, %v941
        %v974 = vpack.c.b16 %v839, %v942
        %v975 = vpack.c.b16 %v943, %v943
        %v976 = vpack.c.b16 %v843, %v944
        %v977 = vpack.c.b16 %v945, %v945
        %v978 = vpack.c.b16 %v847, %v946
        %v979 = vpack.c.b16 %v947, %v947
        %v980 = vpack.c.b16 %v851, %v948
        %v981 = vpack.c.b16 %v949, %v949
        %vm982 = vcmask 1046528
        %v983 = vrot.slane %v950, 1
        %v984 = vrot.slane %v855, 1
        %v985 = vsel %vm982, %v983, %v984
        %v986 = vrot.slane %v951, 1
        %v987 = vsel %vm982, %v984, %v986
        %v988 = vrot.slane %v952, 1
        %v989 = vrot.slane %v857, 1
        %v990 = vsel %vm982, %v988, %v989
        %v991 = vrot.slane %v953, 1
        %v992 = vsel %vm982, %v989, %v991
        %v993 = vrot.slane %v954, 1
        %v994 = vrot.slane %v859, 1
        %v995 = vsel %vm982, %v993, %v994
        %v996 = vrot.slane %v955, 1
        %v997 = vsel %vm982, %v994, %v996
        %v998 = vrot.slane %v956, 1
        %v999 = vrot.slane %v861, 1
        %v1000 = vsel %vm982, %v998, %v999
        %v1001 = vrot.slane %v957, 1
        %v1002 = vsel %vm982, %v999, %v1001
        %v1003 = vrot.slane %v958, 1
        %v1004 = vrot.slane %v863, 1
        %v1005 = vsel %vm982, %v1003, %v1004
        %v1006 = vrot.slane %v959, 1
        %v1007 = vsel %vm982, %v1004, %v1006
        %v1008 = vrot.slane %v960, 1
        %v1009 = vrot.slane %v865, 1
        %v1010 = vsel %vm982, %v1008, %v1009
        %v1011 = vrot.slane %v961, 1
        %v1012 = vsel %vm982, %v1009, %v1011
        %v1013 = vrot.slane %v962, 1
        %v1014 = vrot.slane %v867, 1
        %v1015 = vsel %vm982, %v1013, %v1014
        %v1016 = vrot.slane %v963, 1
        %v1017 = vsel %vm982, %v1014, %v1016
        %v1018 = vrot.slane %v964, 1
        %v1019 = vrot.slane %v869, 1
        %v1020 = vsel %vm982, %v1018, %v1019
        %v1021 = vrot.slane %v965, 1
        %v1022 = vsel %vm982, %v1019, %v1021
        %v1023 = vrot.slane %v966, 1
        %v1024 = vrot.slane %v871, 1
        %v1025 = vsel %vm982, %v1023, %v1024
        %v1026 = vrot.slane %v967, 1
        %v1027 = vsel %vm982, %v1024, %v1026
        %v1028 = vrot.slane %v968, 1
        %v1029 = vrot.slane %v873, 1
        %v1030 = vsel %vm982, %v1028, %v1029
        %v1031 = vrot.slane %v969, 1
        %v1032 = vsel %vm982, %v1029, %v1031
        %v1033 = vrot.slane %v970, 1
        %v1034 = vrot.slane %v875, 1
        %v1035 = vsel %vm982, %v1033, %v1034
        %v1036 = vrot.slane %v971, 1
        %v1037 = vsel %vm982, %v1034, %v1036
        %v1038 = vrot.slane %v972, 1
        %v1039 = vrot.slane %v877, 1
        %v1040 = vsel %vm982, %v1038, %v1039
        %v1041 = vrot.slane %v973, 1
        %v1042 = vsel %vm982, %v1039, %v1041
        %v1043 = vrot.slane %v974, 1
        %v1044 = vrot.slane %v879, 1
        %v1045 = vsel %vm982, %v1043, %v1044
        %v1046 = vrot.slane %v975, 1
        %v1047 = vsel %vm982, %v1044, %v1046
        %v1048 = vrot.slane %v976, 1
        %v1049 = vrot.slane %v881, 1
        %v1050 = vsel %vm982, %v1048, %v1049
        %v1051 = vrot.slane %v977, 1
        %v1052 = vsel %vm982, %v1049, %v1051
        %v1053 = vrot.slane %v978, 1
        %v1054 = vrot.slane %v883, 1
        %v1055 = vsel %vm982, %v1053, %v1054
        %v1056 = vrot.slane %v979, 1
        %v1057 = vsel %vm982, %v1054, %v1056
        %v1058 = vrot.slane %v980, 1
        %v1059 = vrot.slane %v885, 1
        %v1060 = vsel %vm982, %v1058, %v1059
        %v1061 = vrot.slane %v981, 1
        %v1062 = vsel %vm982, %v1059, %v1061
        %1063 = vrot.lane.b32.xlu0 %v985, 64
        %v1064 = vpop.permute.xlu0 %1063
        %1065 = vrot.lane.b32.xlu0 %v987, 64
        %v1066 = vpop.permute.xlu0 %1065
        %1067 = vrot.lane.b32.xlu0 %v990, 64
        %v1068 = vpop.permute.xlu0 %1067
        %1069 = vrot.lane.b32.xlu0 %v992, 64
        %v1070 = vpop.permute.xlu0 %1069
        %1071 = vrot.lane.b32.xlu0 %v995, 64
        %v1072 = vpop.permute.xlu0 %1071
        %1073 = vrot.lane.b32.xlu0 %v997, 64
        %v1074 = vpop.permute.xlu0 %1073
        %1075 = vrot.lane.b32.xlu0 %v1000, 64
        %v1076 = vpop.permute.xlu0 %1075
        %1077 = vrot.lane.b32.xlu0 %v1002, 64
        %v1078 = vpop.permute.xlu0 %1077
        %1079 = vrot.lane.b32.xlu0 %v1005, 64
        %v1080 = vpop.permute.xlu0 %1079
        %1081 = vrot.lane.b32.xlu0 %v1007, 64
        %v1082 = vpop.permute.xlu0 %1081
        %1083 = vrot.lane.b32.xlu0 %v1010, 64
        %v1084 = vpop.permute.xlu0 %1083
        %1085 = vrot.lane.b32.xlu0 %v1012, 64
        %v1086 = vpop.permute.xlu0 %1085
        %1087 = vrot.lane.b32.xlu0 %v1015, 64
        %v1088 = vpop.permute.xlu0 %1087
        %1089 = vrot.lane.b32.xlu0 %v1017, 64
        %v1090 = vpop.permute.xlu0 %1089
        %1091 = vrot.lane.b32.xlu0 %v1020, 64
        %v1092 = vpop.permute.xlu0 %1091
        %1093 = vrot.lane.b32.xlu0 %v1022, 64
        %v1094 = vpop.permute.xlu0 %1093
        %1095 = vrot.lane.b32.xlu0 %v1025, 64
        %v1096 = vpop.permute.xlu0 %1095
        %1097 = vrot.lane.b32.xlu0 %v1027, 64
        %v1098 = vpop.permute.xlu0 %1097
        %1099 = vrot.lane.b32.xlu0 %v1030, 64
        %v1100 = vpop.permute.xlu0 %1099
        %1101 = vrot.lane.b32.xlu0 %v1032, 64
        %v1102 = vpop.permute.xlu0 %1101
        %1103 = vrot.lane.b32.xlu0 %v1035, 64
        %v1104 = vpop.permute.xlu0 %1103
        %1105 = vrot.lane.b32.xlu0 %v1037, 64
        %v1106 = vpop.permute.xlu0 %1105
        %1107 = vrot.lane.b32.xlu0 %v1040, 64
        %v1108 = vpop.permute.xlu0 %1107
        %1109 = vrot.lane.b32.xlu0 %v1042, 64
        %v1110 = vpop.permute.xlu0 %1109
        %1111 = vrot.lane.b32.xlu0 %v1045, 64
        %v1112 = vpop.permute.xlu0 %1111
        %1113 = vrot.lane.b32.xlu0 %v1047, 64
        %v1114 = vpop.permute.xlu0 %1113
        %1115 = vrot.lane.b32.xlu0 %v1050, 64
        %v1116 = vpop.permute.xlu0 %1115
        %1117 = vrot.lane.b32.xlu0 %v1052, 64
        %v1118 = vpop.permute.xlu0 %1117
        %1119 = vrot.lane.b32.xlu0 %v1055, 64
        %v1120 = vpop.permute.xlu0 %1119
        %1121 = vrot.lane.b32.xlu0 %v1057, 64
        %v1122 = vpop.permute.xlu0 %1121
        %1123 = vrot.lane.b32.xlu0 %v1060, 64
        %v1124 = vpop.permute.xlu0 %1123
        %1125 = vrot.lane.b32.xlu0 %v1062, 64
        %v1126 = vpop.permute.xlu0 %1125
        %v1159 = vunpack.c.l.b16 %v686
        %v1160 = vunpack.c.l.b16 %v687
        %v1161 = vunpack.c.l.b16 %v688
        %v1162 = vunpack.c.l.b16 %v689
        %v1163 = vunpack.c.l.b16 %v690
        %v1164 = vunpack.c.l.b16 %v691
        %v1165 = vunpack.c.l.b16 %v692
        %v1166 = vunpack.c.l.b16 %v693
        %v1167 = vunpack.c.l.b16 %v694
        %v1168 = vunpack.c.l.b16 %v695
        %v1169 = vunpack.c.l.b16 %v696
        %v1170 = vunpack.c.l.b16 %v697
        %v1171 = vunpack.c.l.b16 %v698
        %v1172 = vunpack.c.l.b16 %v699
        %v1173 = vunpack.c.l.b16 %v700
        %v1174 = vunpack.c.l.b16 %v701
        %v1175 = vunpack.c.l.b16 %v702
        %v1176 = vunpack.c.l.b16 %v703
        %v1177 = vunpack.c.l.b16 %v704
        %v1178 = vunpack.c.l.b16 %v705
        %v1179 = vunpack.c.l.b16 %v706
        %v1180 = vunpack.c.l.b16 %v707
        %v1181 = vunpack.c.l.b16 %v708
        %v1182 = vunpack.c.l.b16 %v709
        %v1183 = vunpack.c.l.b16 %v710
        %v1184 = vunpack.c.l.b16 %v711
        %v1185 = vunpack.c.l.b16 %v712
        %v1186 = vunpack.c.l.b16 %v713
        %v1187 = vunpack.c.l.b16 %v714
        %v1188 = vunpack.c.l.b16 %v715
        %v1189 = vunpack.c.l.b16 %v716
        %v1190 = vunpack.c.l.b16 %v717
        %v1191 = vpack.c.b16 %v791, %v1159
        %v1192 = vpack.c.b16 %v1160, %v1160
        %v1193 = vpack.c.b16 %v795, %v1161
        %v1194 = vpack.c.b16 %v1162, %v1162
        %v1195 = vpack.c.b16 %v799, %v1163
        %v1196 = vpack.c.b16 %v1164, %v1164
        %v1197 = vpack.c.b16 %v803, %v1165
        %v1198 = vpack.c.b16 %v1166, %v1166
        %v1199 = vpack.c.b16 %v807, %v1167
        %v1200 = vpack.c.b16 %v1168, %v1168
        %v1201 = vpack.c.b16 %v811, %v1169
        %v1202 = vpack.c.b16 %v1170, %v1170
        %v1203 = vpack.c.b16 %v815, %v1171
        %v1204 = vpack.c.b16 %v1172, %v1172
        %v1205 = vpack.c.b16 %v819, %v1173
        %v1206 = vpack.c.b16 %v1174, %v1174
        %v1207 = vpack.c.b16 %v823, %v1175
        %v1208 = vpack.c.b16 %v1176, %v1176
        %v1209 = vpack.c.b16 %v827, %v1177
        %v1210 = vpack.c.b16 %v1178, %v1178
        %v1211 = vpack.c.b16 %v831, %v1179
        %v1212 = vpack.c.b16 %v1180, %v1180
        %v1213 = vpack.c.b16 %v835, %v1181
        %v1214 = vpack.c.b16 %v1182, %v1182
        %v1215 = vpack.c.b16 %v839, %v1183
        %v1216 = vpack.c.b16 %v1184, %v1184
        %v1217 = vpack.c.b16 %v843, %v1185
        %v1218 = vpack.c.b16 %v1186, %v1186
        %v1219 = vpack.c.b16 %v847, %v1187
        %v1220 = vpack.c.b16 %v1188, %v1188
        %v1221 = vpack.c.b16 %v851, %v1189
        %v1222 = vpack.c.b16 %v1190, %v1190
        %vm1223 = vcmask 1045504
        %v1224 = vrot.slane %v1191, 2
        %v1225 = vrot.slane %v855, 2
        %v1226 = vsel %vm1223, %v1224, %v1225
        %v1227 = vrot.slane %v1192, 2
        %v1228 = vsel %vm1223, %v1225, %v1227
        %v1229 = vrot.slane %v1193, 2
        %v1230 = vrot.slane %v857, 2
        %v1231 = vsel %vm1223, %v1229, %v1230
        %v1232 = vrot.slane %v1194, 2
        %v1233 = vsel %vm1223, %v1230, %v1232
        %v1234 = vrot.slane %v1195, 2
        %v1235 = vrot.slane %v859, 2
        %v1236 = vsel %vm1223, %v1234, %v1235
        %v1237 = vrot.slane %v1196, 2
        %v1238 = vsel %vm1223, %v1235, %v1237
        %v1239 = vrot.slane %v1197, 2
        %v1240 = vrot.slane %v861, 2
        %v1241 = vsel %vm1223, %v1239, %v1240
        %v1242 = vrot.slane %v1198, 2
        %v1243 = vsel %vm1223, %v1240, %v1242
        %v1244 = vrot.slane %v1199, 2
        %v1245 = vrot.slane %v863, 2
        %v1246 = vsel %vm1223, %v1244, %v1245
        %v1247 = vrot.slane %v1200, 2
        %v1248 = vsel %vm1223, %v1245, %v1247
        %v1249 = vrot.slane %v1201, 2
        %v1250 = vrot.slane %v865, 2
        %v1251 = vsel %vm1223, %v1249, %v1250
        %v1252 = vrot.slane %v1202, 2
        %v1253 = vsel %vm1223, %v1250, %v1252
        %v1254 = vrot.slane %v1203, 2
        %v1255 = vrot.slane %v867, 2
        %v1256 = vsel %vm1223, %v1254, %v1255
        %v1257 = vrot.slane %v1204, 2
        %v1258 = vsel %vm1223, %v1255, %v1257
        %v1259 = vrot.slane %v1205, 2
        %v1260 = vrot.slane %v869, 2
        %v1261 = vsel %vm1223, %v1259, %v1260
        %v1262 = vrot.slane %v1206, 2
        %v1263 = vsel %vm1223, %v1260, %v1262
        %v1264 = vrot.slane %v1207, 2
        %v1265 = vrot.slane %v871, 2
        %v1266 = vsel %vm1223, %v1264, %v1265
        %v1267 = vrot.slane %v1208, 2
        %v1268 = vsel %vm1223, %v1265, %v1267
        %v1269 = vrot.slane %v1209, 2
        %v1270 = vrot.slane %v873, 2
        %v1271 = vsel %vm1223, %v1269, %v1270
        %v1272 = vrot.slane %v1210, 2
        %v1273 = vsel %vm1223, %v1270, %v1272
        %v1274 = vrot.slane %v1211, 2
        %v1275 = vrot.slane %v875, 2
        %v1276 = vsel %vm1223, %v1274, %v1275
        %v1277 = vrot.slane %v1212, 2
        %v1278 = vsel %vm1223, %v1275, %v1277
        %v1279 = vrot.slane %v1213, 2
        %v1280 = vrot.slane %v877, 2
        %v1281 = vsel %vm1223, %v1279, %v1280
        %v1282 = vrot.slane %v1214, 2
        %v1283 = vsel %vm1223, %v1280, %v1282
        %v1284 = vrot.slane %v1215, 2
        %v1285 = vrot.slane %v879, 2
        %v1286 = vsel %vm1223, %v1284, %v1285
        %v1287 = vrot.slane %v1216, 2
        %v1288 = vsel %vm1223, %v1285, %v1287
        %v1289 = vrot.slane %v1217, 2
        %v1290 = vrot.slane %v881, 2
        %v1291 = vsel %vm1223, %v1289, %v1290
        %v1292 = vrot.slane %v1218, 2
        %v1293 = vsel %vm1223, %v1290, %v1292
        %v1294 = vrot.slane %v1219, 2
        %v1295 = vrot.slane %v883, 2
        %v1296 = vsel %vm1223, %v1294, %v1295
        %v1297 = vrot.slane %v1220, 2
        %v1298 = vsel %vm1223, %v1295, %v1297
        %v1299 = vrot.slane %v1221, 2
        %v1300 = vrot.slane %v885, 2
        %v1301 = vsel %vm1223, %v1299, %v1300
        %v1302 = vrot.slane %v1222, 2
        %v1303 = vsel %vm1223, %v1300, %v1302
        %v1312 = vunpack.c.l.b16 %v630
        %v1313 = vunpack.c.l.b16 %v631
        %v1314 = vunpack.c.l.b16 %v632
        %v1315 = vunpack.c.l.b16 %v633
        %v1316 = vunpack.c.l.b16 %v634
        %v1317 = vunpack.c.l.b16 %v635
        %v1318 = vunpack.c.l.b16 %v636
        %v1319 = vunpack.c.l.b16 %v637
        %v1320 = vpack.c.b16 %v1313, %v1312
        %v1321 = vpack.c.b16 %v1315, %v1314
        %v1322 = vpack.c.b16 %v1317, %v1316
        %v1323 = vpack.c.b16 %v1319, %v1318
        %1324 = vrot.lane.b32.xlu0 %v858, 64
        %v1325 = vpop.permute.xlu0 %1324
        %1326 = vrot.lane.b32.xlu0 %v859, 64
        %v1327 = vpop.permute.xlu0 %1326
        %1328 = vrot.lane.b32.xlu0 %v860, 64
        %v1329 = vpop.permute.xlu0 %1328
        %1330 = vrot.lane.b32.xlu0 %v861, 64
        %v1331 = vpop.permute.xlu0 %1330
        %1332 = vrot.lane.b32.xlu0 %v862, 64
        %v1333 = vpop.permute.xlu0 %1332
        %1334 = vrot.lane.b32.xlu0 %v863, 64
        %v1335 = vpop.permute.xlu0 %1334
        %1336 = vrot.lane.b32.xlu0 %v864, 64
        %v1337 = vpop.permute.xlu0 %1336
        %1338 = vrot.lane.b32.xlu0 %v865, 64
        %v1339 = vpop.permute.xlu0 %1338
        %1340 = vrot.lane.b32.xlu0 %v866, 64
        %v1341 = vpop.permute.xlu0 %1340
        %1342 = vrot.lane.b32.xlu0 %v867, 64
        %v1343 = vpop.permute.xlu0 %1342
        %1344 = vrot.lane.b32.xlu0 %v868, 64
        %v1345 = vpop.permute.xlu0 %1344
        %1346 = vrot.lane.b32.xlu0 %v869, 64
        %v1347 = vpop.permute.xlu0 %1346
        %1348 = vrot.lane.b32.xlu0 %v870, 64
        %v1349 = vpop.permute.xlu0 %1348
        %1350 = vrot.lane.b32.xlu0 %v871, 64
        %v1351 = vpop.permute.xlu0 %1350
        %1352 = vrot.lane.b32.xlu0 %v872, 64
        %v1353 = vpop.permute.xlu0 %1352
        %1354 = vrot.lane.b32.xlu0 %v873, 64
        %v1355 = vpop.permute.xlu0 %1354
        %1356 = vrot.lane.b32.xlu0 %v874, 64
        %v1357 = vpop.permute.xlu0 %1356
        %1358 = vrot.lane.b32.xlu0 %v875, 64
        %v1359 = vpop.permute.xlu0 %1358
        %1360 = vrot.lane.b32.xlu0 %v876, 64
        %v1361 = vpop.permute.xlu0 %1360
        %1362 = vrot.lane.b32.xlu0 %v877, 64
        %v1363 = vpop.permute.xlu0 %1362
        %1364 = vrot.lane.b32.xlu0 %v878, 64
        %v1365 = vpop.permute.xlu0 %1364
        %1366 = vrot.lane.b32.xlu0 %v879, 64
        %v1367 = vpop.permute.xlu0 %1366
        %1368 = vrot.lane.b32.xlu0 %v880, 64
        %v1369 = vpop.permute.xlu0 %1368
        %1370 = vrot.lane.b32.xlu0 %v881, 64
        %v1371 = vpop.permute.xlu0 %1370
        %1372 = vrot.lane.b32.xlu0 %v882, 64
        %v1373 = vpop.permute.xlu0 %1372
        %1374 = vrot.lane.b32.xlu0 %v883, 64
        %v1375 = vpop.permute.xlu0 %1374
        %1376 = vrot.lane.b32.xlu0 %v884, 64
        %v1377 = vpop.permute.xlu0 %1376
        %1378 = vrot.lane.b32.xlu0 %v885, 64
        %v1379 = vpop.permute.xlu0 %1378
        %1380 = vrot.lane.b32.xlu0 %v1320, 64
        %v1381 = vpop.permute.xlu0 %1380
        %1382 = vrot.lane.b32.xlu0 %v1321, 64
        %v1383 = vpop.permute.xlu0 %1382
        %1384 = vrot.lane.b32.xlu0 %v1322, 64
        %v1385 = vpop.permute.xlu0 %1384
        %1386 = vrot.lane.b32.xlu0 %v1323, 64
        %v1387 = vpop.permute.xlu0 %1386
        %v1392 = vunpack.c.l.b16 %v678
        %v1393 = vunpack.c.l.b16 %v679
        %v1394 = vunpack.c.l.b16 %v680
        %v1395 = vunpack.c.l.b16 %v681
        %v1396 = vpack.c.b16 %v1313, %v1392
        %v1397 = vpack.c.b16 %v1393, %v1393
        %v1398 = vpack.c.b16 %v1317, %v1394
        %v1399 = vpack.c.b16 %v1395, %v1395
        %v1400 = vrot.slane %v1396, 1
        %v1401 = vrot.slane %v1321, 1
        %v1402 = vsel %vm982, %v1400, %v1401
        %v1403 = vrot.slane %v1397, 1
        %v1404 = vsel %vm982, %v1401, %v1403
        %v1405 = vrot.slane %v1398, 1
        %v1406 = vrot.slane %v1323, 1
        %v1407 = vsel %vm982, %v1405, %v1406
        %v1408 = vrot.slane %v1399, 1
        %v1409 = vsel %vm982, %v1406, %v1408
        %v1414 = vunpack.c.l.b16 %v718
        %v1415 = vunpack.c.l.b16 %v719
        %v1416 = vunpack.c.l.b16 %v720
        %v1417 = vunpack.c.l.b16 %v721
        %v1418 = vpack.c.b16 %v1313, %v1414
        %v1419 = vpack.c.b16 %v1415, %v1415
        %v1420 = vpack.c.b16 %v1317, %v1416
        %v1421 = vpack.c.b16 %v1417, %v1417
        %v1422 = vrot.slane %v1418, 2
        %v1423 = vrot.slane %v1321, 2
        %v1424 = vsel %vm1223, %v1422, %v1423
        %v1425 = vrot.slane %v1419, 2
        %v1426 = vsel %vm1223, %v1423, %v1425
        %v1427 = vrot.slane %v1420, 2
        %v1428 = vrot.slane %v1323, 2
        %v1429 = vsel %vm1223, %v1427, %v1428
        %v1430 = vrot.slane %v1421, 2
        %v1431 = vsel %vm1223, %v1428, %v1430
        %1432 = vrot.lane.b32.xlu0 %v1236, 64
        %v1433 = vpop.permute.xlu0 %1432
        %1434 = vrot.lane.b32.xlu0 %v1238, 64
        %v1435 = vpop.permute.xlu0 %1434
        %1436 = vrot.lane.b32.xlu0 %v1241, 64
        %v1437 = vpop.permute.xlu0 %1436
        %1438 = vrot.lane.b32.xlu0 %v1243, 64
        %v1439 = vpop.permute.xlu0 %1438
        %1440 = vrot.lane.b32.xlu0 %v1246, 64
        %v1441 = vpop.permute.xlu0 %1440
        %1442 = vrot.lane.b32.xlu0 %v1248, 64
        %v1443 = vpop.permute.xlu0 %1442
        %1444 = vrot.lane.b32.xlu0 %v1251, 64
        %v1445 = vpop.permute.xlu0 %1444
        %1446 = vrot.lane.b32.xlu0 %v1253, 64
        %v1447 = vpop.permute.xlu0 %1446
        %1448 = vrot.lane.b32.xlu0 %v1256, 64
        %v1449 = vpop.permute.xlu0 %1448
        %1450 = vrot.lane.b32.xlu0 %v1258, 64
        %v1451 = vpop.permute.xlu0 %1450
        %1452 = vrot.lane.b32.xlu0 %v1261, 64
        %v1453 = vpop.permute.xlu0 %1452
        %1454 = vrot.lane.b32.xlu0 %v1263, 64
        %v1455 = vpop.permute.xlu0 %1454
        %1456 = vrot.lane.b32.xlu0 %v1266, 64
        %v1457 = vpop.permute.xlu0 %1456
        %1458 = vrot.lane.b32.xlu0 %v1268, 64
        %v1459 = vpop.permute.xlu0 %1458
        %1460 = vrot.lane.b32.xlu0 %v1271, 64
        %v1461 = vpop.permute.xlu0 %1460
        %1462 = vrot.lane.b32.xlu0 %v1273, 64
        %v1463 = vpop.permute.xlu0 %1462
        %1464 = vrot.lane.b32.xlu0 %v1276, 64
        %v1465 = vpop.permute.xlu0 %1464
        %1466 = vrot.lane.b32.xlu0 %v1278, 64
        %v1467 = vpop.permute.xlu0 %1466
        %1468 = vrot.lane.b32.xlu0 %v1281, 64
        %v1469 = vpop.permute.xlu0 %1468
        %1470 = vrot.lane.b32.xlu0 %v1283, 64
        %v1471 = vpop.permute.xlu0 %1470
        %1472 = vrot.lane.b32.xlu0 %v1286, 64
        %v1473 = vpop.permute.xlu0 %1472
        %1474 = vrot.lane.b32.xlu0 %v1288, 64
        %v1475 = vpop.permute.xlu0 %1474
        %1476 = vrot.lane.b32.xlu0 %v1291, 64
        %v1477 = vpop.permute.xlu0 %1476
        %1478 = vrot.lane.b32.xlu0 %v1293, 64
        %v1479 = vpop.permute.xlu0 %1478
        %1480 = vrot.lane.b32.xlu0 %v1296, 64
        %v1481 = vpop.permute.xlu0 %1480
        %1482 = vrot.lane.b32.xlu0 %v1298, 64
        %v1483 = vpop.permute.xlu0 %1482
        %1484 = vrot.lane.b32.xlu0 %v1301, 64
        %v1485 = vpop.permute.xlu0 %1484
        %1486 = vrot.lane.b32.xlu0 %v1303, 64
        %v1487 = vpop.permute.xlu0 %1486
        %1488 = vrot.lane.b32.xlu0 %v1424, 64
        %v1489 = vpop.permute.xlu0 %1488
        %1490 = vrot.lane.b32.xlu0 %v1426, 64
        %v1491 = vpop.permute.xlu0 %1490
        %1492 = vrot.lane.b32.xlu0 %v1429, 64
        %v1493 = vpop.permute.xlu0 %1492
        %1494 = vrot.lane.b32.xlu0 %v1431, 64
        %v1495 = vpop.permute.xlu0 %1494
        %v1504 = vunpack.c.l.b16 %v638
        %v1505 = vunpack.c.l.b16 %v639
        %v1506 = vunpack.c.l.b16 %v640
        %v1507 = vunpack.c.l.b16 %v641
        %v1508 = vunpack.c.l.b16 %v642
        %v1509 = vunpack.c.l.b16 %v643
        %v1510 = vunpack.c.l.b16 %v644
        %v1511 = vunpack.c.l.b16 %v645
        %v1512 = vpack.c.b16 %v1505, %v1504
        %v1513 = vpack.c.b16 %v1507, %v1506
        %v1514 = vpack.c.b16 %v1509, %v1508
        %v1515 = vpack.c.b16 %v1511, %v1510
        %v1520 = vunpack.c.l.b16 %v682
        %v1521 = vunpack.c.l.b16 %v683
        %v1522 = vunpack.c.l.b16 %v684
        %v1523 = vunpack.c.l.b16 %v685
        %v1524 = vpack.c.b16 %v1505, %v1520
        %v1525 = vpack.c.b16 %v1521, %v1521
        %v1526 = vpack.c.b16 %v1509, %v1522
        %v1527 = vpack.c.b16 %v1523, %v1523
        %v1528 = vrot.slane %v1524, 1
        %v1529 = vrot.slane %v1513, 1
        %v1530 = vsel %vm982, %v1528, %v1529
        %v1531 = vrot.slane %v1525, 1
        %v1532 = vsel %vm982, %v1529, %v1531
        %v1533 = vrot.slane %v1526, 1
        %v1534 = vrot.slane %v1515, 1
        %v1535 = vsel %vm982, %v1533, %v1534
        %v1536 = vrot.slane %v1527, 1
        %v1537 = vsel %vm982, %v1534, %v1536
        %1538 = vrot.lane.b32.xlu0 %v1402, 64
        %v1539 = vpop.permute.xlu0 %1538
        %1540 = vrot.lane.b32.xlu0 %v1404, 64
        %v1541 = vpop.permute.xlu0 %1540
        %1542 = vrot.lane.b32.xlu0 %v1407, 64
        %v1543 = vpop.permute.xlu0 %1542
        %1544 = vrot.lane.b32.xlu0 %v1409, 64
        %v1545 = vpop.permute.xlu0 %1544
        %1546 = vrot.lane.b32.xlu0 %v1530, 64
        %v1547 = vpop.permute.xlu0 %1546
        %1548 = vrot.lane.b32.xlu0 %v1532, 64
        %v1549 = vpop.permute.xlu0 %1548
        %1550 = vrot.lane.b32.xlu0 %v1535, 64
        %v1551 = vpop.permute.xlu0 %1550
        %1552 = vrot.lane.b32.xlu0 %v1537, 64
        %v1553 = vpop.permute.xlu0 %1552
        %v1558 = vunpack.c.l.b16 %v722
        %v1559 = vunpack.c.l.b16 %v723
        %v1560 = vunpack.c.l.b16 %v724
        %v1561 = vunpack.c.l.b16 %v725
        %v1562 = vpack.c.b16 %v1505, %v1558
        %v1563 = vpack.c.b16 %v1559, %v1559
        %v1564 = vpack.c.b16 %v1509, %v1560
        %v1565 = vpack.c.b16 %v1561, %v1561
        %v1566 = vrot.slane %v1562, 2
        %v1567 = vrot.slane %v1513, 2
        %v1568 = vsel %vm1223, %v1566, %v1567
        %v1569 = vrot.slane %v1563, 2
        %v1570 = vsel %vm1223, %v1567, %v1569
        %v1571 = vrot.slane %v1564, 2
        %v1572 = vrot.slane %v1515, 2
        %v1573 = vsel %vm1223, %v1571, %v1572
        %v1574 = vrot.slane %v1565, 2
        %v1575 = vsel %vm1223, %v1572, %v1574
        %vm1576 = vcmask 523264
        %v1579 = vsel %vm1576, %v854, %v1064
        %v1583 = vsel %vm1576, %v855, %v1066
        %v1587 = vsel %vm1576, %v856, %v1068
        %v1591 = vsel %vm1576, %v857, %v1070
        %v1595 = vsel %vm1576, %v858, %v1072
        %v1599 = vsel %vm1576, %v859, %v1074
        %v1603 = vsel %vm1576, %v860, %v1076
        %v1607 = vsel %vm1576, %v861, %v1078
        %v1611 = vsel %vm1576, %v862, %v1080
        %v1615 = vsel %vm1576, %v863, %v1082
        %v1619 = vsel %vm1576, %v864, %v1084
        %v1623 = vsel %vm1576, %v865, %v1086
        %v1627 = vsel %vm1576, %v866, %v1088
        %v1631 = vsel %vm1576, %v867, %v1090
        %v1635 = vsel %vm1576, %v868, %v1092
        %v1639 = vsel %vm1576, %v869, %v1094
        %v1643 = vsel %vm1576, %v870, %v1096
        %v1647 = vsel %vm1576, %v871, %v1098
        %v1651 = vsel %vm1576, %v872, %v1100
        %v1655 = vsel %vm1576, %v873, %v1102
        %v1659 = vsel %vm1576, %v874, %v1104
        %v1663 = vsel %vm1576, %v875, %v1106
        %v1667 = vsel %vm1576, %v876, %v1108
        %v1671 = vsel %vm1576, %v877, %v1110
        %v1675 = vsel %vm1576, %v878, %v1112
        %v1679 = vsel %vm1576, %v879, %v1114
        %v1683 = vsel %vm1576, %v880, %v1116
        %v1687 = vsel %vm1576, %v881, %v1118
        %v1691 = vsel %vm1576, %v882, %v1120
        %v1695 = vsel %vm1576, %v883, %v1122
        %v1699 = vsel %vm1576, %v884, %v1124
        %v1703 = vsel %vm1576, %v885, %v1126
        %v1707 = vsel %vm1576, %v1226, %v1325
        %v1711 = vsel %vm1576, %v1228, %v1327
        %v1715 = vsel %vm1576, %v1231, %v1329
        %v1719 = vsel %vm1576, %v1233, %v1331
        %v1723 = vsel %vm1576, %v1236, %v1333
        %v1727 = vsel %vm1576, %v1238, %v1335
        %v1731 = vsel %vm1576, %v1241, %v1337
        %v1735 = vsel %vm1576, %v1243, %v1339
        %v1739 = vsel %vm1576, %v1246, %v1341
        %v1743 = vsel %vm1576, %v1248, %v1343
        %v1747 = vsel %vm1576, %v1251, %v1345
        %v1751 = vsel %vm1576, %v1253, %v1347
        %v1755 = vsel %vm1576, %v1256, %v1349
        %v1759 = vsel %vm1576, %v1258, %v1351
        %v1763 = vsel %vm1576, %v1261, %v1353
        %v1767 = vsel %vm1576, %v1263, %v1355
        %v1771 = vsel %vm1576, %v1266, %v1357
        %v1775 = vsel %vm1576, %v1268, %v1359
        %v1779 = vsel %vm1576, %v1271, %v1361
        %v1783 = vsel %vm1576, %v1273, %v1363
        %v1787 = vsel %vm1576, %v1276, %v1365
        %v1791 = vsel %vm1576, %v1278, %v1367
        %v1795 = vsel %vm1576, %v1281, %v1369
        %v1799 = vsel %vm1576, %v1283, %v1371
        %v1803 = vsel %vm1576, %v1286, %v1373
        %v1807 = vsel %vm1576, %v1288, %v1375
        %v1811 = vsel %vm1576, %v1291, %v1377
        %v1815 = vsel %vm1576, %v1293, %v1379
        %v1819 = vsel %vm1576, %v1296, %v1381
        %v1823 = vsel %vm1576, %v1298, %v1383
        %v1827 = vsel %vm1576, %v1301, %v1385
        %v1831 = vsel %vm1576, %v1303, %v1387
        %v1835 = vsel %vm1576, %v995, %v1433
        %v1839 = vsel %vm1576, %v997, %v1435
        %v1843 = vsel %vm1576, %v1000, %v1437
        %v1847 = vsel %vm1576, %v1002, %v1439
        %v1851 = vsel %vm1576, %v1005, %v1441
        %v1855 = vsel %vm1576, %v1007, %v1443
        %v1859 = vsel %vm1576, %v1010, %v1445
        %v1863 = vsel %vm1576, %v1012, %v1447
        %v1867 = vsel %vm1576, %v1015, %v1449
        %v1871 = vsel %vm1576, %v1017, %v1451
        %v1875 = vsel %vm1576, %v1020, %v1453
        %v1879 = vsel %vm1576, %v1022, %v1455
        %v1883 = vsel %vm1576, %v1025, %v1457
        %v1887 = vsel %vm1576, %v1027, %v1459
        %v1891 = vsel %vm1576, %v1030, %v1461
        %v1895 = vsel %vm1576, %v1032, %v1463
        %v1899 = vsel %vm1576, %v1035, %v1465
        %v1903 = vsel %vm1576, %v1037, %v1467
        %v1907 = vsel %vm1576, %v1040, %v1469
        %v1911 = vsel %vm1576, %v1042, %v1471
        %v1915 = vsel %vm1576, %v1045, %v1473
        %v1919 = vsel %vm1576, %v1047, %v1475
        %v1923 = vsel %vm1576, %v1050, %v1477
        %v1927 = vsel %vm1576, %v1052, %v1479
        %v1931 = vsel %vm1576, %v1055, %v1481
        %v1935 = vsel %vm1576, %v1057, %v1483
        %v1939 = vsel %vm1576, %v1060, %v1485
        %v1943 = vsel %vm1576, %v1062, %v1487
        %v1947 = vsel %vm1576, %v1402, %v1489
        %v1951 = vsel %vm1576, %v1404, %v1491
        %v1955 = vsel %vm1576, %v1407, %v1493
        %v1959 = vsel %vm1576, %v1409, %v1495
        %v1963 = vsel %vm1576, %v1320, %v1539
        %v1967 = vsel %vm1576, %v1321, %v1541
        %v1971 = vsel %vm1576, %v1322, %v1543
        %v1975 = vsel %vm1576, %v1323, %v1545
        %v1979 = vsel %vm1576, %v1512, %v1547
        %v1983 = vsel %vm1576, %v1513, %v1549
        %v1987 = vsel %vm1576, %v1514, %v1551
        %v1991 = vsel %vm1576, %v1515, %v1553
        %v1993 = vld [vmem:[%s2] sm:$0xf]
        %v1994 = vld [vmem:[%s2 + $0x4] sm:$0xf]
        %v1995 = vld [vmem:[%s2 + $0x8] sm:$0xf]
        %v1996 = vld [vmem:[%s2 + $0xc] sm:$0xf]
        %v1997 = vld [vmem:[%s2 + $0x10] sm:$0xf]
        %v1998 = vld [vmem:[%s2 + $0x14] sm:$0xf]
        %v1999 = vld [vmem:[%s2 + $0x18] sm:$0xf]
        %v2000 = vld [vmem:[%s2 + $0x1c] sm:$0xf]
        %v2001 = vld [vmem:[%s2 + $0x20] sm:$0xf]
        %v2002 = vld [vmem:[%s2 + $0x24] sm:$0xf]
        %v2003 = vld [vmem:[%s2 + $0x28] sm:$0xf]
        %v2004 = vld [vmem:[%s2 + $0x2c] sm:$0xf]
        %v2005 = vld [vmem:[%s2 + $0x30] sm:$0xf]
        %v2006 = vld [vmem:[%s2 + $0x34] sm:$0xf]
        %v2007 = vld [vmem:[%s2 + $0x38] sm:$0xf]
        %v2008 = vld [vmem:[%s2 + $0x3c] sm:$0xf]
        %v2009 = vld [vmem:[%s2 + $0x40] sm:$0xf]
        %v2010 = vld [vmem:[%s2 + $0x44] sm:$0xf]
        %v2011 = vld [vmem:[%s2 + $0x48] sm:$0xf]
        %v2012 = vld [vmem:[%s2 + $0x4c] sm:$0xf]
        %v2013 = vld [vmem:[%s2 + $0x50] sm:$0xf]
        %v2014 = vld [vmem:[%s2 + $0x54] sm:$0xf]
        %v2015 = vld [vmem:[%s2 + $0x58] sm:$0xf]
        %v2016 = vld [vmem:[%s2 + $0x5c] sm:$0xf]
        %v2017 = vld [vmem:[%s2 + $0x60] sm:$0xf]
        %v2018 = vld [vmem:[%s2 + $0x64] sm:$0xf]
        %v2019 = vld [vmem:[%s2 + $0x68] sm:$0xf]
        %v2020 = vld [vmem:[%s2 + $0x6c] sm:$0xf]
        %v2021 = vld [vmem:[%s2 + $0x70] sm:$0xf]
        %v2022 = vld [vmem:[%s2 + $0x74] sm:$0xf]
        %v2023 = vld [vmem:[%s2 + $0x78] sm:$0xf]
        %v2024 = vld [vmem:[%s2 + $0x7c] sm:$0xf]
        %v2025 = vld [vmem:[%s2 + $0x80] sm:$0xf]
        %v2026 = vld [vmem:[%s2 + $0x84] sm:$0xf]
        %v2027 = vld [vmem:[%s2 + $0x88] sm:$0xf]
        %v2028 = vld [vmem:[%s2 + $0x8c] sm:$0xf]
        %v2029 = vld [vmem:[%s2 + $0x90] sm:$0xf]
        %v2030 = vld [vmem:[%s2 + $0x94] sm:$0xf]
        %v2031 = vld [vmem:[%s2 + $0x98] sm:$0xf]
        %v2032 = vld [vmem:[%s2 + $0x9c] sm:$0xf]
        %v2033 = vld [vmem:[%s2 + $0xa0] sm:$0xf]
        %v2034 = vld [vmem:[%s2 + $0xa4] sm:$0xf]
        %v2035 = vld [vmem:[%s2 + $0xa8] sm:$0xf]
        %v2036 = vld [vmem:[%s2 + $0xac] sm:$0xf]
        %v2037 = vld [vmem:[%s2 + $0xb0] sm:$0xf]
        %v2038 = vld [vmem:[%s2 + $0xb4] sm:$0xf]
        %v2039 = vld [vmem:[%s2 + $0xb8] sm:$0xf]
        %v2040 = vld [vmem:[%s2 + $0xbc] sm:$0xf]
        %v2041 = vld [vmem:[%s2 + $0xc0] sm:$0xf]
        %v2042 = vld [vmem:[%s2 + $0xc4] sm:$0xf]
        %v2043 = vld [vmem:[%s2 + $0xc8] sm:$0xf]
        %v2044 = vld [vmem:[%s2 + $0xcc] sm:$0xf]
        %v2045 = vld [vmem:[%s2 + $0xd0] sm:$0xf]
        %v2046 = vld [vmem:[%s2 + $0xd4] sm:$0xf]
        %v2047 = vld [vmem:[%s2 + $0xd8] sm:$0xf]
        %v2048 = vld [vmem:[%s2 + $0xdc] sm:$0xf]
        %v2049 = vld [vmem:[%s2 + $0xe0] sm:$0xf]
        %v2050 = vld [vmem:[%s2 + $0xe4] sm:$0xf]
        %v2051 = vld [vmem:[%s2 + $0xe8] sm:$0xf]
        %v2052 = vld [vmem:[%s2 + $0xec] sm:$0xf]
        %v2053 = vld [vmem:[%s2 + $0xf0] sm:$0xf]
        %v2054 = vld [vmem:[%s2 + $0xf4] sm:$0xf]
        %v2055 = vld [vmem:[%s2 + $0xf8] sm:$0xf]
        %v2056 = vld [vmem:[%s2 + $0xfc] sm:$0xf]
        %v2057 = vld [vmem:[%s2 + $0x100] sm:$0xf]
        %v2058 = vld [vmem:[%s2 + $0x104] sm:$0xf]
        %v2059 = vld [vmem:[%s2 + $0x108] sm:$0xf]
        %v2060 = vld [vmem:[%s2 + $0x10c] sm:$0xf]
        %v2061 = vld [vmem:[%s2 + $0x110] sm:$0xf]
        %v2062 = vld [vmem:[%s2 + $0x114] sm:$0xf]
        %v2063 = vld [vmem:[%s2 + $0x118] sm:$0xf]
        %v2064 = vld [vmem:[%s2 + $0x11c] sm:$0xf]
        %v2065 = vld [vmem:[%s3] sm:$0x1]
        %v2067 = vlaneseq
        %v2068 = vshrl.u32 %v2067, 7
        %v2069 = vsub.s32 0, %v2068
        %v2070 = vrot.slane %v2065, %v2069
        %v2144 = vunpack.c.l.b16 %v1993
        %v2145 = vunpack.c.l.b16 %v1994
        %v2146 = vunpack.c.l.b16 %v1995
        %v2147 = vunpack.c.l.b16 %v1996
        %v2148 = vunpack.c.l.b16 %v1997
        %v2149 = vunpack.c.l.b16 %v1998
        %v2150 = vunpack.c.l.b16 %v1999
        %v2151 = vunpack.c.l.b16 %v2000
        %v2152 = vunpack.c.l.b16 %v2001
        %v2153 = vunpack.c.l.b16 %v2002
        %v2154 = vunpack.c.l.b16 %v2003
        %v2155 = vunpack.c.l.b16 %v2004
        %v2156 = vunpack.c.l.b16 %v2005
        %v2157 = vunpack.c.l.b16 %v2006
        %v2158 = vunpack.c.l.b16 %v2007
        %v2159 = vunpack.c.l.b16 %v2008
        %v2160 = vunpack.c.l.b16 %v2009
        %v2161 = vunpack.c.l.b16 %v2010
        %v2162 = vunpack.c.l.b16 %v2011
        %v2163 = vunpack.c.l.b16 %v2012
        %v2164 = vunpack.c.l.b16 %v2013
        %v2165 = vunpack.c.l.b16 %v2014
        %v2166 = vunpack.c.l.b16 %v2015
        %v2167 = vunpack.c.l.b16 %v2016
        %v2168 = vunpack.c.l.b16 %v2017
        %v2169 = vunpack.c.l.b16 %v2018
        %v2170 = vunpack.c.l.b16 %v2019
        %v2171 = vunpack.c.l.b16 %v2020
        %v2172 = vunpack.c.l.b16 %v2021
        %v2173 = vunpack.c.l.b16 %v2022
        %v2174 = vunpack.c.l.b16 %v2023
        %v2175 = vunpack.c.l.b16 %v2024
        %v2176 = vunpack.c.l.b16 %v2025
        %v2177 = vunpack.c.l.b16 %v2026
        %v2178 = vunpack.c.l.b16 %v2027
        %v2179 = vunpack.c.l.b16 %v2028
        %v2180 = vunpack.c.l.b16 %v2029
        %v2181 = vunpack.c.l.b16 %v2030
        %v2182 = vunpack.c.l.b16 %v2031
        %v2183 = vunpack.c.l.b16 %v2032
        %v2184 = vunpack.c.l.b16 %v2033
        %v2185 = vunpack.c.l.b16 %v2034
        %v2186 = vunpack.c.l.b16 %v2035
        %v2187 = vunpack.c.l.b16 %v2036
        %v2188 = vunpack.c.l.b16 %v2037
        %v2189 = vunpack.c.l.b16 %v2038
        %v2190 = vunpack.c.l.b16 %v2039
        %v2191 = vunpack.c.l.b16 %v2040
        %v2192 = vunpack.c.l.b16 %v2041
        %v2193 = vunpack.c.l.b16 %v2042
        %v2194 = vunpack.c.l.b16 %v2043
        %v2195 = vunpack.c.l.b16 %v2044
        %v2196 = vunpack.c.l.b16 %v2045
        %v2197 = vunpack.c.l.b16 %v2046
        %v2198 = vunpack.c.l.b16 %v2047
        %v2199 = vunpack.c.l.b16 %v2048
        %v2200 = vunpack.c.l.b16 %v2049
        %v2201 = vunpack.c.l.b16 %v2050
        %v2202 = vunpack.c.l.b16 %v2051
        %v2203 = vunpack.c.l.b16 %v2052
        %v2204 = vunpack.c.l.b16 %v2053
        %v2205 = vunpack.c.l.b16 %v2054
        %v2206 = vunpack.c.l.b16 %v2055
        %v2207 = vunpack.c.l.b16 %v2056
        %v2208 = vunpack.c.l.b16 %v2057
        %v2209 = vunpack.c.l.b16 %v2058
        %v2210 = vunpack.c.l.b16 %v2059
        %v2211 = vunpack.c.l.b16 %v2060
        %v2212 = vunpack.c.l.b16 %v2061
        %v2213 = vunpack.c.l.b16 %v2062
        %v2214 = vunpack.c.l.b16 %v2063
        %v2215 = vunpack.c.l.b16 %v2064
        %v2216 = vpack.c.b16 %v2145, %v2144
        %v2217 = vpack.c.b16 %v2147, %v2146
        %v2218 = vpack.c.b16 %v2149, %v2148
        %v2219 = vpack.c.b16 %v2151, %v2150
        %v2220 = vpack.c.b16 %v2153, %v2152
        %v2221 = vpack.c.b16 %v2155, %v2154
        %v2222 = vpack.c.b16 %v2157, %v2156
        %v2223 = vpack.c.b16 %v2159, %v2158
        %v2224 = vpack.c.b16 %v2161, %v2160
        %v2225 = vpack.c.b16 %v2163, %v2162
        %v2226 = vpack.c.b16 %v2165, %v2164
        %v2227 = vpack.c.b16 %v2167, %v2166
        %v2228 = vpack.c.b16 %v2169, %v2168
        %v2229 = vpack.c.b16 %v2171, %v2170
        %v2230 = vpack.c.b16 %v2173, %v2172
        %v2231 = vpack.c.b16 %v2175, %v2174
        %v2232 = vpack.c.b16 %v2177, %v2176
        %v2233 = vpack.c.b16 %v2179, %v2178
        %v2234 = vpack.c.b16 %v2181, %v2180
        %v2235 = vpack.c.b16 %v2183, %v2182
        %v2236 = vpack.c.b16 %v2185, %v2184
        %v2237 = vpack.c.b16 %v2187, %v2186
        %v2238 = vpack.c.b16 %v2189, %v2188
        %v2239 = vpack.c.b16 %v2191, %v2190
        %v2240 = vpack.c.b16 %v2193, %v2192
        %v2241 = vpack.c.b16 %v2195, %v2194
        %v2242 = vpack.c.b16 %v2197, %v2196
        %v2243 = vpack.c.b16 %v2199, %v2198
        %v2244 = vpack.c.b16 %v2201, %v2200
        %v2245 = vpack.c.b16 %v2203, %v2202
        %v2246 = vpack.c.b16 %v2205, %v2204
        %v2247 = vpack.c.b16 %v2207, %v2206
        %v2248 = vpack.c.b16 %v2209, %v2208
        %v2249 = vpack.c.b16 %v2211, %v2210
        %v2250 = vpack.c.b16 %v2213, %v2212
        %v2251 = vpack.c.b16 %v2215, %v2214
        %v2288 = vsel %vm1576, %v1246, 0
        %v2290 = vsel %vm1576, %v1248, 0
        %v2292 = vsel %vm1576, %v1251, 0
        %v2294 = vsel %vm1576, %v1253, 0
        %v2296 = vsel %vm1576, %v1256, 0
        %v2298 = vsel %vm1576, %v1258, 0
        %v2300 = vsel %vm1576, %v1261, 0
        %v2302 = vsel %vm1576, %v1263, 0
        %v2304 = vsel %vm1576, %v1266, 0
        %v2306 = vsel %vm1576, %v1268, 0
        %v2308 = vsel %vm1576, %v1271, 0
        %v2310 = vsel %vm1576, %v1273, 0
        %v2312 = vsel %vm1576, %v1276, 0
        %v2314 = vsel %vm1576, %v1278, 0
        %v2316 = vsel %vm1576, %v1281, 0
        %v2318 = vsel %vm1576, %v1283, 0
        %v2320 = vsel %vm1576, %v1286, 0
        %v2322 = vsel %vm1576, %v1288, 0
        %v2324 = vsel %vm1576, %v1291, 0
        %v2326 = vsel %vm1576, %v1293, 0
        %v2328 = vsel %vm1576, %v1296, 0
        %v2330 = vsel %vm1576, %v1298, 0
        %v2332 = vsel %vm1576, %v1301, 0
        %v2334 = vsel %vm1576, %v1303, 0
        %v2337 = vsel %vm1576, %v1424, 0
        %v2340 = vsel %vm1576, %v1426, 0
        %v2343 = vsel %vm1576, %v1429, 0
        %v2346 = vsel %vm1576, %v1431, 0
        %v2349 = vsel %vm1576, %v1568, 0
        %v2352 = vsel %vm1576, %v1570, 0
        %v2355 = vsel %vm1576, %v1573, 0
        %v2358 = vsel %vm1576, %v1575, 0
        %2360 = vmatprep.subr.bf16.mxu0 0
        %2361 = vmatpush1.bf16.msra.mxu0 %v2216
        %2362 = vmatprep.subr.bf16.mxu0 0
        %2363 = vmatpush1.bf16.msra.mxu0 %v2217
        %2364 = vmatprep.subr.bf16.mxu0 0
        %2365 = vmatpush1.bf16.msra.mxu0 %v2218
        %2366 = vmatprep.subr.bf16.mxu0 0
        %2367 = vmatpush1.bf16.msra.mxu0 %v2219
        %2368 = vmatprep.subr.bf16.mxu0 0
        %2369 = vmatpush1.bf16.msra.mxu0 %v2220
        %2370 = vmatprep.subr.bf16.mxu0 0
        %2371 = vmatpush1.bf16.msra.mxu0 %v2221
        %2372 = vmatprep.subr.bf16.mxu0 0
        %2373 = vmatpush1.bf16.msra.mxu0 %v2222
        %2374 = vmatprep.subr.bf16.mxu0 0
        %2375 = vmatpush1.bf16.msra.mxu0 %v2223
        %2376 = vmatprep.subr.bf16.mxu0 0
        %2377 = vmatpush1.bf16.msra.mxu0 %v2224
        %2378 = vmatprep.subr.bf16.mxu0 0
        %2379 = vmatpush1.bf16.msra.mxu0 %v2225
        %2380 = vmatprep.subr.bf16.mxu0 0
        %2381 = vmatpush1.bf16.msra.mxu0 %v2226
        %2382 = vmatprep.subr.bf16.mxu0 0
        %2383 = vmatpush1.bf16.msra.mxu0 %v2227
        %2384 = vmatprep.subr.bf16.mxu0 0
        %2385 = vmatpush1.bf16.msra.mxu0 %v2228
        %2386 = vmatprep.subr.bf16.mxu0 0
        %2387 = vmatpush1.bf16.msra.mxu0 %v2229
        %2388 = vmatprep.subr.bf16.mxu0 0
        %2389 = vmatpush1.bf16.msra.mxu0 %v2230
        %2390 = vmatprep.subr.bf16.mxu0 0
        %2391 = vmatpush1.bf16.msra.mxu0 %v2231
        %2392 = vmatprep.mubr.bf16.mxu0 %v1707
        %2393 = vmatmul.mubr.bf16.gmra.mrb[0].mxu0 %v1579
        %v2394 = vpop.f32.mrb[0].mxu0
        %v2395 = vadd.f32 %v2070, %v2394
        %v2396 = vpop.f32.mrb[0].mxu0
        %v2397 = vpop.f32.mrb[0].mxu0
        %v2398 = vadd.f32 %v2070, %v2397
        %v2399 = vpop.f32.mrb[0].mxu0
        %2400 = vmatprep.mubr.bf16.mxu0 %v1711
        %2401 = vmatmul.mubr.bf16.gmra.mrb[0].mxu0 %v1583
        %v2402 = vpop.f32.mrb[0].mxu0
        %v2403 = vadd.f32 %v2070, %v2402
        %v2404 = vpop.f32.mrb[0].mxu0
        %v2405 = vpop.f32.mrb[0].mxu0
        %v2406 = vadd.f32 %v2070, %v2405
        %v2407 = vpop.f32.mrb[0].mxu0
        %2408 = vmatprep.mubr.bf16.mxu0 %v1715
        %2409 = vmatmul.mubr.bf16.gmra.mrb[0].mxu0 %v1587
        %v2410 = vpop.f32.mrb[0].mxu0
        %v2411 = vadd.f32 %v2070, %v2410
        %v2412 = vpop.f32.mrb[0].mxu0
        %v2413 = vpop.f32.mrb[0].mxu0
        %v2414 = vadd.f32 %v2070, %v2413
        %v2415 = vpop.f32.mrb[0].mxu0
        %2416 = vmatprep.mubr.bf16.mxu0 %v1719
        %2417 = vmatmul.mubr.bf16.gmra.mrb[0].mxu0 %v1591
        %v2418 = vpop.f32.mrb[0].mxu0
        %v2419 = vadd.f32 %v2070, %v2418
        %v2420 = vpop.f32.mrb[0].mxu0
        %v2421 = vpop.f32.mrb[0].mxu0
        %v2422 = vadd.f32 %v2070, %v2421
        %v2423 = vpop.f32.mrb[0].mxu0
        %2424 = vmatprep.mubr.bf16.mxu0 %v1723
        %2425 = vmatmul.mubr.bf16.gmra.mrb[0].mxu0 %v1595
        %v2426 = vpop.f32.mrb[0].mxu0
        %v2427 = vadd.f32 %v2070, %v2426
        %v2428 = vpop.f32.mrb[0].mxu0
        %v2429 = vpop.f32.mrb[0].mxu0
        %v2430 = vadd.f32 %v2070, %v2429
        %v2431 = vpop.f32.mrb[0].mxu0
        %2432 = vmatprep.mubr.bf16.mxu0 %v1727
        %2433 = vmatmul.mubr.bf16.gmra.mrb[0].mxu0 %v1599
        %v2434 = vpop.f32.mrb[0].mxu0
        %v2435 = vadd.f32 %v2070, %v2434
        %v2436 = vpop.f32.mrb[0].mxu0
        %v2437 = vpop.f32.mrb[0].mxu0
        %v2438 = vadd.f32 %v2070, %v2437
        %v2439 = vpop.f32.mrb[0].mxu0
        %2440 = vmatprep.mubr.bf16.mxu0 %v1731
        %2441 = vmatmul.mubr.bf16.gmra.mrb[0].mxu0 %v1603
        %v2442 = vpop.f32.mrb[0].mxu0
        %v2443 = vadd.f32 %v2070, %v2442
        %v2444 = vpop.f32.mrb[0].mxu0
        %v2445 = vpop.f32.mrb[0].mxu0
        %v2446 = vadd.f32 %v2070, %v2445
        %v2447 = vpop.f32.mrb[0].mxu0
        %2448 = vmatprep.mubr.bf16.mxu0 %v1735
        %2449 = vmatmul.mubr.bf16.gmra.mrb[0].mxu0 %v1607
        %v2450 = vpop.f32.mrb[0].mxu0
        %v2451 = vadd.f32 %v2070, %v2450
        %v2452 = vpop.f32.mrb[0].mxu0
        %v2453 = vpop.f32.mrb[0].mxu0
        %v2454 = vadd.f32 %v2070, %v2453
        %v2455 = vpop.f32.mrb[0].mxu0
        %2456 = vmatprep.mubr.bf16.mxu0 %v1739
        %2457 = vmatmul.mubr.bf16.gmra.mrb[0].mxu0 %v1611
        %v2458 = vpop.f32.mrb[0].mxu0
        %v2459 = vadd.f32 %v2070, %v2458
        %v2460 = vpop.f32.mrb[0].mxu0
        %v2461 = vpop.f32.mrb[0].mxu0
        %v2462 = vadd.f32 %v2070, %v2461
        %v2463 = vpop.f32.mrb[0].mxu0
        %2464 = vmatprep.mubr.bf16.mxu0 %v1743
        %2465 = vmatmul.mubr.bf16.gmra.mrb[0].mxu0 %v1615
        %v2466 = vpop.f32.mrb[0].mxu0
        %v2467 = vadd.f32 %v2070, %v2466
        %v2468 = vpop.f32.mrb[0].mxu0
        %v2469 = vpop.f32.mrb[0].mxu0
        %v2470 = vadd.f32 %v2070, %v2469
        %v2471 = vpop.f32.mrb[0].mxu0
        %2472 = vmatprep.mubr.bf16.mxu0 %v1747
        %2473 = vmatmul.mubr.bf16.gmra.mrb[0].mxu0 %v1619
        %v2474 = vpop.f32.mrb[0].mxu0
        %v2475 = vadd.f32 %v2070, %v2474
        %v2476 = vpop.f32.mrb[0].mxu0
        %v2477 = vpop.f32.mrb[0].mxu0
        %v2478 = vadd.f32 %v2070, %v2477
        %v2479 = vpop.f32.mrb[0].mxu0
        %2480 = vmatprep.mubr.bf16.mxu0 %v1751
        %2481 = vmatmul.mubr.bf16.gmra.mrb[0].mxu0 %v1623
        %v2482 = vpop.f32.mrb[0].mxu0
        %v2483 = vadd.f32 %v2070, %v2482
        %v2484 = vpop.f32.mrb[0].mxu0
        %v2485 = vpop.f32.mrb[0].mxu0
        %v2486 = vadd.f32 %v2070, %v2485
        %v2487 = vpop.f32.mrb[0].mxu0
        %2488 = vmatprep.mubr.bf16.mxu0 %v1755
        %2489 = vmatmul.mubr.bf16.gmra.mrb[0].mxu0 %v1627
        %v2490 = vpop.f32.mrb[0].mxu0
        %v2491 = vadd.f32 %v2070, %v2490
        %v2492 = vpop.f32.mrb[0].mxu0
        %v2493 = vpop.f32.mrb[0].mxu0
        %v2494 = vadd.f32 %v2070, %v2493
        %v2495 = vpop.f32.mrb[0].mxu0
        %2496 = vmatprep.mubr.bf16.mxu0 %v1759
        %2497 = vmatmul.mubr.bf16.gmra.mrb[0].mxu0 %v1631
        %v2498 = vpop.f32.mrb[0].mxu0
        %v2499 = vadd.f32 %v2070, %v2498
        %v2500 = vpop.f32.mrb[0].mxu0
        %v2501 = vpop.f32.mrb[0].mxu0
        %v2502 = vadd.f32 %v2070, %v2501
        %v2503 = vpop.f32.mrb[0].mxu0
        %2504 = vmatprep.mubr.bf16.mxu0 %v1763
        %2505 = vmatmul.mubr.bf16.gmra.mrb[0].mxu0 %v1635
        %v2506 = vpop.f32.mrb[0].mxu0
        %v2507 = vadd.f32 %v2070, %v2506
        %v2508 = vpop.f32.mrb[0].mxu0
        %v2509 = vpop.f32.mrb[0].mxu0
        %v2510 = vadd.f32 %v2070, %v2509
        %v2511 = vpop.f32.mrb[0].mxu0
        %2512 = vmatprep.mubr.bf16.mxu0 %v1767
        %2513 = vmatmul.mubr.bf16.gmra.mrb[0].mxu0 %v1639
        %v2514 = vpop.f32.mrb[0].mxu0
        %v2515 = vadd.f32 %v2070, %v2514
        %v2516 = vpop.f32.mrb[0].mxu0
        %v2517 = vpop.f32.mrb[0].mxu0
        %v2518 = vadd.f32 %v2070, %v2517
        %v2519 = vpop.f32.mrb[0].mxu0
        %2520 = vmatprep.mubr.bf16.mxu0 %v1771
        %2521 = vmatmul.mubr.bf16.gmra.mrb[0].mxu0 %v1643
        %v2522 = vpop.f32.mrb[0].mxu0
        %v2523 = vadd.f32 %v2070, %v2522
        %v2524 = vpop.f32.mrb[0].mxu0
        %v2525 = vpop.f32.mrb[0].mxu0
        %v2526 = vadd.f32 %v2070, %v2525
        %v2527 = vpop.f32.mrb[0].mxu0
        %2528 = vmatprep.mubr.bf16.mxu0 %v1775
        %2529 = vmatmul.mubr.bf16.gmra.mrb[0].mxu0 %v1647
        %v2530 = vpop.f32.mrb[0].mxu0
        %v2531 = vadd.f32 %v2070, %v2530
        %v2532 = vpop.f32.mrb[0].mxu0
        %v2533 = vpop.f32.mrb[0].mxu0
        %v2534 = vadd.f32 %v2070, %v2533
        %v2535 = vpop.f32.mrb[0].mxu0
        %2536 = vmatprep.mubr.bf16.mxu0 %v1779
        %2537 = vmatmul.mubr.bf16.gmra.mrb[0].mxu0 %v1651
        %v2538 = vpop.f32.mrb[0].mxu0
        %v2539 = vadd.f32 %v2070, %v2538
        %v2540 = vpop.f32.mrb[0].mxu0
        %v2541 = vpop.f32.mrb[0].mxu0
        %v2542 = vadd.f32 %v2070, %v2541
        %v2543 = vpop.f32.mrb[0].mxu0
        %2544 = vmatprep.mubr.bf16.mxu0 %v1783
        %2545 = vmatmul.mubr.bf16.gmra.mrb[0].mxu0 %v1655
        %v2546 = vpop.f32.mrb[0].mxu0
        %v2547 = vadd.f32 %v2070, %v2546
        %v2548 = vpop.f32.mrb[0].mxu0
        %v2549 = vpop.f32.mrb[0].mxu0
        %v2550 = vadd.f32 %v2070, %v2549
        %v2551 = vpop.f32.mrb[0].mxu0
        %2552 = vmatprep.mubr.bf16.mxu0 %v1787
        %2553 = vmatmul.mubr.bf16.gmra.mrb[0].mxu0 %v1659
        %v2554 = vpop.f32.mrb[0].mxu0
        %v2555 = vadd.f32 %v2070, %v2554
        %v2556 = vpop.f32.mrb[0].mxu0
        %v2557 = vpop.f32.mrb[0].mxu0
        %v2558 = vadd.f32 %v2070, %v2557
        %v2559 = vpop.f32.mrb[0].mxu0
        %2560 = vmatprep.mubr.bf16.mxu0 %v1791
        %2561 = vmatmul.mubr.bf16.gmra.mrb[0].mxu0 %v1663
        %v2562 = vpop.f32.mrb[0].mxu0
        %v2563 = vadd.f32 %v2070, %v2562
        %v2564 = vpop.f32.mrb[0].mxu0
        %v2565 = vpop.f32.mrb[0].mxu0
        %v2566 = vadd.f32 %v2070, %v2565
        %v2567 = vpop.f32.mrb[0].mxu0
        %2568 = vmatprep.mubr.bf16.mxu0 %v1795
        %2569 = vmatmul.mubr.bf16.gmra.mrb[0].mxu0 %v1667
        %v2570 = vpop.f32.mrb[0].mxu0
        %v2571 = vadd.f32 %v2070, %v2570
        %v2572 = vpop.f32.mrb[0].mxu0
        %v2573 = vpop.f32.mrb[0].mxu0
        %v2574 = vadd.f32 %v2070, %v2573
        %v2575 = vpop.f32.mrb[0].mxu0
        %2576 = vmatprep.mubr.bf16.mxu0 %v1799
        %2577 = vmatmul.mubr.bf16.gmra.mrb[0].mxu0 %v1671
        %v2578 = vpop.f32.mrb[0].mxu0
        %v2579 = vadd.f32 %v2070, %v2578
        %v2580 = vpop.f32.mrb[0].mxu0
        %v2581 = vpop.f32.mrb[0].mxu0
        %v2582 = vadd.f32 %v2070, %v2581
        %v2583 = vpop.f32.mrb[0].mxu0
        %2584 = vmatprep.mubr.bf16.mxu0 %v1803
        %2585 = vmatmul.mubr.bf16.gmra.mrb[0].mxu0 %v1675
        %v2586 = vpop.f32.mrb[0].mxu0
        %v2587 = vadd.f32 %v2070, %v2586
        %v2588 = vpop.f32.mrb[0].mxu0
        %v2589 = vpop.f32.mrb[0].mxu0
        %v2590 = vadd.f32 %v2070, %v2589
        %v2591 = vpop.f32.mrb[0].mxu0
        %2592 = vmatprep.mubr.bf16.mxu0 %v1807
        %2593 = vmatmul.mubr.bf16.gmra.mrb[0].mxu0 %v1679
        %v2594 = vpop.f32.mrb[0].mxu0
        %v2595 = vadd.f32 %v2070, %v2594
        %v2596 = vpop.f32.mrb[0].mxu0
        %v2597 = vpop.f32.mrb[0].mxu0
        %v2598 = vadd.f32 %v2070, %v2597
        %v2599 = vpop.f32.mrb[0].mxu0
        %2600 = vmatprep.mubr.bf16.mxu0 %v1811
        %2601 = vmatmul.mubr.bf16.gmra.mrb[0].mxu0 %v1683
        %v2602 = vpop.f32.mrb[0].mxu0
        %v2603 = vadd.f32 %v2070, %v2602
        %v2604 = vpop.f32.mrb[0].mxu0
        %v2605 = vpop.f32.mrb[0].mxu0
        %v2606 = vadd.f32 %v2070, %v2605
        %v2607 = vpop.f32.mrb[0].mxu0
        %2608 = vmatprep.mubr.bf16.mxu0 %v1815
        %2609 = vmatmul.mubr.bf16.gmra.mrb[0].mxu0 %v1687
        %v2610 = vpop.f32.mrb[0].mxu0
        %v2611 = vadd.f32 %v2070, %v2610
        %v2612 = vpop.f32.mrb[0].mxu0
        %v2613 = vpop.f32.mrb[0].mxu0
        %v2614 = vadd.f32 %v2070, %v2613
        %v2615 = vpop.f32.mrb[0].mxu0
        %2616 = vmatprep.mubr.bf16.mxu0 %v1819
        %2617 = vmatmul.mubr.bf16.gmra.mrb[0].mxu0 %v1691
        %v2618 = vpop.f32.mrb[0].mxu0
        %v2619 = vadd.f32 %v2070, %v2618
        %v2620 = vpop.f32.mrb[0].mxu0
        %v2621 = vpop.f32.mrb[0].mxu0
        %v2622 = vadd.f32 %v2070, %v2621
        %v2623 = vpop.f32.mrb[0].mxu0
        %2624 = vmatprep.mubr.bf16.mxu0 %v1823
        %2625 = vmatmul.mubr.bf16.gmra.mrb[0].mxu0 %v1695
        %v2626 = vpop.f32.mrb[0].mxu0
        %v2627 = vadd.f32 %v2070, %v2626
        %v2628 = vpop.f32.mrb[0].mxu0
        %v2629 = vpop.f32.mrb[0].mxu0
        %v2630 = vadd.f32 %v2070, %v2629
        %v2631 = vpop.f32.mrb[0].mxu0
        %2632 = vmatprep.mubr.bf16.mxu0 %v1827
        %2633 = vmatmul.mubr.bf16.gmra.mrb[0].mxu0 %v1699
        %v2634 = vpop.f32.mrb[0].mxu0
        %v2635 = vadd.f32 %v2070, %v2634
        %v2636 = vpop.f32.mrb[0].mxu0
        %v2637 = vpop.f32.mrb[0].mxu0
        %v2638 = vadd.f32 %v2070, %v2637
        %v2639 = vpop.f32.mrb[0].mxu0
        %2640 = vmatprep.mubr.bf16.mxu0 %v1831
        %2641 = vmatmul.mubr.bf16.gmra.mrb[0].mxu0 %v1703
        %v2642 = vpop.f32.mrb[0].mxu0
        %v2643 = vadd.f32 %v2070, %v2642
        %v2644 = vpop.f32.mrb[0].mxu0
        %v2645 = vpop.f32.mrb[0].mxu0
        %v2646 = vadd.f32 %v2070, %v2645
        %v2647 = vpop.f32.mrb[0].mxu0
        %2648 = vdwg.mxu0
        %2649 = vmatprep.subr.bf16.mxu0 0
        %2650 = vmatpush1.bf16.msra.mxu0 %v2232
        %2651 = vmatprep.subr.bf16.mxu0 0
        %2652 = vmatpush1.bf16.msra.mxu0 %v2233
        %2653 = vmatprep.subr.bf16.mxu0 0
        %2654 = vmatpush1.bf16.msra.mxu0 %v2234
        %2655 = vmatprep.subr.bf16.mxu0 0
        %2656 = vmatpush1.bf16.msra.mxu0 %v2235
        %2657 = vmatprep.subr.bf16.mxu0 0
        %2658 = vmatpush1.bf16.msra.mxu0 %v2236
        %2659 = vmatprep.subr.bf16.mxu0 0
        %2660 = vmatpush1.bf16.msra.mxu0 %v2237
        %2661 = vmatprep.subr.bf16.mxu0 0
        %2662 = vmatpush1.bf16.msra.mxu0 %v2238
        %2663 = vmatprep.subr.bf16.mxu0 0
        %2664 = vmatpush1.bf16.msra.mxu0 %v2239
        %2665 = vmatprep.subr.bf16.mxu0 0
        %2666 = vmatpush1.bf16.msra.mxu0 %v2240
        %2667 = vmatprep.subr.bf16.mxu0 0
        %2668 = vmatpush1.bf16.msra.mxu0 %v2241
        %2669 = vmatprep.subr.bf16.mxu0 0
        %2670 = vmatpush1.bf16.msra.mxu0 %v2242
        %2671 = vmatprep.subr.bf16.mxu0 0
        %2672 = vmatpush1.bf16.msra.mxu0 %v2243
        %2673 = vmatprep.subr.bf16.mxu0 0
        %2674 = vmatpush1.bf16.msra.mxu0 %v2244
        %2675 = vmatprep.subr.bf16.mxu0 0
        %2676 = vmatpush1.bf16.msra.mxu0 %v2245
        %2677 = vmatprep.subr.bf16.mxu0 0
        %2678 = vmatpush1.bf16.msra.mxu0 %v2246
        %2679 = vmatprep.subr.bf16.mxu0 0
        %2680 = vmatpush1.bf16.msra.mxu0 %v2247
        %2681 = vmatprep.mubr.bf16.mxu0 %v1611
        %2682 = vmatmul.mubr.bf16.gmra.mrb[0].mxu0 %v1835
        %v2683 = vpop.f32.mrb[0].mxu0
        %v2684 = vadd.f32 %v2395, %v2683
        %v2685 = vpop.f32.mrb[0].mxu0
        %v2686 = vpop.f32.mrb[0].mxu0
        %v2687 = vadd.f32 %v2398, %v2686
        %v2688 = vpop.f32.mrb[0].mxu0
        %2689 = vmatprep.mubr.bf16.mxu0 %v1615
        %2690 = vmatmul.mubr.bf16.gmra.mrb[0].mxu0 %v1839
        %v2691 = vpop.f32.mrb[0].mxu0
        %v2692 = vadd.f32 %v2403, %v2691
        %v2693 = vpop.f32.mrb[0].mxu0
        %v2694 = vpop.f32.mrb[0].mxu0
        %v2695 = vadd.f32 %v2406, %v2694
        %v2696 = vpop.f32.mrb[0].mxu0
        %2697 = vmatprep.mubr.bf16.mxu0 %v1619
        %2698 = vmatmul.mubr.bf16.gmra.mrb[0].mxu0 %v1843
        %v2699 = vpop.f32.mrb[0].mxu0
        %v2700 = vadd.f32 %v2411, %v2699
        %v2701 = vpop.f32.mrb[0].mxu0
        %v2702 = vpop.f32.mrb[0].mxu0
        %v2703 = vadd.f32 %v2414, %v2702
        %v2704 = vpop.f32.mrb[0].mxu0
        %2705 = vmatprep.mubr.bf16.mxu0 %v1623
        %2706 = vmatmul.mubr.bf16.gmra.mrb[0].mxu0 %v1847
        %v2707 = vpop.f32.mrb[0].mxu0
        %v2708 = vadd.f32 %v2419, %v2707
        %v2709 = vpop.f32.mrb[0].mxu0
        %v2710 = vpop.f32.mrb[0].mxu0
        %v2711 = vadd.f32 %v2422, %v2710
        %v2712 = vpop.f32.mrb[0].mxu0
        %2713 = vmatprep.mubr.bf16.mxu0 %v1627
        %2714 = vmatmul.mubr.bf16.gmra.mrb[0].mxu0 %v1851
        %v2715 = vpop.f32.mrb[0].mxu0
        %v2716 = vadd.f32 %v2427, %v2715
        %v2717 = vpop.f32.mrb[0].mxu0
        %v2718 = vpop.f32.mrb[0].mxu0
        %v2719 = vadd.f32 %v2430, %v2718
        %v2720 = vpop.f32.mrb[0].mxu0
        %2721 = vmatprep.mubr.bf16.mxu0 %v1631
        %2722 = vmatmul.mubr.bf16.gmra.mrb[0].mxu0 %v1855
        %v2723 = vpop.f32.mrb[0].mxu0
        %v2724 = vadd.f32 %v2435, %v2723
        %v2725 = vpop.f32.mrb[0].mxu0
        %v2726 = vpop.f32.mrb[0].mxu0
        %v2727 = vadd.f32 %v2438, %v2726
        %v2728 = vpop.f32.mrb[0].mxu0
        %2729 = vmatprep.mubr.bf16.mxu0 %v1635
        %2730 = vmatmul.mubr.bf16.gmra.mrb[0].mxu0 %v1859
        %v2731 = vpop.f32.mrb[0].mxu0
        %v2732 = vadd.f32 %v2443, %v2731
        %v2733 = vpop.f32.mrb[0].mxu0
        %v2734 = vpop.f32.mrb[0].mxu0
        %v2735 = vadd.f32 %v2446, %v2734
        %v2736 = vpop.f32.mrb[0].mxu0
        %2737 = vmatprep.mubr.bf16.mxu0 %v1639
        %2738 = vmatmul.mubr.bf16.gmra.mrb[0].mxu0 %v1863
        %v2739 = vpop.f32.mrb[0].mxu0
        %v2740 = vadd.f32 %v2451, %v2739
        %v2741 = vpop.f32.mrb[0].mxu0
        %v2742 = vpop.f32.mrb[0].mxu0
        %v2743 = vadd.f32 %v2454, %v2742
        %v2744 = vpop.f32.mrb[0].mxu0
        %2745 = vmatprep.mubr.bf16.mxu0 %v1643
        %2746 = vmatmul.mubr.bf16.gmra.mrb[0].mxu0 %v1867
        %v2747 = vpop.f32.mrb[0].mxu0
        %v2748 = vadd.f32 %v2459, %v2747
        %v2749 = vpop.f32.mrb[0].mxu0
        %v2750 = vpop.f32.mrb[0].mxu0
        %v2751 = vadd.f32 %v2462, %v2750
        %v2752 = vpop.f32.mrb[0].mxu0
        %2753 = vmatprep.mubr.bf16.mxu0 %v1647
        %2754 = vmatmul.mubr.bf16.gmra.mrb[0].mxu0 %v1871
        %v2755 = vpop.f32.mrb[0].mxu0
        %v2756 = vadd.f32 %v2467, %v2755
        %v2757 = vpop.f32.mrb[0].mxu0
        %v2758 = vpop.f32.mrb[0].mxu0
        %v2759 = vadd.f32 %v2470, %v2758
        %v2760 = vpop.f32.mrb[0].mxu0
        %2761 = vmatprep.mubr.bf16.mxu0 %v1651
        %2762 = vmatmul.mubr.bf16.gmra.mrb[0].mxu0 %v1875
        %v2763 = vpop.f32.mrb[0].mxu0
        %v2764 = vadd.f32 %v2475, %v2763
        %v2765 = vpop.f32.mrb[0].mxu0
        %v2766 = vpop.f32.mrb[0].mxu0
        %v2767 = vadd.f32 %v2478, %v2766
        %v2768 = vpop.f32.mrb[0].mxu0
        %2769 = vmatprep.mubr.bf16.mxu0 %v1655
        %2770 = vmatmul.mubr.bf16.gmra.mrb[0].mxu0 %v1879
        %v2771 = vpop.f32.mrb[0].mxu0
        %v2772 = vadd.f32 %v2483, %v2771
        %v2773 = vpop.f32.mrb[0].mxu0
        %v2774 = vpop.f32.mrb[0].mxu0
        %v2775 = vadd.f32 %v2486, %v2774
        %v2776 = vpop.f32.mrb[0].mxu0
        %2777 = vmatprep.mubr.bf16.mxu0 %v1659
        %2778 = vmatmul.mubr.bf16.gmra.mrb[0].mxu0 %v1883
        %v2779 = vpop.f32.mrb[0].mxu0
        %v2780 = vadd.f32 %v2491, %v2779
        %v2781 = vpop.f32.mrb[0].mxu0
        %v2782 = vpop.f32.mrb[0].mxu0
        %v2783 = vadd.f32 %v2494, %v2782
        %v2784 = vpop.f32.mrb[0].mxu0
        %2785 = vmatprep.mubr.bf16.mxu0 %v1663
        %2786 = vmatmul.mubr.bf16.gmra.mrb[0].mxu0 %v1887
        %v2787 = vpop.f32.mrb[0].mxu0
        %v2788 = vadd.f32 %v2499, %v2787
        %v2789 = vpop.f32.mrb[0].mxu0
        %v2790 = vpop.f32.mrb[0].mxu0
        %v2791 = vadd.f32 %v2502, %v2790
        %v2792 = vpop.f32.mrb[0].mxu0
        %2793 = vmatprep.mubr.bf16.mxu0 %v1667
        %2794 = vmatmul.mubr.bf16.gmra.mrb[0].mxu0 %v1891
        %v2795 = vpop.f32.mrb[0].mxu0
        %v2796 = vadd.f32 %v2507, %v2795
        %v2797 = vpop.f32.mrb[0].mxu0
        %v2798 = vpop.f32.mrb[0].mxu0
        %v2799 = vadd.f32 %v2510, %v2798
        %v2800 = vpop.f32.mrb[0].mxu0
        %2801 = vmatprep.mubr.bf16.mxu0 %v1671
        %2802 = vmatmul.mubr.bf16.gmra.mrb[0].mxu0 %v1895
        %v2803 = vpop.f32.mrb[0].mxu0
        %v2804 = vadd.f32 %v2515, %v2803
        %v2805 = vpop.f32.mrb[0].mxu0
        %v2806 = vpop.f32.mrb[0].mxu0
        %v2807 = vadd.f32 %v2518, %v2806
        %v2808 = vpop.f32.mrb[0].mxu0
        %2809 = vmatprep.mubr.bf16.mxu0 %v1675
        %2810 = vmatmul.mubr.bf16.gmra.mrb[0].mxu0 %v1899
        %v2811 = vpop.f32.mrb[0].mxu0
        %v2812 = vadd.f32 %v2523, %v2811
        %v2813 = vpop.f32.mrb[0].mxu0
        %v2814 = vpop.f32.mrb[0].mxu0
        %v2815 = vadd.f32 %v2526, %v2814
        %v2816 = vpop.f32.mrb[0].mxu0
        %2817 = vmatprep.mubr.bf16.mxu0 %v1679
        %2818 = vmatmul.mubr.bf16.gmra.mrb[0].mxu0 %v1903
        %v2819 = vpop.f32.mrb[0].mxu0
        %v2820 = vadd.f32 %v2531, %v2819
        %v2821 = vpop.f32.mrb[0].mxu0
        %v2822 = vpop.f32.mrb[0].mxu0
        %v2823 = vadd.f32 %v2534, %v2822
        %v2824 = vpop.f32.mrb[0].mxu0
        %2825 = vmatprep.mubr.bf16.mxu0 %v1683
        %2826 = vmatmul.mubr.bf16.gmra.mrb[0].mxu0 %v1907
        %v2827 = vpop.f32.mrb[0].mxu0
        %v2828 = vadd.f32 %v2539, %v2827
        %v2829 = vpop.f32.mrb[0].mxu0
        %v2830 = vpop.f32.mrb[0].mxu0
        %v2831 = vadd.f32 %v2542, %v2830
        %v2832 = vpop.f32.mrb[0].mxu0
        %2833 = vmatprep.mubr.bf16.mxu0 %v1687
        %2834 = vmatmul.mubr.bf16.gmra.mrb[0].mxu0 %v1911
        %v2835 = vpop.f32.mrb[0].mxu0
        %v2836 = vadd.f32 %v2547, %v2835
        %v2837 = vpop.f32.mrb[0].mxu0
        %v2838 = vpop.f32.mrb[0].mxu0
        %v2839 = vadd.f32 %v2550, %v2838
        %v2840 = vpop.f32.mrb[0].mxu0
        %2841 = vmatprep.mubr.bf16.mxu0 %v1691
        %2842 = vmatmul.mubr.bf16.gmra.mrb[0].mxu0 %v1915
        %v2843 = vpop.f32.mrb[0].mxu0
        %v2844 = vadd.f32 %v2555, %v2843
        %v2845 = vpop.f32.mrb[0].mxu0
        %v2846 = vpop.f32.mrb[0].mxu0
        %v2847 = vadd.f32 %v2558, %v2846
        %v2848 = vpop.f32.mrb[0].mxu0
        %2849 = vmatprep.mubr.bf16.mxu0 %v1695
        %2850 = vmatmul.mubr.bf16.gmra.mrb[0].mxu0 %v1919
        %v2851 = vpop.f32.mrb[0].mxu0
        %v2852 = vadd.f32 %v2563, %v2851
        %v2853 = vpop.f32.mrb[0].mxu0
        %v2854 = vpop.f32.mrb[0].mxu0
        %v2855 = vadd.f32 %v2566, %v2854
        %v2856 = vpop.f32.mrb[0].mxu0
        %2857 = vmatprep.mubr.bf16.mxu0 %v1699
        %2858 = vmatmul.mubr.bf16.gmra.mrb[0].mxu0 %v1923
        %v2859 = vpop.f32.mrb[0].mxu0
        %v2860 = vadd.f32 %v2571, %v2859
        %v2861 = vpop.f32.mrb[0].mxu0
        %v2862 = vpop.f32.mrb[0].mxu0
        %v2863 = vadd.f32 %v2574, %v2862
        %v2864 = vpop.f32.mrb[0].mxu0
        %2865 = vmatprep.mubr.bf16.mxu0 %v1703
        %2866 = vmatmul.mubr.bf16.gmra.mrb[0].mxu0 %v1927
        %v2867 = vpop.f32.mrb[0].mxu0
        %v2868 = vadd.f32 %v2579, %v2867
        %v2869 = vpop.f32.mrb[0].mxu0
        %v2870 = vpop.f32.mrb[0].mxu0
        %v2871 = vadd.f32 %v2582, %v2870
        %v2872 = vpop.f32.mrb[0].mxu0
        %2873 = vmatprep.mubr.bf16.mxu0 %v1963
        %2874 = vmatmul.mubr.bf16.gmra.mrb[0].mxu0 %v1931
        %v2875 = vpop.f32.mrb[0].mxu0
        %v2876 = vadd.f32 %v2587, %v2875
        %v2877 = vpop.f32.mrb[0].mxu0
        %v2878 = vpop.f32.mrb[0].mxu0
        %v2879 = vadd.f32 %v2590, %v2878
        %v2880 = vpop.f32.mrb[0].mxu0
        %2881 = vmatprep.mubr.bf16.mxu0 %v1967
        %2882 = vmatmul.mubr.bf16.gmra.mrb[0].mxu0 %v1935
        %v2883 = vpop.f32.mrb[0].mxu0
        %v2884 = vadd.f32 %v2595, %v2883
        %v2885 = vpop.f32.mrb[0].mxu0
        %v2886 = vpop.f32.mrb[0].mxu0
        %v2887 = vadd.f32 %v2598, %v2886
        %v2888 = vpop.f32.mrb[0].mxu0
        %2889 = vmatprep.mubr.bf16.mxu0 %v1971
        %2890 = vmatmul.mubr.bf16.gmra.mrb[0].mxu0 %v1939
        %v2891 = vpop.f32.mrb[0].mxu0
        %v2892 = vadd.f32 %v2603, %v2891
        %v2893 = vpop.f32.mrb[0].mxu0
        %v2894 = vpop.f32.mrb[0].mxu0
        %v2895 = vadd.f32 %v2606, %v2894
        %v2896 = vpop.f32.mrb[0].mxu0
        %2897 = vmatprep.mubr.bf16.mxu0 %v1975
        %2898 = vmatmul.mubr.bf16.gmra.mrb[0].mxu0 %v1943
        %v2899 = vpop.f32.mrb[0].mxu0
        %v2900 = vadd.f32 %v2611, %v2899
        %v2901 = vpop.f32.mrb[0].mxu0
        %v2902 = vpop.f32.mrb[0].mxu0
        %v2903 = vadd.f32 %v2614, %v2902
        %v2904 = vpop.f32.mrb[0].mxu0
        %2905 = vmatprep.mubr.bf16.mxu0 %v1979
        %2906 = vmatmul.mubr.bf16.gmra.mrb[0].mxu0 %v1947
        %v2907 = vpop.f32.mrb[0].mxu0
        %v2908 = vadd.f32 %v2619, %v2907
        %v2909 = vpop.f32.mrb[0].mxu0
        %v2910 = vpop.f32.mrb[0].mxu0
        %v2911 = vadd.f32 %v2622, %v2910
        %v2912 = vpop.f32.mrb[0].mxu0
        %2913 = vmatprep.mubr.bf16.mxu0 %v1983
        %2914 = vmatmul.mubr.bf16.gmra.mrb[0].mxu0 %v1951
        %v2915 = vpop.f32.mrb[0].mxu0
        %v2916 = vadd.f32 %v2627, %v2915
        %v2917 = vpop.f32.mrb[0].mxu0
        %v2918 = vpop.f32.mrb[0].mxu0
        %v2919 = vadd.f32 %v2630, %v2918
        %v2920 = vpop.f32.mrb[0].mxu0
        %2921 = vmatprep.mubr.bf16.mxu0 %v1987
        %2922 = vmatmul.mubr.bf16.gmra.mrb[0].mxu0 %v1955
        %v2923 = vpop.f32.mrb[0].mxu0
        %v2924 = vadd.f32 %v2635, %v2923
        %v2925 = vpop.f32.mrb[0].mxu0
        %v2926 = vpop.f32.mrb[0].mxu0
        %v2927 = vadd.f32 %v2638, %v2926
        %v2928 = vpop.f32.mrb[0].mxu0
        %2929 = vmatprep.mubr.bf16.mxu0 %v1991
        %2930 = vmatmul.mubr.bf16.gmra.mrb[0].mxu0 %v1959
        %v2931 = vpop.f32.mrb[0].mxu0
        %v2932 = vadd.f32 %v2643, %v2931
        %v2933 = vpop.f32.mrb[0].mxu0
        %v2934 = vpop.f32.mrb[0].mxu0
        %v2935 = vadd.f32 %v2646, %v2934
        %v2936 = vpop.f32.mrb[0].mxu0
        %2937 = vdwg.mxu0
        %2938 = vmatprep.subr.bf16.mxu0 0
        %2939 = vmatpush1.bf16.msra.mxu0 %v2248
        %2940 = vmatprep.subr.bf16.mxu0 0
        %2941 = vmatpush1.bf16.msra.mxu0 %v2249
        %2942 = vmatprep.subr.bf16.mxu0 0
        %2943 = vmatpush1.bf16.msra.mxu0 %v2250
        %2944 = vmatprep.subr.bf16.mxu0 0
        %2945 = vmatpush1.bf16.msra.mxu0 %v2251
        %2946 = vmatprep.subr.bf16.mxu0 0
        %2947 = vmatpush1.bf16.msra.mxu0 0
        %2948 = vmatprep.subr.bf16.mxu0 0
        %2949 = vmatpush1.bf16.msra.mxu0 0
        %2950 = vmatprep.subr.bf16.mxu0 0
        %2951 = vmatpush1.bf16.msra.mxu0 0
        %2952 = vmatprep.subr.bf16.mxu0 0
        %2953 = vmatpush1.bf16.msra.mxu0 0
        %2954 = vmatprep.subr.bf16.mxu0 0
        %2955 = vmatpush1.bf16.msra.mxu0 0
        %2956 = vmatprep.subr.bf16.mxu0 0
        %2957 = vmatpush1.bf16.msra.mxu0 0
        %2958 = vmatprep.subr.bf16.mxu0 0
        %2959 = vmatpush1.bf16.msra.mxu0 0
        %2960 = vmatprep.subr.bf16.mxu0 0
        %2961 = vmatpush1.bf16.msra.mxu0 0
        %2962 = vmatprep.subr.bf16.mxu0 0
        %2963 = vmatpush1.bf16.msra.mxu0 0
        %2964 = vmatprep.subr.bf16.mxu0 0
        %2965 = vmatpush1.bf16.msra.mxu0 0
        %2966 = vmatprep.subr.bf16.mxu0 0
        %2967 = vmatpush1.bf16.msra.mxu0 0
        %2968 = vmatprep.subr.bf16.mxu0 0
        %2969 = vmatpush1.bf16.msra.mxu0 0
        %2970 = vmatprep.mubr.bf16.mxu0 0
        %2971 = vmatmul.mubr.bf16.gmra.mrb[0].mxu0 %v2288
        %v2972 = vpop.f32.mrb[0].mxu0
        %v2973 = vadd.f32 %v2684, %v2972
        %v2974 = vpop.f32.mrb[0].mxu0
        %v2975 = vpop.f32.mrb[0].mxu0
        %v2976 = vadd.f32 %v2687, %v2975
        %v2977 = vpop.f32.mrb[0].mxu0
        %2978 = vmatprep.mubr.bf16.mxu0 0
        %2979 = vmatmul.mubr.bf16.gmra.mrb[0].mxu0 %v2290
        %v2980 = vpop.f32.mrb[0].mxu0
        %v2981 = vadd.f32 %v2692, %v2980
        %v2982 = vpop.f32.mrb[0].mxu0
        %v2983 = vpop.f32.mrb[0].mxu0
        %v2984 = vadd.f32 %v2695, %v2983
        %v2985 = vpop.f32.mrb[0].mxu0
        %2986 = vmatprep.mubr.bf16.mxu0 0
        %2987 = vmatmul.mubr.bf16.gmra.mrb[0].mxu0 %v2292
        %v2988 = vpop.f32.mrb[0].mxu0
        %v2989 = vadd.f32 %v2700, %v2988
        %v2990 = vpop.f32.mrb[0].mxu0
        %v2991 = vpop.f32.mrb[0].mxu0
        %v2992 = vadd.f32 %v2703, %v2991
        %v2993 = vpop.f32.mrb[0].mxu0
        %2994 = vmatprep.mubr.bf16.mxu0 0
        %2995 = vmatmul.mubr.bf16.gmra.mrb[0].mxu0 %v2294
        %v2996 = vpop.f32.mrb[0].mxu0
        %v2997 = vadd.f32 %v2708, %v2996
        %v2998 = vpop.f32.mrb[0].mxu0
        %v2999 = vpop.f32.mrb[0].mxu0
        %v3000 = vadd.f32 %v2711, %v2999
        %v3001 = vpop.f32.mrb[0].mxu0
        %3002 = vmatprep.mubr.bf16.mxu0 0
        %3003 = vmatmul.mubr.bf16.gmra.mrb[0].mxu0 %v2296
        %v3004 = vpop.f32.mrb[0].mxu0
        %v3005 = vadd.f32 %v2716, %v3004
        %v3006 = vpop.f32.mrb[0].mxu0
        %v3007 = vpop.f32.mrb[0].mxu0
        %v3008 = vadd.f32 %v2719, %v3007
        %v3009 = vpop.f32.mrb[0].mxu0
        %3010 = vmatprep.mubr.bf16.mxu0 0
        %3011 = vmatmul.mubr.bf16.gmra.mrb[0].mxu0 %v2298
        %v3012 = vpop.f32.mrb[0].mxu0
        %v3013 = vadd.f32 %v2724, %v3012
        %v3014 = vpop.f32.mrb[0].mxu0
        %v3015 = vpop.f32.mrb[0].mxu0
        %v3016 = vadd.f32 %v2727, %v3015
        %v3017 = vpop.f32.mrb[0].mxu0
        %3018 = vmatprep.mubr.bf16.mxu0 0
        %3019 = vmatmul.mubr.bf16.gmra.mrb[0].mxu0 %v2300
        %v3020 = vpop.f32.mrb[0].mxu0
        %v3021 = vadd.f32 %v2732, %v3020
        %v3022 = vpop.f32.mrb[0].mxu0
        %v3023 = vpop.f32.mrb[0].mxu0
        %v3024 = vadd.f32 %v2735, %v3023
        %v3025 = vpop.f32.mrb[0].mxu0
        %3026 = vmatprep.mubr.bf16.mxu0 0
        %3027 = vmatmul.mubr.bf16.gmra.mrb[0].mxu0 %v2302
        %v3028 = vpop.f32.mrb[0].mxu0
        %v3029 = vadd.f32 %v2740, %v3028
        %v3030 = vpop.f32.mrb[0].mxu0
        %v3031 = vpop.f32.mrb[0].mxu0
        %v3032 = vadd.f32 %v2743, %v3031
        %v3033 = vpop.f32.mrb[0].mxu0
        %3034 = vmatprep.mubr.bf16.mxu0 0
        %3035 = vmatmul.mubr.bf16.gmra.mrb[0].mxu0 %v2304
        %v3036 = vpop.f32.mrb[0].mxu0
        %v3037 = vadd.f32 %v2748, %v3036
        %v3038 = vpop.f32.mrb[0].mxu0
        %v3039 = vpop.f32.mrb[0].mxu0
        %v3040 = vadd.f32 %v2751, %v3039
        %v3041 = vpop.f32.mrb[0].mxu0
        %3042 = vmatprep.mubr.bf16.mxu0 0
        %3043 = vmatmul.mubr.bf16.gmra.mrb[0].mxu0 %v2306
        %v3044 = vpop.f32.mrb[0].mxu0
        %v3045 = vadd.f32 %v2756, %v3044
        %v3046 = vpop.f32.mrb[0].mxu0
        %v3047 = vpop.f32.mrb[0].mxu0
        %v3048 = vadd.f32 %v2759, %v3047
        %v3049 = vpop.f32.mrb[0].mxu0
        %3050 = vmatprep.mubr.bf16.mxu0 0
        %3051 = vmatmul.mubr.bf16.gmra.mrb[0].mxu0 %v2308
        %v3052 = vpop.f32.mrb[0].mxu0
        %v3053 = vadd.f32 %v2764, %v3052
        %v3054 = vpop.f32.mrb[0].mxu0
        %v3055 = vpop.f32.mrb[0].mxu0
        %v3056 = vadd.f32 %v2767, %v3055
        %v3057 = vpop.f32.mrb[0].mxu0
        %3058 = vmatprep.mubr.bf16.mxu0 0
        %3059 = vmatmul.mubr.bf16.gmra.mrb[0].mxu0 %v2310
        %v3060 = vpop.f32.mrb[0].mxu0
        %v3061 = vadd.f32 %v2772, %v3060
        %v3062 = vpop.f32.mrb[0].mxu0
        %v3063 = vpop.f32.mrb[0].mxu0
        %v3064 = vadd.f32 %v2775, %v3063
        %v3065 = vpop.f32.mrb[0].mxu0
        %3066 = vmatprep.mubr.bf16.mxu0 0
        %3067 = vmatmul.mubr.bf16.gmra.mrb[0].mxu0 %v2312
        %v3068 = vpop.f32.mrb[0].mxu0
        %v3069 = vadd.f32 %v2780, %v3068
        %v3070 = vpop.f32.mrb[0].mxu0
        %v3071 = vpop.f32.mrb[0].mxu0
        %v3072 = vadd.f32 %v2783, %v3071
        %v3073 = vpop.f32.mrb[0].mxu0
        %3074 = vmatprep.mubr.bf16.mxu0 0
        %3075 = vmatmul.mubr.bf16.gmra.mrb[0].mxu0 %v2314
        %v3076 = vpop.f32.mrb[0].mxu0
        %v3077 = vadd.f32 %v2788, %v3076
        %v3078 = vpop.f32.mrb[0].mxu0
        %v3079 = vpop.f32.mrb[0].mxu0
        %v3080 = vadd.f32 %v2791, %v3079
        %v3081 = vpop.f32.mrb[0].mxu0
        %3082 = vmatprep.mubr.bf16.mxu0 0
        %3083 = vmatmul.mubr.bf16.gmra.mrb[0].mxu0 %v2316
        %v3084 = vpop.f32.mrb[0].mxu0
        %v3085 = vadd.f32 %v2796, %v3084
        %v3086 = vpop.f32.mrb[0].mxu0
        %v3087 = vpop.f32.mrb[0].mxu0
        %v3088 = vadd.f32 %v2799, %v3087
        %v3089 = vpop.f32.mrb[0].mxu0
        %3090 = vmatprep.mubr.bf16.mxu0 0
        %3091 = vmatmul.mubr.bf16.gmra.mrb[0].mxu0 %v2318
        %v3092 = vpop.f32.mrb[0].mxu0
        %v3093 = vadd.f32 %v2804, %v3092
        %v3094 = vpop.f32.mrb[0].mxu0
        %v3095 = vpop.f32.mrb[0].mxu0
        %v3096 = vadd.f32 %v2807, %v3095
        %v3097 = vpop.f32.mrb[0].mxu0
        %3098 = vmatprep.mubr.bf16.mxu0 0
        %3099 = vmatmul.mubr.bf16.gmra.mrb[0].mxu0 %v2320
        %v3100 = vpop.f32.mrb[0].mxu0
        %v3101 = vadd.f32 %v2812, %v3100
        %v3102 = vpop.f32.mrb[0].mxu0
        %v3103 = vpop.f32.mrb[0].mxu0
        %v3104 = vadd.f32 %v2815, %v3103
        %v3105 = vpop.f32.mrb[0].mxu0
        %3106 = vmatprep.mubr.bf16.mxu0 0
        %3107 = vmatmul.mubr.bf16.gmra.mrb[0].mxu0 %v2322
        %v3108 = vpop.f32.mrb[0].mxu0
        %v3109 = vadd.f32 %v2820, %v3108
        %v3110 = vpop.f32.mrb[0].mxu0
        %v3111 = vpop.f32.mrb[0].mxu0
        %v3112 = vadd.f32 %v2823, %v3111
        %v3113 = vpop.f32.mrb[0].mxu0
        %3114 = vmatprep.mubr.bf16.mxu0 0
        %3115 = vmatmul.mubr.bf16.gmra.mrb[0].mxu0 %v2324
        %v3116 = vpop.f32.mrb[0].mxu0
        %v3117 = vadd.f32 %v2828, %v3116
        %v3118 = vpop.f32.mrb[0].mxu0
        %v3119 = vpop.f32.mrb[0].mxu0
        %v3120 = vadd.f32 %v2831, %v3119
        %v3121 = vpop.f32.mrb[0].mxu0
        %3122 = vmatprep.mubr.bf16.mxu0 0
        %3123 = vmatmul.mubr.bf16.gmra.mrb[0].mxu0 %v2326
        %v3124 = vpop.f32.mrb[0].mxu0
        %v3125 = vadd.f32 %v2836, %v3124
        %v3126 = vpop.f32.mrb[0].mxu0
        %v3127 = vpop.f32.mrb[0].mxu0
        %v3128 = vadd.f32 %v2839, %v3127
        %v3129 = vpop.f32.mrb[0].mxu0
        %3130 = vmatprep.mubr.bf16.mxu0 0
        %3131 = vmatmul.mubr.bf16.gmra.mrb[0].mxu0 %v2328
        %v3132 = vpop.f32.mrb[0].mxu0
        %v3133 = vadd.f32 %v2844, %v3132
        %v3134 = vpop.f32.mrb[0].mxu0
        %v3135 = vpop.f32.mrb[0].mxu0
        %v3136 = vadd.f32 %v2847, %v3135
        %v3137 = vpop.f32.mrb[0].mxu0
        %3138 = vmatprep.mubr.bf16.mxu0 0
        %3139 = vmatmul.mubr.bf16.gmra.mrb[0].mxu0 %v2330
        %v3140 = vpop.f32.mrb[0].mxu0
        %v3141 = vadd.f32 %v2852, %v3140
        %v3142 = vpop.f32.mrb[0].mxu0
        %v3143 = vpop.f32.mrb[0].mxu0
        %v3144 = vadd.f32 %v2855, %v3143
        %v3145 = vpop.f32.mrb[0].mxu0
        %3146 = vmatprep.mubr.bf16.mxu0 0
        %3147 = vmatmul.mubr.bf16.gmra.mrb[0].mxu0 %v2332
        %v3148 = vpop.f32.mrb[0].mxu0
        %v3149 = vadd.f32 %v2860, %v3148
        %v3150 = vpop.f32.mrb[0].mxu0
        %v3151 = vpop.f32.mrb[0].mxu0
        %v3152 = vadd.f32 %v2863, %v3151
        %v3153 = vpop.f32.mrb[0].mxu0
        %3154 = vmatprep.mubr.bf16.mxu0 0
        %3155 = vmatmul.mubr.bf16.gmra.mrb[0].mxu0 %v2334
        %v3156 = vpop.f32.mrb[0].mxu0
        %v3157 = vadd.f32 %v2868, %v3156
        %v3158 = vpop.f32.mrb[0].mxu0
        %v3159 = vpop.f32.mrb[0].mxu0
        %v3160 = vadd.f32 %v2871, %v3159
        %v3161 = vpop.f32.mrb[0].mxu0
        %3162 = vmatprep.mubr.bf16.mxu0 0
        %3163 = vmatmul.mubr.bf16.gmra.mrb[0].mxu0 %v2337
        %v3164 = vpop.f32.mrb[0].mxu0
        %v3165 = vadd.f32 %v2876, %v3164
        %v3166 = vpop.f32.mrb[0].mxu0
        %v3167 = vpop.f32.mrb[0].mxu0
        %v3168 = vadd.f32 %v2879, %v3167
        %v3169 = vpop.f32.mrb[0].mxu0
        %3170 = vmatprep.mubr.bf16.mxu0 0
        %3171 = vmatmul.mubr.bf16.gmra.mrb[0].mxu0 %v2340
        %v3172 = vpop.f32.mrb[0].mxu0
        %v3173 = vadd.f32 %v2884, %v3172
        %v3174 = vpop.f32.mrb[0].mxu0
        %v3175 = vpop.f32.mrb[0].mxu0
        %v3176 = vadd.f32 %v2887, %v3175
        %v3177 = vpop.f32.mrb[0].mxu0
        %3178 = vmatprep.mubr.bf16.mxu0 0
        %3179 = vmatmul.mubr.bf16.gmra.mrb[0].mxu0 %v2343
        %v3180 = vpop.f32.mrb[0].mxu0
        %v3181 = vadd.f32 %v2892, %v3180
        %v3182 = vpop.f32.mrb[0].mxu0
        %v3183 = vpop.f32.mrb[0].mxu0
        %v3184 = vadd.f32 %v2895, %v3183
        %v3185 = vpop.f32.mrb[0].mxu0
        %3186 = vmatprep.mubr.bf16.mxu0 0
        %3187 = vmatmul.mubr.bf16.gmra.mrb[0].mxu0 %v2346
        %v3188 = vpop.f32.mrb[0].mxu0
        %v3189 = vadd.f32 %v2900, %v3188
        %v3190 = vpop.f32.mrb[0].mxu0
        %v3191 = vpop.f32.mrb[0].mxu0
        %v3192 = vadd.f32 %v2903, %v3191
        %v3193 = vpop.f32.mrb[0].mxu0
        %3194 = vmatprep.mubr.bf16.mxu0 0
        %3195 = vmatmul.mubr.bf16.gmra.mrb[0].mxu0 %v2349
        %v3196 = vpop.f32.mrb[0].mxu0
        %v3197 = vadd.f32 %v2908, %v3196
        %v3198 = vpop.f32.mrb[0].mxu0
        %v3199 = vpop.f32.mrb[0].mxu0
        %v3200 = vadd.f32 %v2911, %v3199
        %v3201 = vpop.f32.mrb[0].mxu0
        %3202 = vmatprep.mubr.bf16.mxu0 0
        %3203 = vmatmul.mubr.bf16.gmra.mrb[0].mxu0 %v2352
        %v3204 = vpop.f32.mrb[0].mxu0
        %v3205 = vadd.f32 %v2916, %v3204
        %v3206 = vpop.f32.mrb[0].mxu0
        %v3207 = vpop.f32.mrb[0].mxu0
        %v3208 = vadd.f32 %v2919, %v3207
        %v3209 = vpop.f32.mrb[0].mxu0
        %3210 = vmatprep.mubr.bf16.mxu0 0
        %3211 = vmatmul.mubr.bf16.gmra.mrb[0].mxu0 %v2355
        %v3212 = vpop.f32.mrb[0].mxu0
        %v3213 = vadd.f32 %v2924, %v3212
        %v3214 = vpop.f32.mrb[0].mxu0
        %v3215 = vpop.f32.mrb[0].mxu0
        %v3216 = vadd.f32 %v2927, %v3215
        %v3217 = vpop.f32.mrb[0].mxu0
        %3218 = vmatprep.mubr.bf16.mxu0 0
        %3219 = vmatmul.mubr.bf16.gmra.mrb[0].mxu0 %v2358
        %v3220 = vpop.f32.mrb[0].mxu0
        %v3221 = vadd.f32 %v2932, %v3220
        %v3222 = vpop.f32.mrb[0].mxu0
        %v3223 = vpop.f32.mrb[0].mxu0
        %v3224 = vadd.f32 %v2935, %v3223
        %v3225 = vpop.f32.mrb[0].mxu0
        %3226 = vdwg.mxu0
        %v3227 = vmax.f32 %v2973, 0.0
        %v3228 = vmax.f32 %v2976, 0.0
        %v3229 = vmax.f32 %v2981, 0.0
        %v3230 = vmax.f32 %v2984, 0.0
        %v3231 = vmax.f32 %v2989, 0.0
        %v3232 = vmax.f32 %v2992, 0.0
        %v3233 = vmax.f32 %v2997, 0.0
        %v3234 = vmax.f32 %v3000, 0.0
        %v3235 = vmax.f32 %v3005, 0.0
        %v3236 = vmax.f32 %v3008, 0.0
        %v3237 = vmax.f32 %v3013, 0.0
        %v3238 = vmax.f32 %v3016, 0.0
        %v3239 = vmax.f32 %v3021, 0.0
        %v3240 = vmax.f32 %v3024, 0.0
        %v3241 = vmax.f32 %v3029, 0.0
        %v3242 = vmax.f32 %v3032, 0.0
        %v3243 = vmax.f32 %v3037, 0.0
        %v3244 = vmax.f32 %v3040, 0.0
        %v3245 = vmax.f32 %v3045, 0.0
        %v3246 = vmax.f32 %v3048, 0.0
        %v3247 = vmax.f32 %v3053, 0.0
        %v3248 = vmax.f32 %v3056, 0.0
        %v3249 = vmax.f32 %v3061, 0.0
        %v3250 = vmax.f32 %v3064, 0.0
        %v3251 = vmax.f32 %v3069, 0.0
        %v3252 = vmax.f32 %v3072, 0.0
        %v3253 = vmax.f32 %v3077, 0.0
        %v3254 = vmax.f32 %v3080, 0.0
        %v3255 = vmax.f32 %v3085, 0.0
        %v3256 = vmax.f32 %v3088, 0.0
        %v3257 = vmax.f32 %v3093, 0.0
        %v3258 = vmax.f32 %v3096, 0.0
        %v3259 = vmax.f32 %v3101, 0.0
        %v3260 = vmax.f32 %v3104, 0.0
        %v3261 = vmax.f32 %v3109, 0.0
        %v3262 = vmax.f32 %v3112, 0.0
        %v3263 = vmax.f32 %v3117, 0.0
        %v3264 = vmax.f32 %v3120, 0.0
        %v3265 = vmax.f32 %v3125, 0.0
        %v3266 = vmax.f32 %v3128, 0.0
        %v3267 = vmax.f32 %v3133, 0.0
        %v3268 = vmax.f32 %v3136, 0.0
        %v3269 = vmax.f32 %v3141, 0.0
        %v3270 = vmax.f32 %v3144, 0.0
        %v3271 = vmax.f32 %v3149, 0.0
        %v3272 = vmax.f32 %v3152, 0.0
        %v3273 = vmax.f32 %v3157, 0.0
        %v3274 = vmax.f32 %v3160, 0.0
        %v3275 = vmax.f32 %v3165, 0.0
        %v3276 = vmax.f32 %v3168, 0.0
        %v3277 = vmax.f32 %v3173, 0.0
        %v3278 = vmax.f32 %v3176, 0.0
        %v3279 = vmax.f32 %v3181, 0.0
        %v3280 = vmax.f32 %v3184, 0.0
        %v3281 = vmax.f32 %v3189, 0.0
        %v3282 = vmax.f32 %v3192, 0.0
        %v3283 = vmax.f32 %v3197, 0.0
        %v3284 = vmax.f32 %v3200, 0.0
        %v3285 = vmax.f32 %v3205, 0.0
        %v3286 = vmax.f32 %v3208, 0.0
        %v3287 = vmax.f32 %v3213, 0.0
        %v3288 = vmax.f32 %v3216, 0.0
        %v3289 = vmax.f32 %v3221, 0.0
        %v3290 = vmax.f32 %v3224, 0.0
        %v3291 = vpack.c.bf16 %v3228, %v3227
        %v3292 = vpack.c.bf16 %v3230, %v3229
        %v3293 = vpack.c.bf16 %v3232, %v3231
        %v3294 = vpack.c.bf16 %v3234, %v3233
        %v3295 = vpack.c.bf16 %v3236, %v3235
        %v3296 = vpack.c.bf16 %v3238, %v3237
        %v3297 = vpack.c.bf16 %v3240, %v3239
        %v3298 = vpack.c.bf16 %v3242, %v3241
        %v3299 = vpack.c.bf16 %v3244, %v3243
        %v3300 = vpack.c.bf16 %v3246, %v3245
        %v3301 = vpack.c.bf16 %v3248, %v3247
        %v3302 = vpack.c.bf16 %v3250, %v3249
        %v3303 = vpack.c.bf16 %v3252, %v3251
        %v3304 = vpack.c.bf16 %v3254, %v3253
        %v3305 = vpack.c.bf16 %v3256, %v3255
        %v3306 = vpack.c.bf16 %v3258, %v3257
        %v3307 = vpack.c.bf16 %v3260, %v3259
        %v3308 = vpack.c.bf16 %v3262, %v3261
        %v3309 = vpack.c.bf16 %v3264, %v3263
        %v3310 = vpack.c.bf16 %v3266, %v3265
        %v3311 = vpack.c.bf16 %v3268, %v3267
        %v3312 = vpack.c.bf16 %v3270, %v3269
        %v3313 = vpack.c.bf16 %v3272, %v3271
        %v3314 = vpack.c.bf16 %v3274, %v3273
        %v3315 = vpack.c.bf16 %v3276, %v3275
        %v3316 = vpack.c.bf16 %v3278, %v3277
        %v3317 = vpack.c.bf16 %v3280, %v3279
        %v3318 = vpack.c.bf16 %v3282, %v3281
        %v3319 = vpack.c.bf16 %v3284, %v3283
        %v3320 = vpack.c.bf16 %v3286, %v3285
        %v3321 = vpack.c.bf16 %v3288, %v3287
        %v3322 = vpack.c.bf16 %v3290, %v3289
        %v3323 = vld [vmem:[%s4] sm:$0xf]
        %v3324 = vld [vmem:[%s4 + $0x4] sm:$0xf]
        %v3325 = vld [vmem:[%s4 + $0x8] sm:$0xf]
        %v3326 = vld [vmem:[%s4 + $0xc] sm:$0xf]
        %v3327 = vld [vmem:[%s4 + $0x10] sm:$0xf]
        %v3328 = vld [vmem:[%s4 + $0x14] sm:$0xf]
        %v3329 = vld [vmem:[%s4 + $0x18] sm:$0xf]
        %v3330 = vld [vmem:[%s4 + $0x1c] sm:$0xf]
        %v3331 = vld [vmem:[%s5] sm:$0x1]
        %v3333 = vlaneseq
        %v3334 = vshrl.u32 %v3333, 7
        %v3335 = vsub.s32 0, %v3334
        %v3336 = vrot.slane %v3331, %v3335
        %v3346 = vunpack.c.l.b16 %v3323
        %v3347 = vunpack.c.l.b16 %v3324
        %v3348 = vunpack.c.l.b16 %v3325
        %v3349 = vunpack.c.l.b16 %v3326
        %v3350 = vunpack.c.l.b16 %v3327
        %v3351 = vunpack.c.l.b16 %v3328
        %v3352 = vunpack.c.l.b16 %v3329
        %v3353 = vunpack.c.l.b16 %v3330
        %v3354 = vpack.c.b16 %v3347, %v3346
        %v3355 = vpack.c.b16 %v3349, %v3348
        %v3356 = vpack.c.b16 %v3351, %v3350
        %v3357 = vpack.c.b16 %v3353, %v3352
        %v3363 = vsel %vm1576, %v3291, 0
        %v3366 = vsel %vm1576, %v3292, 0
        %v3369 = vsel %vm1576, %v3293, 0
        %v3372 = vsel %vm1576, %v3294, 0
        %v3375 = vsel %vm1576, %v3295, 0
        %v3378 = vsel %vm1576, %v3296, 0
        %v3381 = vsel %vm1576, %v3297, 0
        %v3384 = vsel %vm1576, %v3298, 0
        %v3387 = vsel %vm1576, %v3299, 0
        %v3390 = vsel %vm1576, %v3300, 0
        %v3393 = vsel %vm1576, %v3301, 0
        %v3396 = vsel %vm1576, %v3302, 0
        %v3399 = vsel %vm1576, %v3303, 0
        %v3402 = vsel %vm1576, %v3304, 0
        %v3405 = vsel %vm1576, %v3305, 0
        %v3408 = vsel %vm1576, %v3306, 0
        %v3411 = vsel %vm1576, %v3307, 0
        %v3414 = vsel %vm1576, %v3308, 0
        %v3417 = vsel %vm1576, %v3309, 0
        %v3420 = vsel %vm1576, %v3310, 0
        %v3423 = vsel %vm1576, %v3311, 0
        %v3426 = vsel %vm1576, %v3312, 0
        %v3429 = vsel %vm1576, %v3313, 0
        %v3432 = vsel %vm1576, %v3314, 0
        %v3435 = vsel %vm1576, %v3315, 0
        %v3438 = vsel %vm1576, %v3316, 0
        %v3441 = vsel %vm1576, %v3317, 0
        %v3444 = vsel %vm1576, %v3318, 0
        %v3447 = vsel %vm1576, %v3319, 0
        %v3450 = vsel %vm1576, %v3320, 0
        %v3453 = vsel %vm1576, %v3321, 0
        %v3456 = vsel %vm1576, %v3322, 0
        %3458 = vmatprep.subr.bf16.mxu0 0
        %3459 = vmatpush1.bf16.msra.mxu0 %v3354
        %3460 = vmatprep.subr.bf16.mxu0 0
        %3461 = vmatpush1.bf16.msra.mxu0 %v3355
        %3462 = vmatprep.subr.bf16.mxu0 0
        %3463 = vmatpush1.bf16.msra.mxu0 %v3356
        %3464 = vmatprep.subr.bf16.mxu0 0
        %3465 = vmatpush1.bf16.msra.mxu0 %v3357
        %3466 = vmatprep.subr.bf16.mxu0 0
        %3467 = vmatpush1.bf16.msra.mxu0 0
        %3468 = vmatprep.subr.bf16.mxu0 0
        %3469 = vmatpush1.bf16.msra.mxu0 0
        %3470 = vmatprep.subr.bf16.mxu0 0
        %3471 = vmatpush1.bf16.msra.mxu0 0
        %3472 = vmatprep.subr.bf16.mxu0 0
        %3473 = vmatpush1.bf16.msra.mxu0 0
        %3474 = vmatprep.subr.bf16.mxu0 0
        %3475 = vmatpush1.bf16.msra.mxu0 0
        %3476 = vmatprep.subr.bf16.mxu0 0
        %3477 = vmatpush1.bf16.msra.mxu0 0
        %3478 = vmatprep.subr.bf16.mxu0 0
        %3479 = vmatpush1.bf16.msra.mxu0 0
        %3480 = vmatprep.subr.bf16.mxu0 0
        %3481 = vmatpush1.bf16.msra.mxu0 0
        %3482 = vmatprep.subr.bf16.mxu0 0
        %3483 = vmatpush1.bf16.msra.mxu0 0
        %3484 = vmatprep.subr.bf16.mxu0 0
        %3485 = vmatpush1.bf16.msra.mxu0 0
        %3486 = vmatprep.subr.bf16.mxu0 0
        %3487 = vmatpush1.bf16.msra.mxu0 0
        %3488 = vmatprep.subr.bf16.mxu0 0
        %3489 = vmatpush1.bf16.msra.mxu0 0
        %3490 = vmatprep.mubr.bf16.mxu0 0
        %3491 = vmatmul.mubr.bf16.gmra.mrb[0].mxu0 %v3363
        %v3492 = vpop.f32.mrb[0].mxu0
        %v3493 = vadd.f32 %v3336, %v3492
        %v3494 = vpop.f32.mrb[0].mxu0
        %v3495 = vpop.f32.mrb[0].mxu0
        %v3496 = vadd.f32 %v3336, %v3495
        %v3497 = vpop.f32.mrb[0].mxu0
        %3498 = vmatprep.mubr.bf16.mxu0 0
        %3499 = vmatmul.mubr.bf16.gmra.mrb[0].mxu0 %v3366
        %v3500 = vpop.f32.mrb[0].mxu0
        %v3501 = vadd.f32 %v3336, %v3500
        %v3502 = vpop.f32.mrb[0].mxu0
        %v3503 = vpop.f32.mrb[0].mxu0
        %v3504 = vadd.f32 %v3336, %v3503
        %v3505 = vpop.f32.mrb[0].mxu0
        %3506 = vmatprep.mubr.bf16.mxu0 0
        %3507 = vmatmul.mubr.bf16.gmra.mrb[0].mxu0 %v3369
        %v3508 = vpop.f32.mrb[0].mxu0
        %v3509 = vadd.f32 %v3336, %v3508
        %v3510 = vpop.f32.mrb[0].mxu0
        %v3511 = vpop.f32.mrb[0].mxu0
        %v3512 = vadd.f32 %v3336, %v3511
        %v3513 = vpop.f32.mrb[0].mxu0
        %3514 = vmatprep.mubr.bf16.mxu0 0
        %3515 = vmatmul.mubr.bf16.gmra.mrb[0].mxu0 %v3372
        %v3516 = vpop.f32.mrb[0].mxu0
        %v3517 = vadd.f32 %v3336, %v3516
        %v3518 = vpop.f32.mrb[0].mxu0
        %v3519 = vpop.f32.mrb[0].mxu0
        %v3520 = vadd.f32 %v3336, %v3519
        %v3521 = vpop.f32.mrb[0].mxu0
        %3522 = vmatprep.mubr.bf16.mxu0 0
        %3523 = vmatmul.mubr.bf16.gmra.mrb[0].mxu0 %v3375
        %v3524 = vpop.f32.mrb[0].mxu0
        %v3525 = vadd.f32 %v3336, %v3524
        %v3526 = vpop.f32.mrb[0].mxu0
        %v3527 = vpop.f32.mrb[0].mxu0
        %v3528 = vadd.f32 %v3336, %v3527
        %v3529 = vpop.f32.mrb[0].mxu0
        %3530 = vmatprep.mubr.bf16.mxu0 0
        %3531 = vmatmul.mubr.bf16.gmra.mrb[0].mxu0 %v3378
        %v3532 = vpop.f32.mrb[0].mxu0
        %v3533 = vadd.f32 %v3336, %v3532
        %v3534 = vpop.f32.mrb[0].mxu0
        %v3535 = vpop.f32.mrb[0].mxu0
        %v3536 = vadd.f32 %v3336, %v3535
        %v3537 = vpop.f32.mrb[0].mxu0
        %3538 = vmatprep.mubr.bf16.mxu0 0
        %3539 = vmatmul.mubr.bf16.gmra.mrb[0].mxu0 %v3381
        %v3540 = vpop.f32.mrb[0].mxu0
        %v3541 = vadd.f32 %v3336, %v3540
        %v3542 = vpop.f32.mrb[0].mxu0
        %v3543 = vpop.f32.mrb[0].mxu0
        %v3544 = vadd.f32 %v3336, %v3543
        %v3545 = vpop.f32.mrb[0].mxu0
        %3546 = vmatprep.mubr.bf16.mxu0 0
        %3547 = vmatmul.mubr.bf16.gmra.mrb[0].mxu0 %v3384
        %v3548 = vpop.f32.mrb[0].mxu0
        %v3549 = vadd.f32 %v3336, %v3548
        %v3550 = vpop.f32.mrb[0].mxu0
        %v3551 = vpop.f32.mrb[0].mxu0
        %v3552 = vadd.f32 %v3336, %v3551
        %v3553 = vpop.f32.mrb[0].mxu0
        %3554 = vmatprep.mubr.bf16.mxu0 0
        %3555 = vmatmul.mubr.bf16.gmra.mrb[0].mxu0 %v3387
        %v3556 = vpop.f32.mrb[0].mxu0
        %v3557 = vadd.f32 %v3336, %v3556
        %v3558 = vpop.f32.mrb[0].mxu0
        %v3559 = vpop.f32.mrb[0].mxu0
        %v3560 = vadd.f32 %v3336, %v3559
        %v3561 = vpop.f32.mrb[0].mxu0
        %3562 = vmatprep.mubr.bf16.mxu0 0
        %3563 = vmatmul.mubr.bf16.gmra.mrb[0].mxu0 %v3390
        %v3564 = vpop.f32.mrb[0].mxu0
        %v3565 = vadd.f32 %v3336, %v3564
        %v3566 = vpop.f32.mrb[0].mxu0
        %v3567 = vpop.f32.mrb[0].mxu0
        %v3568 = vadd.f32 %v3336, %v3567
        %v3569 = vpop.f32.mrb[0].mxu0
        %3570 = vmatprep.mubr.bf16.mxu0 0
        %3571 = vmatmul.mubr.bf16.gmra.mrb[0].mxu0 %v3393
        %v3572 = vpop.f32.mrb[0].mxu0
        %v3573 = vadd.f32 %v3336, %v3572
        %v3574 = vpop.f32.mrb[0].mxu0
        %v3575 = vpop.f32.mrb[0].mxu0
        %v3576 = vadd.f32 %v3336, %v3575
        %v3577 = vpop.f32.mrb[0].mxu0
        %3578 = vmatprep.mubr.bf16.mxu0 0
        %3579 = vmatmul.mubr.bf16.gmra.mrb[0].mxu0 %v3396
        %v3580 = vpop.f32.mrb[0].mxu0
        %v3581 = vadd.f32 %v3336, %v3580
        %v3582 = vpop.f32.mrb[0].mxu0
        %v3583 = vpop.f32.mrb[0].mxu0
        %v3584 = vadd.f32 %v3336, %v3583
        %v3585 = vpop.f32.mrb[0].mxu0
        %3586 = vmatprep.mubr.bf16.mxu0 0
        %3587 = vmatmul.mubr.bf16.gmra.mrb[0].mxu0 %v3399
        %v3588 = vpop.f32.mrb[0].mxu0
        %v3589 = vadd.f32 %v3336, %v3588
        %v3590 = vpop.f32.mrb[0].mxu0
        %v3591 = vpop.f32.mrb[0].mxu0
        %v3592 = vadd.f32 %v3336, %v3591
        %v3593 = vpop.f32.mrb[0].mxu0
        %3594 = vmatprep.mubr.bf16.mxu0 0
        %3595 = vmatmul.mubr.bf16.gmra.mrb[0].mxu0 %v3402
        %v3596 = vpop.f32.mrb[0].mxu0
        %v3597 = vadd.f32 %v3336, %v3596
        %v3598 = vpop.f32.mrb[0].mxu0
        %v3599 = vpop.f32.mrb[0].mxu0
        %v3600 = vadd.f32 %v3336, %v3599
        %v3601 = vpop.f32.mrb[0].mxu0
        %3602 = vmatprep.mubr.bf16.mxu0 0
        %3603 = vmatmul.mubr.bf16.gmra.mrb[0].mxu0 %v3405
        %v3604 = vpop.f32.mrb[0].mxu0
        %v3605 = vadd.f32 %v3336, %v3604
        %v3606 = vpop.f32.mrb[0].mxu0
        %v3607 = vpop.f32.mrb[0].mxu0
        %v3608 = vadd.f32 %v3336, %v3607
        %v3609 = vpop.f32.mrb[0].mxu0
        %3610 = vmatprep.mubr.bf16.mxu0 0
        %3611 = vmatmul.mubr.bf16.gmra.mrb[0].mxu0 %v3408
        %v3612 = vpop.f32.mrb[0].mxu0
        %v3613 = vadd.f32 %v3336, %v3612
        %v3614 = vpop.f32.mrb[0].mxu0
        %v3615 = vpop.f32.mrb[0].mxu0
        %v3616 = vadd.f32 %v3336, %v3615
        %v3617 = vpop.f32.mrb[0].mxu0
        %3618 = vmatprep.mubr.bf16.mxu0 0
        %3619 = vmatmul.mubr.bf16.gmra.mrb[0].mxu0 %v3411
        %v3620 = vpop.f32.mrb[0].mxu0
        %v3621 = vadd.f32 %v3336, %v3620
        %v3622 = vpop.f32.mrb[0].mxu0
        %v3623 = vpop.f32.mrb[0].mxu0
        %v3624 = vadd.f32 %v3336, %v3623
        %v3625 = vpop.f32.mrb[0].mxu0
        %3626 = vmatprep.mubr.bf16.mxu0 0
        %3627 = vmatmul.mubr.bf16.gmra.mrb[0].mxu0 %v3414
        %v3628 = vpop.f32.mrb[0].mxu0
        %v3629 = vadd.f32 %v3336, %v3628
        %v3630 = vpop.f32.mrb[0].mxu0
        %v3631 = vpop.f32.mrb[0].mxu0
        %v3632 = vadd.f32 %v3336, %v3631
        %v3633 = vpop.f32.mrb[0].mxu0
        %3634 = vmatprep.mubr.bf16.mxu0 0
        %3635 = vmatmul.mubr.bf16.gmra.mrb[0].mxu0 %v3417
        %v3636 = vpop.f32.mrb[0].mxu0
        %v3637 = vadd.f32 %v3336, %v3636
        %v3638 = vpop.f32.mrb[0].mxu0
        %v3639 = vpop.f32.mrb[0].mxu0
        %v3640 = vadd.f32 %v3336, %v3639
        %v3641 = vpop.f32.mrb[0].mxu0
        %3642 = vmatprep.mubr.bf16.mxu0 0
        %3643 = vmatmul.mubr.bf16.gmra.mrb[0].mxu0 %v3420
        %v3644 = vpop.f32.mrb[0].mxu0
        %v3645 = vadd.f32 %v3336, %v3644
        %v3646 = vpop.f32.mrb[0].mxu0
        %v3647 = vpop.f32.mrb[0].mxu0
        %v3648 = vadd.f32 %v3336, %v3647
        %v3649 = vpop.f32.mrb[0].mxu0
        %3650 = vmatprep.mubr.bf16.mxu0 0
        %3651 = vmatmul.mubr.bf16.gmra.mrb[0].mxu0 %v3423
        %v3652 = vpop.f32.mrb[0].mxu0
        %v3653 = vadd.f32 %v3336, %v3652
        %v3654 = vpop.f32.mrb[0].mxu0
        %v3655 = vpop.f32.mrb[0].mxu0
        %v3656 = vadd.f32 %v3336, %v3655
        %v3657 = vpop.f32.mrb[0].mxu0
        %3658 = vmatprep.mubr.bf16.mxu0 0
        %3659 = vmatmul.mubr.bf16.gmra.mrb[0].mxu0 %v3426
        %v3660 = vpop.f32.mrb[0].mxu0
        %v3661 = vadd.f32 %v3336, %v3660
        %v3662 = vpop.f32.mrb[0].mxu0
        %v3663 = vpop.f32.mrb[0].mxu0
        %v3664 = vadd.f32 %v3336, %v3663
        %v3665 = vpop.f32.mrb[0].mxu0
        %3666 = vmatprep.mubr.bf16.mxu0 0
        %3667 = vmatmul.mubr.bf16.gmra.mrb[0].mxu0 %v3429
        %v3668 = vpop.f32.mrb[0].mxu0
        %v3669 = vadd.f32 %v3336, %v3668
        %v3670 = vpop.f32.mrb[0].mxu0
        %v3671 = vpop.f32.mrb[0].mxu0
        %v3672 = vadd.f32 %v3336, %v3671
        %v3673 = vpop.f32.mrb[0].mxu0
        %3674 = vmatprep.mubr.bf16.mxu0 0
        %3675 = vmatmul.mubr.bf16.gmra.mrb[0].mxu0 %v3432
        %v3676 = vpop.f32.mrb[0].mxu0
        %v3677 = vadd.f32 %v3336, %v3676
        %v3678 = vpop.f32.mrb[0].mxu0
        %v3679 = vpop.f32.mrb[0].mxu0
        %v3680 = vadd.f32 %v3336, %v3679
        %v3681 = vpop.f32.mrb[0].mxu0
        %3682 = vmatprep.mubr.bf16.mxu0 0
        %3683 = vmatmul.mubr.bf16.gmra.mrb[0].mxu0 %v3435
        %v3684 = vpop.f32.mrb[0].mxu0
        %v3685 = vadd.f32 %v3336, %v3684
        %v3686 = vpop.f32.mrb[0].mxu0
        %v3687 = vpop.f32.mrb[0].mxu0
        %v3688 = vadd.f32 %v3336, %v3687
        %v3689 = vpop.f32.mrb[0].mxu0
        %3690 = vmatprep.mubr.bf16.mxu0 0
        %3691 = vmatmul.mubr.bf16.gmra.mrb[0].mxu0 %v3438
        %v3692 = vpop.f32.mrb[0].mxu0
        %v3693 = vadd.f32 %v3336, %v3692
        %v3694 = vpop.f32.mrb[0].mxu0
        %v3695 = vpop.f32.mrb[0].mxu0
        %v3696 = vadd.f32 %v3336, %v3695
        %v3697 = vpop.f32.mrb[0].mxu0
        %3698 = vmatprep.mubr.bf16.mxu0 0
        %3699 = vmatmul.mubr.bf16.gmra.mrb[0].mxu0 %v3441
        %v3700 = vpop.f32.mrb[0].mxu0
        %v3701 = vadd.f32 %v3336, %v3700
        %v3702 = vpop.f32.mrb[0].mxu0
        %v3703 = vpop.f32.mrb[0].mxu0
        %v3704 = vadd.f32 %v3336, %v3703
        %v3705 = vpop.f32.mrb[0].mxu0
        %3706 = vmatprep.mubr.bf16.mxu0 0
        %3707 = vmatmul.mubr.bf16.gmra.mrb[0].mxu0 %v3444
        %v3708 = vpop.f32.mrb[0].mxu0
        %v3709 = vadd.f32 %v3336, %v3708
        %v3710 = vpop.f32.mrb[0].mxu0
        %v3711 = vpop.f32.mrb[0].mxu0
        %v3712 = vadd.f32 %v3336, %v3711
        %v3713 = vpop.f32.mrb[0].mxu0
        %3714 = vmatprep.mubr.bf16.mxu0 0
        %3715 = vmatmul.mubr.bf16.gmra.mrb[0].mxu0 %v3447
        %v3716 = vpop.f32.mrb[0].mxu0
        %v3717 = vadd.f32 %v3336, %v3716
        %v3718 = vpop.f32.mrb[0].mxu0
        %v3719 = vpop.f32.mrb[0].mxu0
        %v3720 = vadd.f32 %v3336, %v3719
        %v3721 = vpop.f32.mrb[0].mxu0
        %3722 = vmatprep.mubr.bf16.mxu0 0
        %3723 = vmatmul.mubr.bf16.gmra.mrb[0].mxu0 %v3450
        %v3724 = vpop.f32.mrb[0].mxu0
        %v3725 = vadd.f32 %v3336, %v3724
        %v3726 = vpop.f32.mrb[0].mxu0
        %v3727 = vpop.f32.mrb[0].mxu0
        %v3728 = vadd.f32 %v3336, %v3727
        %v3729 = vpop.f32.mrb[0].mxu0
        %3730 = vmatprep.mubr.bf16.mxu0 0
        %3731 = vmatmul.mubr.bf16.gmra.mrb[0].mxu0 %v3453
        %v3732 = vpop.f32.mrb[0].mxu0
        %v3733 = vadd.f32 %v3336, %v3732
        %v3734 = vpop.f32.mrb[0].mxu0
        %v3735 = vpop.f32.mrb[0].mxu0
        %v3736 = vadd.f32 %v3336, %v3735
        %v3737 = vpop.f32.mrb[0].mxu0
        %3738 = vmatprep.mubr.bf16.mxu0 0
        %3739 = vmatmul.mubr.bf16.gmra.mrb[0].mxu0 %v3456
        %v3740 = vpop.f32.mrb[0].mxu0
        %v3741 = vadd.f32 %v3336, %v3740
        %v3742 = vpop.f32.mrb[0].mxu0
        %v3743 = vpop.f32.mrb[0].mxu0
        %v3744 = vadd.f32 %v3336, %v3743
        %v3745 = vpop.f32.mrb[0].mxu0
        %3746 = vdwg.mxu0
        %v3747 = vpack.c.bf16 %v3496, %v3493
        %v3748 = vpack.c.bf16 %v3504, %v3501
        %v3749 = vpack.c.bf16 %v3512, %v3509
        %v3750 = vpack.c.bf16 %v3520, %v3517
        %v3751 = vpack.c.bf16 %v3528, %v3525
        %v3752 = vpack.c.bf16 %v3536, %v3533
        %v3753 = vpack.c.bf16 %v3544, %v3541
        %v3754 = vpack.c.bf16 %v3552, %v3549
        %v3755 = vpack.c.bf16 %v3560, %v3557
        %v3756 = vpack.c.bf16 %v3568, %v3565
        %v3757 = vpack.c.bf16 %v3576, %v3573
        %v3758 = vpack.c.bf16 %v3584, %v3581
        %v3759 = vpack.c.bf16 %v3592, %v3589
        %v3760 = vpack.c.bf16 %v3600, %v3597
        %v3761 = vpack.c.bf16 %v3608, %v3605
        %v3762 = vpack.c.bf16 %v3616, %v3613
        %v3763 = vpack.c.bf16 %v3624, %v3621
        %v3764 = vpack.c.bf16 %v3632, %v3629
        %v3765 = vpack.c.bf16 %v3640, %v3637
        %v3766 = vpack.c.bf16 %v3648, %v3645
        %v3767 = vpack.c.bf16 %v3656, %v3653
        %v3768 = vpack.c.bf16 %v3664, %v3661
        %v3769 = vpack.c.bf16 %v3672, %v3669
        %v3770 = vpack.c.bf16 %v3680, %v3677
        %v3771 = vpack.c.bf16 %v3688, %v3685
        %v3772 = vpack.c.bf16 %v3696, %v3693
        %v3773 = vpack.c.bf16 %v3704, %v3701
        %v3774 = vpack.c.bf16 %v3712, %v3709
        %v3775 = vpack.c.bf16 %v3720, %v3717
        %v3776 = vpack.c.bf16 %v3728, %v3725
        %v3777 = vpack.c.bf16 %v3736, %v3733
        %v3778 = vpack.c.bf16 %v3744, %v3741
        %v3811 = vunpack.c.l.b16 %v3747
        %v3812 = vunpack.c.h.b16 %v3747
        %v3813 = vunpack.c.l.b16 %v3748
        %v3814 = vunpack.c.h.b16 %v3748
        %v3815 = vunpack.c.l.b16 %v3749
        %v3816 = vunpack.c.h.b16 %v3749
        %v3817 = vunpack.c.l.b16 %v3750
        %v3818 = vunpack.c.h.b16 %v3750
        %v3819 = vunpack.c.l.b16 %v3751
        %v3820 = vunpack.c.h.b16 %v3751
        %v3821 = vunpack.c.l.b16 %v3752
        %v3822 = vunpack.c.h.b16 %v3752
        %v3823 = vunpack.c.l.b16 %v3753
        %v3824 = vunpack.c.h.b16 %v3753
        %v3825 = vunpack.c.l.b16 %v3754
        %v3826 = vunpack.c.h.b16 %v3754
        %v3827 = vunpack.c.l.b16 %v3755
        %v3828 = vunpack.c.h.b16 %v3755
        %v3829 = vunpack.c.l.b16 %v3756
        %v3830 = vunpack.c.h.b16 %v3756
        %v3831 = vunpack.c.l.b16 %v3757
        %v3832 = vunpack.c.h.b16 %v3757
        %v3833 = vunpack.c.l.b16 %v3758
        %v3834 = vunpack.c.h.b16 %v3758
        %v3835 = vunpack.c.l.b16 %v3759
        %v3836 = vunpack.c.h.b16 %v3759
        %v3837 = vunpack.c.l.b16 %v3760
        %v3838 = vunpack.c.h.b16 %v3760
        %v3839 = vunpack.c.l.b16 %v3761
        %v3840 = vunpack.c.h.b16 %v3761
        %v3841 = vunpack.c.l.b16 %v3762
        %v3842 = vunpack.c.h.b16 %v3762
        %v3843 = vunpack.c.l.b16 %v3763
        %v3844 = vunpack.c.h.b16 %v3763
        %v3845 = vunpack.c.l.b16 %v3764
        %v3846 = vunpack.c.h.b16 %v3764
        %v3847 = vunpack.c.l.b16 %v3765
        %v3848 = vunpack.c.h.b16 %v3765
        %v3849 = vunpack.c.l.b16 %v3766
        %v3850 = vunpack.c.h.b16 %v3766
        %v3851 = vunpack.c.l.b16 %v3767
        %v3852 = vunpack.c.h.b16 %v3767
        %v3853 = vunpack.c.l.b16 %v3768
        %v3854 = vunpack.c.h.b16 %v3768
        %v3855 = vunpack.c.l.b16 %v3769
        %v3856 = vunpack.c.h.b16 %v3769
        %v3857 = vunpack.c.l.b16 %v3770
        %v3858 = vunpack.c.h.b16 %v3770
        %v3859 = vunpack.c.l.b16 %v3771
        %v3860 = vunpack.c.h.b16 %v3771
        %v3861 = vunpack.c.l.b16 %v3772
        %v3862 = vunpack.c.h.b16 %v3772
        %v3863 = vunpack.c.l.b16 %v3773
        %v3864 = vunpack.c.h.b16 %v3773
        %v3865 = vunpack.c.l.b16 %v3774
        %v3866 = vunpack.c.h.b16 %v3774
        %v3867 = vunpack.c.l.b16 %v3775
        %v3868 = vunpack.c.h.b16 %v3775
        %v3869 = vunpack.c.l.b16 %v3776
        %v3870 = vunpack.c.h.b16 %v3776
        %v3871 = vunpack.c.l.b16 %v3777
        %v3872 = vunpack.c.h.b16 %v3777
        %v3873 = vunpack.c.l.b16 %v3778
        %v3874 = vunpack.c.h.b16 %v3778
        %v3875 = vpack.c.b16 %v3811, %v3811
        %v3876 = vpack.c.b16 %v3812, %v3812
        %v3877 = vpack.c.b16 %v3813, %v3813
        %v3878 = vpack.c.b16 %v3814, %v3814
        %v3879 = vpack.c.b16 %v3815, %v3815
        %v3880 = vpack.c.b16 %v3816, %v3816
        %v3881 = vpack.c.b16 %v3817, %v3817
        %v3882 = vpack.c.b16 %v3818, %v3818
        %v3883 = vpack.c.b16 %v3819, %v3819
        %v3884 = vpack.c.b16 %v3820, %v3820
        %v3885 = vpack.c.b16 %v3821, %v3821
        %v3886 = vpack.c.b16 %v3822, %v3822
        %v3887 = vpack.c.b16 %v3823, %v3823
        %v3888 = vpack.c.b16 %v3824, %v3824
        %v3889 = vpack.c.b16 %v3825, %v3825
        %v3890 = vpack.c.b16 %v3826, %v3826
        %v3891 = vpack.c.b16 %v3827, %v3827
        %v3892 = vpack.c.b16 %v3828, %v3828
        %v3893 = vpack.c.b16 %v3829, %v3829
        %v3894 = vpack.c.b16 %v3830, %v3830
        %v3895 = vpack.c.b16 %v3831, %v3831
        %v3896 = vpack.c.b16 %v3832, %v3832
        %v3897 = vpack.c.b16 %v3833, %v3833
        %v3898 = vpack.c.b16 %v3834, %v3834
        %v3899 = vpack.c.b16 %v3835, %v3835
        %v3900 = vpack.c.b16 %v3836, %v3836
        %v3901 = vpack.c.b16 %v3837, %v3837
        %v3902 = vpack.c.b16 %v3838, %v3838
        %v3903 = vpack.c.b16 %v3839, %v3839
        %v3904 = vpack.c.b16 %v3840, %v3840
        %v3905 = vpack.c.b16 %v3841, %v3841
        %v3906 = vpack.c.b16 %v3842, %v3842
        %v3907 = vpack.c.b16 %v3843, %v3843
        %v3908 = vpack.c.b16 %v3844, %v3844
        %v3909 = vpack.c.b16 %v3845, %v3845
        %v3910 = vpack.c.b16 %v3846, %v3846
        %v3911 = vpack.c.b16 %v3847, %v3847
        %v3912 = vpack.c.b16 %v3848, %v3848
        %v3913 = vpack.c.b16 %v3849, %v3849
        %v3914 = vpack.c.b16 %v3850, %v3850
        %v3915 = vpack.c.b16 %v3851, %v3851
        %v3916 = vpack.c.b16 %v3852, %v3852
        %v3917 = vpack.c.b16 %v3853, %v3853
        %v3918 = vpack.c.b16 %v3854, %v3854
        %v3919 = vpack.c.b16 %v3855, %v3855
        %v3920 = vpack.c.b16 %v3856, %v3856
        %v3921 = vpack.c.b16 %v3857, %v3857
        %v3922 = vpack.c.b16 %v3858, %v3858
        %v3923 = vpack.c.b16 %v3859, %v3859
        %v3924 = vpack.c.b16 %v3860, %v3860
        %v3925 = vpack.c.b16 %v3861, %v3861
        %v3926 = vpack.c.b16 %v3862, %v3862
        %v3927 = vpack.c.b16 %v3863, %v3863
        %v3928 = vpack.c.b16 %v3864, %v3864
        %v3929 = vpack.c.b16 %v3865, %v3865
        %v3930 = vpack.c.b16 %v3866, %v3866
        %v3931 = vpack.c.b16 %v3867, %v3867
        %v3932 = vpack.c.b16 %v3868, %v3868
        %v3933 = vpack.c.b16 %v3869, %v3869
        %v3934 = vpack.c.b16 %v3870, %v3870
        %v3935 = vpack.c.b16 %v3871, %v3871
        %v3936 = vpack.c.b16 %v3872, %v3872
        %v3937 = vpack.c.b16 %v3873, %v3873
        %v3938 = vpack.c.b16 %v3874, %v3874
        %4003 = vst.msk [vmem:[%s324] sm:$0xf] %vm443, %v3875
        %4004 = vst.msk [vmem:[%s324 + $0x4] sm:$0xf] %vm443, %v3876
        %4005 = vst.msk [vmem:[%s324 + $0x8] sm:$0xf] %vm443, %v3877
        %4006 = vst.msk [vmem:[%s324 + $0xc] sm:$0xf] %vm443, %v3878
        %4007 = vst.msk [vmem:[%s324 + $0x10] sm:$0xf] %vm443, %v3879
        %4008 = vst.msk [vmem:[%s324 + $0x14] sm:$0xf] %vm443, %v3880
        %4009 = vst.msk [vmem:[%s324 + $0x18] sm:$0xf] %vm443, %v3881
        %4010 = vst.msk [vmem:[%s324 + $0x1c] sm:$0xf] %vm443, %v3882
        %4011 = vst.msk [vmem:[%s324 + $0x20] sm:$0xf] %vm443, %v3883
        %4012 = vst.msk [vmem:[%s324 + $0x24] sm:$0xf] %vm443, %v3884
        %4013 = vst.msk [vmem:[%s324 + $0x28] sm:$0xf] %vm443, %v3885
        %4014 = vst.msk [vmem:[%s324 + $0x2c] sm:$0xf] %vm443, %v3886
        %4015 = vst.msk [vmem:[%s324 + $0x30] sm:$0xf] %vm443, %v3887
        %4016 = vst.msk [vmem:[%s324 + $0x34] sm:$0xf] %vm443, %v3888
        %4017 = vst.msk [vmem:[%s324 + $0x38] sm:$0xf] %vm443, %v3889
        %4018 = vst.msk [vmem:[%s324 + $0x3c] sm:$0xf] %vm443, %v3890
        %4019 = vst.msk [vmem:[%s324 + $0x40] sm:$0xf] %vm443, %v3891
        %4020 = vst.msk [vmem:[%s324 + $0x44] sm:$0xf] %vm443, %v3892
        %4021 = vst.msk [vmem:[%s324 + $0x48] sm:$0xf] %vm443, %v3893
        %4022 = vst.msk [vmem:[%s324 + $0x4c] sm:$0xf] %vm443, %v3894
        %4023 = vst.msk [vmem:[%s324 + $0x50] sm:$0xf] %vm443, %v3895
        %4024 = vst.msk [vmem:[%s324 + $0x54] sm:$0xf] %vm443, %v3896
        %4025 = vst.msk [vmem:[%s324 + $0x58] sm:$0xf] %vm443, %v3897
        %4026 = vst.msk [vmem:[%s324 + $0x5c] sm:$0xf] %vm443, %v3898
        %4027 = vst.msk [vmem:[%s324 + $0x60] sm:$0xf] %vm443, %v3899
        %4028 = vst.msk [vmem:[%s324 + $0x64] sm:$0xf] %vm443, %v3900
        %4029 = vst.msk [vmem:[%s324 + $0x68] sm:$0xf] %vm443, %v3901
        %4030 = vst.msk [vmem:[%s324 + $0x6c] sm:$0xf] %vm443, %v3902
        %4031 = vst.msk [vmem:[%s324 + $0x70] sm:$0xf] %vm443, %v3903
        %4032 = vst.msk [vmem:[%s324 + $0x74] sm:$0xf] %vm443, %v3904
        %4033 = vst.msk [vmem:[%s324 + $0x78] sm:$0xf] %vm443, %v3905
        %4034 = vst.msk [vmem:[%s324 + $0x7c] sm:$0xf] %vm443, %v3906
        %4035 = vst.msk [vmem:[%s324 + $0x80] sm:$0xf] %vm443, %v3907
        %4036 = vst.msk [vmem:[%s324 + $0x84] sm:$0xf] %vm443, %v3908
        %4037 = vst.msk [vmem:[%s324 + $0x88] sm:$0xf] %vm443, %v3909
        %4038 = vst.msk [vmem:[%s324 + $0x8c] sm:$0xf] %vm443, %v3910
        %4039 = vst.msk [vmem:[%s324 + $0x90] sm:$0xf] %vm443, %v3911
        %4040 = vst.msk [vmem:[%s324 + $0x94] sm:$0xf] %vm443, %v3912
        %4041 = vst.msk [vmem:[%s324 + $0x98] sm:$0xf] %vm443, %v3913
        %4042 = vst.msk [vmem:[%s324 + $0x9c] sm:$0xf] %vm443, %v3914
        %4043 = vst.msk [vmem:[%s324 + $0xa0] sm:$0xf] %vm443, %v3915
        %4044 = vst.msk [vmem:[%s324 + $0xa4] sm:$0xf] %vm443, %v3916
        %4045 = vst.msk [vmem:[%s324 + $0xa8] sm:$0xf] %vm443, %v3917
        %4046 = vst.msk [vmem:[%s324 + $0xac] sm:$0xf] %vm443, %v3918
        %4047 = vst.msk [vmem:[%s324 + $0xb0] sm:$0xf] %vm443, %v3919
        %4048 = vst.msk [vmem:[%s324 + $0xb4] sm:$0xf] %vm443, %v3920
        %4049 = vst.msk [vmem:[%s324 + $0xb8] sm:$0xf] %vm443, %v3921
        %4050 = vst.msk [vmem:[%s324 + $0xbc] sm:$0xf] %vm443, %v3922
        %4051 = vst.msk [vmem:[%s324 + $0xc0] sm:$0xf] %vm443, %v3923
        %4052 = vst.msk [vmem:[%s324 + $0xc4] sm:$0xf] %vm443, %v3924
        %4053 = vst.msk [vmem:[%s324 + $0xc8] sm:$0xf] %vm443, %v3925
        %4054 = vst.msk [vmem:[%s324 + $0xcc] sm:$0xf] %vm443, %v3926
        %4055 = vst.msk [vmem:[%s324 + $0xd0] sm:$0xf] %vm443, %v3927
        %4056 = vst.msk [vmem:[%s324 + $0xd4] sm:$0xf] %vm443, %v3928
        %4057 = vst.msk [vmem:[%s324 + $0xd8] sm:$0xf] %vm443, %v3929
        %4058 = vst.msk [vmem:[%s324 + $0xdc] sm:$0xf] %vm443, %v3930
        %4059 = vst.msk [vmem:[%s324 + $0xe0] sm:$0xf] %vm443, %v3931
        %4060 = vst.msk [vmem:[%s324 + $0xe4] sm:$0xf] %vm443, %v3932
        %4061 = vst.msk [vmem:[%s324 + $0xe8] sm:$0xf] %vm443, %v3933
        %4062 = vst.msk [vmem:[%s324 + $0xec] sm:$0xf] %vm443, %v3934
        %4063 = vst.msk [vmem:[%s324 + $0xf0] sm:$0xf] %vm443, %v3935
        %4064 = vst.msk [vmem:[%s324 + $0xf4] sm:$0xf] %vm443, %v3936
        %4065 = vst.msk [vmem:[%s324 + $0xf8] sm:$0xf] %vm443, %v3937
        %4066 = vst.msk [vmem:[%s324 + $0xfc] sm:$0xf] %vm443, %v3938
        %s4067 = sand.u32 %s186, 1
        %s4068 = scalar_lea.sflag [#allocation4], %s4067
        %s4069 = sand.u32 %s186, 1
        %s4070 = smul.addr %s4069, 256
        %s4071 = scalar_lea.vmem [#allocation3], %s4070
        // Predicated region
        $region45: #{conv_bn_act_conv.1} parent=43 // pred_check
          %p4072 = pneg %p196
        $region46: #{conv_bn_act_conv.1} parent=43 // pred_check_branch
          %4074 = sbr.rel (%p4072) target = $region48
        $region47: #{conv_bn_act_conv.1} parent=43 // pred_region
          %s4075 = smul.u32 16, %s25
          %s4077 = ssub.s32 4096, 4096
          %4078 = vsyncadd %s4068, %s4077
          %s4079 = smul.addr %s4075, 4
          %s4080 = smul.addr %s24, 128
          %s4081 = sadd.s32 %s4079, %s4080
          %s4082 = smul.addr %s4081, 64
          %s4083 = scalar_lea.hbm %s6, %s4082
          %s4084 = sshll.u32 %s4071, 4
          %s4085 = int_to_ptr.vmem [resolvable:$true] %s4084
          %4090 = dma.vmem_to_hbm [thread:$0]  %s4085, 4096, %s4083, %s4068, 64, 64, 4
        $region48: #{conv_bn_act_conv.1} parent=43 // pred_fallthru
          _
      $region44: #{conv_bn_act_conv.1} parent=5 // pred_fallthru
        _
      %p4091 = scmp.le.s32.totalorder 2, %s15
      // Predicated region
      $region49: #{conv_bn_act_conv.1} parent=5 // pred_check
        %p4092 = pneg %p4091
      $region50: #{conv_bn_act_conv.1} parent=5 // pred_check_branch
        %4094 = sbr.rel (%p4092) target = $region52
      $region51: #{conv_bn_act_conv.1} parent=5 // pred_region
        %s4095 = ssub.s32 %s15, 2
        // Predicated region
        $region53: #{conv_bn_act_conv.1} parent=51 // pred_check
          %p4096 = pneg %p202
        $region54: #{conv_bn_act_conv.1} parent=51 // pred_check_branch
          %4098 = sbr.rel (%p4096) target = $region56
        $region55: #{conv_bn_act_conv.1} parent=51 // pred_region
          %s4099 = sand.u32 %s187, 1
          %s4100 = scalar_lea.sflag [#allocation4], %s4099
          %s4101 = sand.u32 %s187, 1
          %s4102 = smul.addr %s4101, 256
          %s4103 = scalar_lea.vmem [#allocation3], %s4102
          %4104 = dma.done %s4100, 4096
        $region56: #{conv_bn_act_conv.1} parent=51 // pred_fallthru
          _
      $region52: #{conv_bn_act_conv.1} parent=5 // pred_fallthru
        _
    $region6: #{conv_bn_act_conv.1} parent=1 // loop_footer
      %s19 = sadd.s32 1, %s15
    $region7: #{conv_bn_act_conv.1} parent=1 // loop_footer_branch
      %14 = sbr.rel target = $region3
    $region8: #{conv_bn_act_conv.1} parent=1 // loop_exit
      _
    %4105 = vsyncpa [#allocation4], 1
    %s4106 = scalar_lea.sflag [#allocation4], 1
    %4107 = vsyncpa %s4106, 1

</llo_original>
